<compile_context>
chip_gen: v7x
topology: tpu7x:2x2x1
jax: 0.10.0
libtpu: 0.0.40
codegen_flags: <defaults>
</compile_context>

<pallas_src>
import jax
import jax.numpy as jnp
from jax.experimental import pallas as pl
from jax.experimental.pallas import tpu as pltpu

_K = 5       # conv kernel size (both convs)
_C1 = 8      # conv1 out channels
_C2 = 16     # conv2 out channels
_FC1 = 128
_FC2 = 32
_NCLS = 10
_PAD = _K // 2


# ---------------------------------------------------------------------------
# Fused Pallas kernel
# ---------------------------------------------------------------------------
def _mgmt_kernel(x_ref, w1_ref, b1_ref, w2_ref, b2_ref,
                 wf1_ref, bf1_ref, wf2_ref, bf2_ref, wf3_ref, bf3_ref,
                 o_ref,
                 xh_ref, p1_ref, a2_ref, p2_ref, x1_ref):
    f32 = jnp.float32
    mmt = w1_ref.dtype                       # matmul operand dtype (f32 or bf16)
    B, Hp, W = xh_ref.shape
    H = Hp - 2 * _PAD
    BH, twoL1 = p1_ref.shape                 # B*H, 2*L1 (=128)
    L1 = twoL1 // 2
    _, H2p, _ = a2_ref.shape
    H2 = H2p - 2 * _PAD
    BH2, twoL2 = p2_ref.shape                # B*H2, 2*L2 (=128)
    L2 = twoL2 // 2
    H4 = H2 // 2

    # ---- stage h-padded conv1 input (halo rows re-zeroed each step: cheap and
    #      safe when the grid axis is sharded across TensorCores)
    xh_ref[:, :_PAD, :] = jnp.zeros((B, _PAD, W), f32)
    xh_ref[:, _PAD + H:, :] = jnp.zeros((B, _PAD, W), f32)
    xh_ref[:, _PAD:_PAD + H, :] = x_ref[...]

    a2_ref[:, :_PAD, :] = jnp.zeros((B, _PAD, L1), f32)
    a2_ref[:, _PAD + H2:, :] = jnp.zeros((B, _PAD, L1), f32)

    # ---- conv1 (5x5 'same'): 5 banded dots, even|odd pool columns fused -> N=128
    c1 = jnp.zeros((BH, twoL1), f32)
    for kh in range(_K):
        lhs = xh_ref[:, kh:kh + H, :].reshape(BH, W).astype(mmt)
        c1 += jnp.dot(lhs, w1_ref[kh], preferred_element_type=f32)
    p1_ref[...] = c1

    # ---- pool1: strided-row max (h) + lane-half max (w parity) + bias
    ev = p1_ref[pl.ds(0, BH2, stride=2), :]
    od = p1_ref[pl.ds(1, BH2, stride=2), :]
    m1 = jnp.maximum(ev, od)
    pooled1 = jnp.maximum(m1[:, :L1], m1[:, L1:]) + b1_ref[...]
    a2_ref[:, _PAD:_PAD + H2, :] = pooled1.reshape(B, H2, L1)

    # ---- conv2 (5x5 'same'): same banded/fused-parity scheme
    c2 = jnp.zeros((BH2, twoL2), f32)
    for kh in range(_K):
        lhs = a2_ref[:, kh:kh + H2, :].reshape(BH2, L1).astype(mmt)
        c2 += jnp.dot(lhs, w2_ref[kh], preferred_element_type=f32)
    p2_ref[...] = c2

    # ---- pool2 + NCHW flatten (order folded into wf1) -> x1 (B, H4*L2)
    for h4 in range(H4):
        r0 = p2_ref[pl.ds(2 * h4, B, stride=H2), :]        # rows (b, 2*h4)
        r1 = p2_ref[pl.ds(2 * h4 + 1, B, stride=H2), :]     # rows (b, 2*h4+1)
        m2 = jnp.maximum(r0, r1)
        x1_ref[:, h4 * L2:(h4 + 1) * L2] = (
            jnp.maximum(m2[:, :L2], m2[:, L2:]) + b2_ref[...])

    # ---- fc1 -> fc2 -> fc3 -> softmax (single dots, M = B)
    h = jnp.dot(x1_ref[...].astype(mmt), wf1_ref[...],
                preferred_element_type=f32) + bf1_ref[...]
    h = jnp.dot(h.astype(mmt), wf2_ref[...],
                preferred_element_type=f32) + bf2_ref[...]
    h = jnp.dot(h.astype(mmt), wf3_ref[...],
                preferred_element_type=f32) + bf3_ref[...]
    mx = jnp.max(h, axis=-1, keepdims=True)
    e = jnp.exp(h - mx)
    s = jnp.sum(e, axis=-1, keepdims=True)
    o_ref[...] = (e / s).astype(o_ref.dtype)                 # exact divide


# ---------------------------------------------------------------------------
# One-time weight preprocessing (weight-sized work, outside the forward pass)
# ---------------------------------------------------------------------------
def _pool_band(n_out, n_in):
    # one_hot[p, w, u, k] = 1 iff u == 2*w + p + k - PAD  ('same' zero-pad folded in)
    p = jnp.arange(2)[:, None, None, None]
    w = jnp.arange(n_out)[None, :, None, None]
    u = jnp.arange(n_in)[None, None, :, None]
    k = jnp.arange(_K)[None, None, None, :]
    return (u == 2 * w + p + k - _PAD).astype(jnp.float32)


def preprocess_params(p, H, W, matmul_dtype=jnp.float32):
    """PyTorch-layout weights -> kernel-ready banded / permuted layouts.

    Pass matmul_dtype=jnp.bfloat16 on v6e/v7x for 2x MXU throughput (f32 accum kept).
    """
    hi = jax.lax.Precision.HIGHEST
    W2, W4, H4 = W // 2, W // 4, H // 4

    # conv1 band: (K, W, 2*W2*C1); column = parity*(W2*C1) + w2*C1 + out_ch
    oh1 = _pool_band(W2, W)                                        # (2, W2, W, K)
    w1e = jnp.einsum('ohk,pwuk->hupwo', p['conv1_w'][:, 0], oh1, precision=hi)
    w1e = w1e.reshape(_K, W, 2 * W2 * _C1)

    # conv2 band: (K, W2*C1, 2*W4*C2); row = w2*C1 + in_ch, col = parity*(W4*C2)+w4*C2+out_ch
    oh2 = _pool_band(W4, W2)                                       # (2, W4, W2, K)
    w2e = jnp.einsum('ochk,pwuk->hucpwo', p['conv2_w'], oh2, precision=hi)
    w2e = w2e.reshape(_K, W2 * _C1, 2 * W4 * _C2)

    # fc1: fold torch NCHW flatten into row order (h4-major, then w4*C2 + c)
    wf1 = p['fc1_w'].reshape(_C2, H4, W4, _FC1)
    wf1 = jnp.transpose(wf1, (1, 2, 0, 3)).reshape(H4 * W4 * _C2, _FC1)

    return {
        'w1e': w1e.astype(matmul_dtype),
        'b1h': jnp.tile(p['conv1_b'], W2).reshape(1, W2 * _C1),
        'w2e': w2e.astype(matmul_dtype),
        'b2h': jnp.tile(p['conv2_b'], W4).reshape(1, W4 * _C2),
        'wf1': wf1.astype(matmul_dtype),
        'bf1': p['fc1_b'].reshape(1, _FC1),
        'wf2': p['fc2_w'].astype(matmul_dtype),
        'bf2': p['fc2_b'].reshape(1, _FC2),
        'wf3': p['fc3_w'].astype(matmul_dtype),
        'bf3': p['fc3_b'].reshape(1, _NCLS),
    }


# ---------------------------------------------------------------------------
# Forward pass (single pallas_call, batch-tiled grid)
# ---------------------------------------------------------------------------
def mgmt_forward(x_nchw, prep, batch_tile=8):
    N, C, H, W = x_nchw.shape
    assert C == 1 and H % 4 == 0 and W % 4 == 0
    B = batch_tile
    assert B % 8 == 0, "batch_tile must be a multiple of 8 (sublane-dense output)"
    H2, W2, H4, W4 = H // 2, W // 2, H // 4, W // 4
    L1, L2 = W2 * _C1, W4 * _C2

    num_tiles = (N + B - 1) // B            # pick N so this is even on v7x (2 TCs)
    Npad = num_tiles * B
    x = x_nchw[:, 0]                        # (N, H, W)
    if Npad != N:
        x = jnp.pad(x, ((0, Npad - N), (0, 0), (0, 0)))

    out = pl.pallas_call(
        _mgmt_kernel,
        out_shape=jax.ShapeDtypeStruct((Npad, _NCLS), jnp.float32),
        grid=(num_tiles,),
        in_specs=[
            pl.BlockSpec((B, H, W), lambda i: (i, 0, 0)),            # input tile
            pl.BlockSpec((_K, W, 2 * L1), lambda i: (0, 0, 0)),      # conv1 band
            pl.BlockSpec((1, L1), lambda i: (0, 0)),                 # conv1 bias
            pl.BlockSpec((_K, L1, 2 * L2), lambda i: (0, 0, 0)),     # conv2 band
            pl.BlockSpec((1, L2), lambda i: (0, 0)),                 # conv2 bias
            pl.BlockSpec((H4 * L2, _FC1), lambda i: (0, 0)),         # fc1 (flatten folded)
            pl.BlockSpec((1, _FC1), lambda i: (0, 0)),
            pl.BlockSpec((_FC1, _FC2), lambda i: (0, 0)),            # fc2
            pl.BlockSpec((1, _FC2), lambda i: (0, 0)),
            pl.BlockSpec((_FC2, _NCLS), lambda i: (0, 0)),           # fc3
            pl.BlockSpec((1, _NCLS), lambda i: (0, 0)),
        ],
        out_specs=pl.BlockSpec((B, _NCLS), lambda i: (i, 0)),
        scratch_shapes=[
            pltpu.VMEM((B, H + 2 * _PAD, W), jnp.float32),           # h-padded input
            pltpu.VMEM((B * H, 2 * L1), jnp.float32),                # conv1 result
            pltpu.VMEM((B, H2 + 2 * _PAD, L1), jnp.float32),         # padded conv2 input
            pltpu.VMEM((B * H2, 2 * L2), jnp.float32),               # conv2 result
            pltpu.VMEM((B, H4 * L2), jnp.float32),                   # fc1 input
        ],
        compiler_params=pltpu.CompilerParams(
            dimension_semantics=("parallel",)),
    )(x, prep['w1e'], prep['b1h'], prep['w2e'], prep['b2h'],
      prep['wf1'], prep['bf1'], prep['wf2'], prep['bf2'],
      prep['wf3'], prep['bf3'])
    return out[:N]


# ---------------------------------------------------------------------------
# Parameters + pure-JAX reference (for validation)
# ---------------------------------------------------------------------------
def init_params(key, H, W):
    ks = jax.random.split(key, 10)

    def u(k, shape, fan_in):
        bound = 1.0 / jnp.sqrt(jnp.float32(fan_in))
        return jax.random.uniform(k, shape, jnp.float32, -bound, bound)

    d = _C2 * (H // 4) * (W // 4)
    return {
        'conv1_w': u(ks[0], (_C1, 1, _K, _K), 1 * _K * _K),
        'conv1_b': u(ks[1], (_C1,), 1 * _K * _K),
        'conv2_w': u(ks[2], (_C2, _C1, _K, _K), _C1 * _K * _K),
        'conv2_b': u(ks[3], (_C2,), _C1 * _K * _K),
        'fc1_w': u(ks[4], (d, _FC1), d),     # (in, out), rows in torch (c, h, w) order
        'fc1_b': u(ks[5], (_FC1,), d),
        'fc2_w': u(ks[6], (_FC1, _FC2), _FC1),
        'fc2_b': u(ks[7], (_FC2,), _FC1),
        'fc3_w': u(ks[8], (_FC2, _NCLS), _FC2),
        'fc3_b': u(ks[9], (_NCLS,), _FC2),
    }


def reference_forward(x_nchw, p):
    dn = ('NCHW', 'OIHW', 'NCHW')
    hi = jax.lax.Precision.HIGHEST
    y = jax.lax.conv_general_dilated(x_nchw, p['conv1_w'], (1, 1), 'SAME',
                                     dimension_numbers=dn, precision=hi)
    y = y + p['conv1_b'][None, :, None, None]
    y = jax.lax.reduce_window(y, -jnp.inf, jax.lax.max,
                              (1, 1, 2, 2), (1, 1, 2, 2), 'VALID')
    y = jax.lax.conv_general_dilated(y, p['conv2_w'], (1, 1), 'SAME',
                                     dimension_numbers=dn, precision=hi)
    y = y + p['conv2_b'][None, :, None, None]
    y = jax.lax.reduce_window(y, -jnp.inf, jax.lax.max,
                              (1, 1, 2, 2), (1, 1, 2, 2), 'VALID')
    y = y.reshape(y.shape[0], -1)            # NCHW flatten == torch.flatten(x, 1)
    y = y @ p['fc1_w'] + p['fc1_b']
    y = y @ p['fc2_w'] + p['fc2_b']
    y = y @ p['fc3_w'] + p['fc3_b']
    return jax.nn.softmax(y, axis=-1)


if __name__ == "__main__":
    key = jax.random.PRNGKey(0)
    kp, kx = jax.random.split(key)

    # Small shapes; N chosen so num_tiles = 2 (even -> both v7x TensorCores busy).
    N, C, H, W = 16, 1, 16, 16
    params = init_params(kp, H, W)
    x = jax.random.normal(kx, (N, C, H, W), jnp.float32)

    # One-time weight reshuffle (use matmul_dtype=jnp.bfloat16 on v6e/v7x).
    prep = preprocess_params(params, H, W)

    fwd = jax.jit(mgmt_forward)
    out = jax.block_until_ready(fwd(x, prep))

    assert out.shape == (N, _NCLS), out.shape
    assert bool(jnp.allclose(jnp.sum(out, axis=-1), 1.0, atol=1e-4)), \
        "softmax rows must sum to ~1"

    ref = reference_forward(x, params)
    err = float(jnp.max(jnp.abs(out - ref)))
    assert err < 2e-2, f"max abs diff vs reference: {err}"
    print("KERNEL_OK")
</pallas_src>

<mosaic_0001>
module attributes {stable_mosaic.version = 11 : i64} {
  func.func @_mgmt_kernel(%arg0: i32, %arg1: memref<8x16x16xf32, #tpu.memory_space<vmem>>, %arg2: memref<5x16x128xf32, #tpu.memory_space<vmem>>, %arg3: memref<1x64xf32, #tpu.memory_space<vmem>>, %arg4: memref<5x64x128xf32, #tpu.memory_space<vmem>>, %arg5: memref<1x64xf32, #tpu.memory_space<vmem>>, %arg6: memref<256x128xf32, #tpu.memory_space<vmem>>, %arg7: memref<1x128xf32, #tpu.memory_space<vmem>>, %arg8: memref<128x32xf32, #tpu.memory_space<vmem>>, %arg9: memref<1x32xf32, #tpu.memory_space<vmem>>, %arg10: memref<32x10xf32, #tpu.memory_space<vmem>>, %arg11: memref<1x10xf32, #tpu.memory_space<vmem>>, %arg12: memref<8x10xf32, #tpu.memory_space<vmem>>, %arg13: memref<8x20x16xf32, #tpu.memory_space<vmem>>, %arg14: memref<128x128xf32, #tpu.memory_space<vmem>>, %arg15: memref<8x12x64xf32, #tpu.memory_space<vmem>>, %arg16: memref<64x128xf32, #tpu.memory_space<vmem>>, %arg17: memref<8x256xf32, #tpu.memory_space<vmem>>) attributes {dimension_semantics = [#tpu.dimension_semantics<parallel>], iteration_bounds = array<i64: 2>, scalar_prefetch = 0 : i64, scratch_operands = 5 : i64, tpu.core_type = #tpu.core_type<tc>, window_params = [{transform_indices = @transform_0, window_bounds = array<i64: 8, 16, 16>}, {pipeline_mode = #tpu.pipeline_mode<synchronous>, transform_indices = @transform_1, window_bounds = array<i64: 5, 16, 128>}, {pipeline_mode = #tpu.pipeline_mode<synchronous>, transform_indices = @transform_2, window_bounds = array<i64: 1, 64>}, {pipeline_mode = #tpu.pipeline_mode<synchronous>, transform_indices = @transform_3, window_bounds = array<i64: 5, 64, 128>}, {pipeline_mode = #tpu.pipeline_mode<synchronous>, transform_indices = @transform_4, window_bounds = array<i64: 1, 64>}, {pipeline_mode = #tpu.pipeline_mode<synchronous>, transform_indices = @transform_5, window_bounds = array<i64: 256, 128>}, {pipeline_mode = #tpu.pipeline_mode<synchronous>, transform_indices = @transform_6, window_bounds = array<i64: 1, 128>}, {pipeline_mode = #tpu.pipeline_mode<synchronous>, transform_indices = @transform_7, window_bounds = array<i64: 128, 32>}, {pipeline_mode = #tpu.pipeline_mode<synchronous>, transform_indices = @transform_8, window_bounds = array<i64: 1, 32>}, {pipeline_mode = #tpu.pipeline_mode<synchronous>, transform_indices = @transform_9, window_bounds = array<i64: 32, 10>}, {pipeline_mode = #tpu.pipeline_mode<synchronous>, transform_indices = @transform_10, window_bounds = array<i64: 1, 10>}, {transform_indices = @transform_11, window_bounds = array<i64: 8, 10>}]} {
    %cst = arith.constant 0.000000e+00 : f32
    %0 = vector.broadcast %cst : f32 to vector<8x2x16xf32>
    %c0 = arith.constant 0 : index
    %c0_0 = arith.constant 0 : index
    %c0_1 = arith.constant 0 : index
    %1 = vector.load %arg13[%c0, %c0_0, %c0_1] : memref<8x20x16xf32, #tpu.memory_space<vmem>>, vector<8x2x16xf32>
    tpu.vector_store %arg13[%c0, %c0_0, %c0_1], %0 {strides = array<i32>} : memref<8x20x16xf32, #tpu.memory_space<vmem>>, vector<8x2x16xf32>,
    %cst_2 = arith.constant 0.000000e+00 : f32
    %2 = vector.broadcast %cst_2 : f32 to vector<8x2x16xf32>
    %c0_3 = arith.constant 0 : index
    %c18 = arith.constant 18 : index
    %c0_4 = arith.constant 0 : index
    %3 = vector.load %arg13[%c0_3, %c18, %c0_4] : memref<8x20x16xf32, #tpu.memory_space<vmem>>, vector<8x2x16xf32>
    tpu.vector_store %arg13[%c0_3, %c18, %c0_4], %2 {strides = array<i32>} : memref<8x20x16xf32, #tpu.memory_space<vmem>>, vector<8x2x16xf32>,
    %c0_5 = arith.constant 0 : index
    %c0_6 = arith.constant 0 : index
    %c0_7 = arith.constant 0 : index
    %4 = vector.load %arg1[%c0_5, %c0_6, %c0_7] : memref<8x16x16xf32, #tpu.memory_space<vmem>>, vector<8x16x16xf32>
    %c0_8 = arith.constant 0 : index
    %c2 = arith.constant 2 : index
    %c0_9 = arith.constant 0 : index
    %5 = vector.load %arg13[%c0_8, %c2, %c0_9] : memref<8x20x16xf32, #tpu.memory_space<vmem>>, vector<8x16x16xf32>
    tpu.vector_store %arg13[%c0_8, %c2, %c0_9], %4 {strides = array<i32>} : memref<8x20x16xf32, #tpu.memory_space<vmem>>, vector<8x16x16xf32>,
    %cst_10 = arith.constant 0.000000e+00 : f32
    %6 = vector.broadcast %cst_10 : f32 to vector<8x2x64xf32>
    %c0_11 = arith.constant 0 : index
    %c0_12 = arith.constant 0 : index
    %c0_13 = arith.constant 0 : index
    %7 = vector.load %arg15[%c0_11, %c0_12, %c0_13] : memref<8x12x64xf32, #tpu.memory_space<vmem>>, vector<8x2x64xf32>
    tpu.vector_store %arg15[%c0_11, %c0_12, %c0_13], %6 {strides = array<i32>} : memref<8x12x64xf32, #tpu.memory_space<vmem>>, vector<8x2x64xf32>,
    %cst_14 = arith.constant 0.000000e+00 : f32
    %8 = vector.broadcast %cst_14 : f32 to vector<8x2x64xf32>
    %c0_15 = arith.constant 0 : index
    %c10 = arith.constant 10 : index
    %c0_16 = arith.constant 0 : index
    %9 = vector.load %arg15[%c0_15, %c10, %c0_16] : memref<8x12x64xf32, #tpu.memory_space<vmem>>, vector<8x2x64xf32>
    tpu.vector_store %arg15[%c0_15, %c10, %c0_16], %8 {strides = array<i32>} : memref<8x12x64xf32, #tpu.memory_space<vmem>>, vector<8x2x64xf32>,
    %cst_17 = arith.constant 0.000000e+00 : f32
    %10 = vector.broadcast %cst_17 : f32 to vector<128x128xf32>
    %c0_18 = arith.constant 0 : index
    %c0_19 = arith.constant 0 : index
    %c0_20 = arith.constant 0 : index
    %11 = vector.load %arg13[%c0_18, %c0_19, %c0_20] : memref<8x20x16xf32, #tpu.memory_space<vmem>>, vector<8x16x16xf32>
    %12 = vector.shape_cast %11 : vector<8x16x16xf32> to vector<128x16xf32>
    %c0_21 = arith.constant 0 : index
    %c0_22 = arith.constant 0 : index
    %c0_23 = arith.constant 0 : index
    %13 = vector.load %arg2[%c0_21, %c0_22, %c0_23] : memref<5x16x128xf32, #tpu.memory_space<vmem>>, vector<1x16x128xf32>
    %14 = vector.shape_cast %13 : vector<1x16x128xf32> to vector<16x128xf32>
    %cst_24 = arith.constant dense<0.000000e+00> : vector<128x128xf32>
    %15 = tpu.matmul %12, %14, %cst_24 {dimension_numbers = #tpu.dot_dimension_numbers<[1], [0], [0], [1], [0, 0, 1, 1], [], []>} : vector<128x16xf32>, vector<16x128xf32>, vector<128x128xf32> -> vector<128x128xf32>
    %16 = arith.addf %10, %15 : vector<128x128xf32>
    %c0_25 = arith.constant 0 : index
    %c1 = arith.constant 1 : index
    %c0_26 = arith.constant 0 : index
    %17 = vector.load %arg13[%c0_25, %c1, %c0_26] : memref<8x20x16xf32, #tpu.memory_space<vmem>>, vector<8x16x16xf32>
    %18 = vector.shape_cast %17 : vector<8x16x16xf32> to vector<128x16xf32>
    %c1_27 = arith.constant 1 : index
    %c0_28 = arith.constant 0 : index
    %c0_29 = arith.constant 0 : index
    %19 = vector.load %arg2[%c1_27, %c0_28, %c0_29] : memref<5x16x128xf32, #tpu.memory_space<vmem>>, vector<1x16x128xf32>
    %20 = vector.shape_cast %19 : vector<1x16x128xf32> to vector<16x128xf32>
    %cst_30 = arith.constant dense<0.000000e+00> : vector<128x128xf32>
    %21 = tpu.matmul %18, %20, %cst_30 {dimension_numbers = #tpu.dot_dimension_numbers<[1], [0], [0], [1], [0, 0, 1, 1], [], []>} : vector<128x16xf32>, vector<16x128xf32>, vector<128x128xf32> -> vector<128x128xf32>
    %22 = arith.addf %16, %21 : vector<128x128xf32>
    %c0_31 = arith.constant 0 : index
    %c2_32 = arith.constant 2 : index
    %c0_33 = arith.constant 0 : index
    %23 = vector.load %arg13[%c0_31, %c2_32, %c0_33] : memref<8x20x16xf32, #tpu.memory_space<vmem>>, vector<8x16x16xf32>
    %24 = vector.shape_cast %23 : vector<8x16x16xf32> to vector<128x16xf32>
    %c2_34 = arith.constant 2 : index
    %c0_35 = arith.constant 0 : index
    %c0_36 = arith.constant 0 : index
    %25 = vector.load %arg2[%c2_34, %c0_35, %c0_36] : memref<5x16x128xf32, #tpu.memory_space<vmem>>, vector<1x16x128xf32>
    %26 = vector.shape_cast %25 : vector<1x16x128xf32> to vector<16x128xf32>
    %cst_37 = arith.constant dense<0.000000e+00> : vector<128x128xf32>
    %27 = tpu.matmul %24, %26, %cst_37 {dimension_numbers = #tpu.dot_dimension_numbers<[1], [0], [0], [1], [0, 0, 1, 1], [], []>} : vector<128x16xf32>, vector<16x128xf32>, vector<128x128xf32> -> vector<128x128xf32>
    %28 = arith.addf %22, %27 : vector<128x128xf32>
    %c0_38 = arith.constant 0 : index
    %c3 = arith.constant 3 : index
    %c0_39 = arith.constant 0 : index
    %29 = vector.load %arg13[%c0_38, %c3, %c0_39] : memref<8x20x16xf32, #tpu.memory_space<vmem>>, vector<8x16x16xf32>
    %30 = vector.shape_cast %29 : vector<8x16x16xf32> to vector<128x16xf32>
    %c3_40 = arith.constant 3 : index
    %c0_41 = arith.constant 0 : index
    %c0_42 = arith.constant 0 : index
    %31 = vector.load %arg2[%c3_40, %c0_41, %c0_42] : memref<5x16x128xf32, #tpu.memory_space<vmem>>, vector<1x16x128xf32>
    %32 = vector.shape_cast %31 : vector<1x16x128xf32> to vector<16x128xf32>
    %cst_43 = arith.constant dense<0.000000e+00> : vector<128x128xf32>
    %33 = tpu.matmul %30, %32, %cst_43 {dimension_numbers = #tpu.dot_dimension_numbers<[1], [0], [0], [1], [0, 0, 1, 1], [], []>} : vector<128x16xf32>, vector<16x128xf32>, vector<128x128xf32> -> vector<128x128xf32>
    %34 = arith.addf %28, %33 : vector<128x128xf32>
    %c0_44 = arith.constant 0 : index
    %c4 = arith.constant 4 : index
    %c0_45 = arith.constant 0 : index
    %35 = vector.load %arg13[%c0_44, %c4, %c0_45] : memref<8x20x16xf32, #tpu.memory_space<vmem>>, vector<8x16x16xf32>
    %36 = vector.shape_cast %35 : vector<8x16x16xf32> to vector<128x16xf32>
    %c4_46 = arith.constant 4 : index
    %c0_47 = arith.constant 0 : index
    %c0_48 = arith.constant 0 : index
    %37 = vector.load %arg2[%c4_46, %c0_47, %c0_48] : memref<5x16x128xf32, #tpu.memory_space<vmem>>, vector<1x16x128xf32>
    %38 = vector.shape_cast %37 : vector<1x16x128xf32> to vector<16x128xf32>
    %cst_49 = arith.constant dense<0.000000e+00> : vector<128x128xf32>
    %39 = tpu.matmul %36, %38, %cst_49 {dimension_numbers = #tpu.dot_dimension_numbers<[1], [0], [0], [1], [0, 0, 1, 1], [], []>} : vector<128x16xf32>, vector<16x128xf32>, vector<128x128xf32> -> vector<128x128xf32>
    %40 = arith.addf %34, %39 : vector<128x128xf32>
    %c0_50 = arith.constant 0 : index
    %c0_51 = arith.constant 0 : index
    %41 = vector.load %arg14[%c0_50, %c0_51] : memref<128x128xf32, #tpu.memory_space<vmem>>, vector<128x128xf32>
    tpu.vector_store %arg14[%c0_50, %c0_51], %40 {strides = array<i32>} : memref<128x128xf32, #tpu.memory_space<vmem>>, vector<128x128xf32>,
    %c0_52 = arith.constant 0 : index
    %c0_53 = arith.constant 0 : index
    %42 = tpu.strided_load %arg14[%c0_52, %c0_53] {strides = array<i32: 2, 1>} : memref<128x128xf32, #tpu.memory_space<vmem>>, vector<64x128xf32>
    %c1_54 = arith.constant 1 : index
    %c0_55 = arith.constant 0 : index
    %43 = tpu.strided_load %arg14[%c1_54, %c0_55] {strides = array<i32: 2, 1>} : memref<128x128xf32, #tpu.memory_space<vmem>>, vector<64x128xf32>
    %44 = arith.maximumf %42, %43 : vector<64x128xf32>
    %45 = vector.extract_strided_slice %44 {offsets = [0, 0], sizes = [64, 64], strides = [1, 1]} : vector<64x128xf32> to vector<64x64xf32>
    %46 = vector.extract_strided_slice %44 {offsets = [0, 64], sizes = [64, 64], strides = [1, 1]} : vector<64x128xf32> to vector<64x64xf32>
    %47 = arith.maximumf %45, %46 : vector<64x64xf32>
    %c0_56 = arith.constant 0 : index
    %c0_57 = arith.constant 0 : index
    %48 = vector.load %arg3[%c0_56, %c0_57] : memref<1x64xf32, #tpu.memory_space<vmem>>, vector<1x64xf32>
    %49 = vector.broadcast %48 : vector<1x64xf32> to vector<64x64xf32>
    %50 = arith.addf %47, %49 : vector<64x64xf32>
    %51 = vector.shape_cast %50 : vector<64x64xf32> to vector<8x8x64xf32>
    %c0_58 = arith.constant 0 : index
    %c2_59 = arith.constant 2 : index
    %c0_60 = arith.constant 0 : index
    %52 = vector.load %arg15[%c0_58, %c2_59, %c0_60] : memref<8x12x64xf32, #tpu.memory_space<vmem>>, vector<8x8x64xf32>
    tpu.vector_store %arg15[%c0_58, %c2_59, %c0_60], %51 {strides = array<i32>} : memref<8x12x64xf32, #tpu.memory_space<vmem>>, vector<8x8x64xf32>,
    %cst_61 = arith.constant 0.000000e+00 : f32
    %53 = vector.broadcast %cst_61 : f32 to vector<64x128xf32>
    %c0_62 = arith.constant 0 : index
    %c0_63 = arith.constant 0 : index
    %c0_64 = arith.constant 0 : index
    %54 = vector.load %arg15[%c0_62, %c0_63, %c0_64] : memref<8x12x64xf32, #tpu.memory_space<vmem>>, vector<8x8x64xf32>
    %55 = vector.shape_cast %54 : vector<8x8x64xf32> to vector<64x64xf32>
    %c0_65 = arith.constant 0 : index
    %c0_66 = arith.constant 0 : index
    %c0_67 = arith.constant 0 : index
    %56 = vector.load %arg4[%c0_65, %c0_66, %c0_67] : memref<5x64x128xf32, #tpu.memory_space<vmem>>, vector<1x64x128xf32>
    %57 = vector.shape_cast %56 : vector<1x64x128xf32> to vector<64x128xf32>
    %cst_68 = arith.constant dense<0.000000e+00> : vector<64x128xf32>
    %58 = tpu.matmul %55, %57, %cst_68 {dimension_numbers = #tpu.dot_dimension_numbers<[1], [0], [0], [1], [0, 0, 1, 1], [], []>} : vector<64x64xf32>, vector<64x128xf32>, vector<64x128xf32> -> vector<64x128xf32>
    %59 = arith.addf %53, %58 : vector<64x128xf32>
    %c0_69 = arith.constant 0 : index
    %c1_70 = arith.constant 1 : index
    %c0_71 = arith.constant 0 : index
    %60 = vector.load %arg15[%c0_69, %c1_70, %c0_71] : memref<8x12x64xf32, #tpu.memory_space<vmem>>, vector<8x8x64xf32>
    %61 = vector.shape_cast %60 : vector<8x8x64xf32> to vector<64x64xf32>
    %c1_72 = arith.constant 1 : index
    %c0_73 = arith.constant 0 : index
    %c0_74 = arith.constant 0 : index
    %62 = vector.load %arg4[%c1_72, %c0_73, %c0_74] : memref<5x64x128xf32, #tpu.memory_space<vmem>>, vector<1x64x128xf32>
    %63 = vector.shape_cast %62 : vector<1x64x128xf32> to vector<64x128xf32>
    %cst_75 = arith.constant dense<0.000000e+00> : vector<64x128xf32>
    %64 = tpu.matmul %61, %63, %cst_75 {dimension_numbers = #tpu.dot_dimension_numbers<[1], [0], [0], [1], [0, 0, 1, 1], [], []>} : vector<64x64xf32>, vector<64x128xf32>, vector<64x128xf32> -> vector<64x128xf32>
    %65 = arith.addf %59, %64 : vector<64x128xf32>
    %c0_76 = arith.constant 0 : index
    %c2_77 = arith.constant 2 : index
    %c0_78 = arith.constant 0 : index
    %66 = vector.load %arg15[%c0_76, %c2_77, %c0_78] : memref<8x12x64xf32, #tpu.memory_space<vmem>>, vector<8x8x64xf32>
    %67 = vector.shape_cast %66 : vector<8x8x64xf32> to vector<64x64xf32>
    %c2_79 = arith.constant 2 : index
    %c0_80 = arith.constant 0 : index
    %c0_81 = arith.constant 0 : index
    %68 = vector.load %arg4[%c2_79, %c0_80, %c0_81] : memref<5x64x128xf32, #tpu.memory_space<vmem>>, vector<1x64x128xf32>
    %69 = vector.shape_cast %68 : vector<1x64x128xf32> to vector<64x128xf32>
    %cst_82 = arith.constant dense<0.000000e+00> : vector<64x128xf32>
    %70 = tpu.matmul %67, %69, %cst_82 {dimension_numbers = #tpu.dot_dimension_numbers<[1], [0], [0], [1], [0, 0, 1, 1], [], []>} : vector<64x64xf32>, vector<64x128xf32>, vector<64x128xf32> -> vector<64x128xf32>
    %71 = arith.addf %65, %70 : vector<64x128xf32>
    %c0_83 = arith.constant 0 : index
    %c3_84 = arith.constant 3 : index
    %c0_85 = arith.constant 0 : index
    %72 = vector.load %arg15[%c0_83, %c3_84, %c0_85] : memref<8x12x64xf32, #tpu.memory_space<vmem>>, vector<8x8x64xf32>
    %73 = vector.shape_cast %72 : vector<8x8x64xf32> to vector<64x64xf32>
    %c3_86 = arith.constant 3 : index
    %c0_87 = arith.constant 0 : index
    %c0_88 = arith.constant 0 : index
    %74 = vector.load %arg4[%c3_86, %c0_87, %c0_88] : memref<5x64x128xf32, #tpu.memory_space<vmem>>, vector<1x64x128xf32>
    %75 = vector.shape_cast %74 : vector<1x64x128xf32> to vector<64x128xf32>
    %cst_89 = arith.constant dense<0.000000e+00> : vector<64x128xf32>
    %76 = tpu.matmul %73, %75, %cst_89 {dimension_numbers = #tpu.dot_dimension_numbers<[1], [0], [0], [1], [0, 0, 1, 1], [], []>} : vector<64x64xf32>, vector<64x128xf32>, vector<64x128xf32> -> vector<64x128xf32>
    %77 = arith.addf %71, %76 : vector<64x128xf32>
    %c0_90 = arith.constant 0 : index
    %c4_91 = arith.constant 4 : index
    %c0_92 = arith.constant 0 : index
    %78 = vector.load %arg15[%c0_90, %c4_91, %c0_92] : memref<8x12x64xf32, #tpu.memory_space<vmem>>, vector<8x8x64xf32>
    %79 = vector.shape_cast %78 : vector<8x8x64xf32> to vector<64x64xf32>
    %c4_93 = arith.constant 4 : index
    %c0_94 = arith.constant 0 : index
    %c0_95 = arith.constant 0 : index
    %80 = vector.load %arg4[%c4_93, %c0_94, %c0_95] : memref<5x64x128xf32, #tpu.memory_space<vmem>>, vector<1x64x128xf32>
    %81 = vector.shape_cast %80 : vector<1x64x128xf32> to vector<64x128xf32>
    %cst_96 = arith.constant dense<0.000000e+00> : vector<64x128xf32>
    %82 = tpu.matmul %79, %81, %cst_96 {dimension_numbers = #tpu.dot_dimension_numbers<[1], [0], [0], [1], [0, 0, 1, 1], [], []>} : vector<64x64xf32>, vector<64x128xf32>, vector<64x128xf32> -> vector<64x128xf32>
    %83 = arith.addf %77, %82 : vector<64x128xf32>
    %c0_97 = arith.constant 0 : index
    %c0_98 = arith.constant 0 : index
    %84 = vector.load %arg16[%c0_97, %c0_98] : memref<64x128xf32, #tpu.memory_space<vmem>>, vector<64x128xf32>
    tpu.vector_store %arg16[%c0_97, %c0_98], %83 {strides = array<i32>} : memref<64x128xf32, #tpu.memory_space<vmem>>, vector<64x128xf32>,
    %c0_99 = arith.constant 0 : index
    %c0_100 = arith.constant 0 : index
    %85 = tpu.strided_load %arg16[%c0_99, %c0_100] {strides = array<i32: 8, 1>} : memref<64x128xf32, #tpu.memory_space<vmem>>, vector<8x128xf32>
    %c1_101 = arith.constant 1 : index
    %c0_102 = arith.constant 0 : index
    %86 = tpu.strided_load %arg16[%c1_101, %c0_102] {strides = array<i32: 8, 1>} : memref<64x128xf32, #tpu.memory_space<vmem>>, vector<8x128xf32>
    %87 = arith.maximumf %85, %86 : vector<8x128xf32>
    %88 = vector.extract_strided_slice %87 {offsets = [0, 0], sizes = [8, 64], strides = [1, 1]} : vector<8x128xf32> to vector<8x64xf32>
    %89 = vector.extract_strided_slice %87 {offsets = [0, 64], sizes = [8, 64], strides = [1, 1]} : vector<8x128xf32> to vector<8x64xf32>
    %90 = arith.maximumf %88, %89 : vector<8x64xf32>
    %c0_103 = arith.constant 0 : index
    %c0_104 = arith.constant 0 : index
    %91 = vector.load %arg5[%c0_103, %c0_104] : memref<1x64xf32, #tpu.memory_space<vmem>>, vector<1x64xf32>
    %92 = vector.broadcast %91 : vector<1x64xf32> to vector<8x64xf32>
    %93 = arith.addf %90, %92 : vector<8x64xf32>
    %c0_105 = arith.constant 0 : index
    %c0_106 = arith.constant 0 : index
    %94 = vector.load %arg17[%c0_105, %c0_106] : memref<8x256xf32, #tpu.memory_space<vmem>>, vector<8x64xf32>
    tpu.vector_store %arg17[%c0_105, %c0_106], %93 {strides = array<i32>} : memref<8x256xf32, #tpu.memory_space<vmem>>, vector<8x64xf32>,
    %c2_107 = arith.constant 2 : index
    %c0_108 = arith.constant 0 : index
    %95 = tpu.strided_load %arg16[%c2_107, %c0_108] {strides = array<i32: 8, 1>} : memref<64x128xf32, #tpu.memory_space<vmem>>, vector<8x128xf32>
    %c3_109 = arith.constant 3 : index
    %c0_110 = arith.constant 0 : index
    %96 = tpu.strided_load %arg16[%c3_109, %c0_110] {strides = array<i32: 8, 1>} : memref<64x128xf32, #tpu.memory_space<vmem>>, vector<8x128xf32>
    %97 = arith.maximumf %95, %96 : vector<8x128xf32>
    %98 = vector.extract_strided_slice %97 {offsets = [0, 0], sizes = [8, 64], strides = [1, 1]} : vector<8x128xf32> to vector<8x64xf32>
    %99 = vector.extract_strided_slice %97 {offsets = [0, 64], sizes = [8, 64], strides = [1, 1]} : vector<8x128xf32> to vector<8x64xf32>
    %100 = arith.maximumf %98, %99 : vector<8x64xf32>
    %c0_111 = arith.constant 0 : index
    %c0_112 = arith.constant 0 : index
    %101 = vector.load %arg5[%c0_111, %c0_112] : memref<1x64xf32, #tpu.memory_space<vmem>>, vector<1x64xf32>
    %102 = vector.broadcast %101 : vector<1x64xf32> to vector<8x64xf32>
    %103 = arith.addf %100, %102 : vector<8x64xf32>
    %c0_113 = arith.constant 0 : index
    %c64 = arith.constant 64 : index
    %104 = vector.load %arg17[%c0_113, %c64] : memref<8x256xf32, #tpu.memory_space<vmem>>, vector<8x64xf32>
    tpu.vector_store %arg17[%c0_113, %c64], %103 {strides = array<i32>} : memref<8x256xf32, #tpu.memory_space<vmem>>, vector<8x64xf32>,
    %c4_114 = arith.constant 4 : index
    %c0_115 = arith.constant 0 : index
    %105 = tpu.strided_load %arg16[%c4_114, %c0_115] {strides = array<i32: 8, 1>} : memref<64x128xf32, #tpu.memory_space<vmem>>, vector<8x128xf32>
    %c5 = arith.constant 5 : index
    %c0_116 = arith.constant 0 : index
    %106 = tpu.strided_load %arg16[%c5, %c0_116] {strides = array<i32: 8, 1>} : memref<64x128xf32, #tpu.memory_space<vmem>>, vector<8x128xf32>
    %107 = arith.maximumf %105, %106 : vector<8x128xf32>
    %108 = vector.extract_strided_slice %107 {offsets = [0, 0], sizes = [8, 64], strides = [1, 1]} : vector<8x128xf32> to vector<8x64xf32>
    %109 = vector.extract_strided_slice %107 {offsets = [0, 64], sizes = [8, 64], strides = [1, 1]} : vector<8x128xf32> to vector<8x64xf32>
    %110 = arith.maximumf %108, %109 : vector<8x64xf32>
    %c0_117 = arith.constant 0 : index
    %c0_118 = arith.constant 0 : index
    %111 = vector.load %arg5[%c0_117, %c0_118] : memref<1x64xf32, #tpu.memory_space<vmem>>, vector<1x64xf32>
    %112 = vector.broadcast %111 : vector<1x64xf32> to vector<8x64xf32>
    %113 = arith.addf %110, %112 : vector<8x64xf32>
    %c0_119 = arith.constant 0 : index
    %c128 = arith.constant 128 : index
    %114 = vector.load %arg17[%c0_119, %c128] : memref<8x256xf32, #tpu.memory_space<vmem>>, vector<8x64xf32>
    tpu.vector_store %arg17[%c0_119, %c128], %113 {strides = array<i32>} : memref<8x256xf32, #tpu.memory_space<vmem>>, vector<8x64xf32>,
    %c6 = arith.constant 6 : index
    %c0_120 = arith.constant 0 : index
    %115 = tpu.strided_load %arg16[%c6, %c0_120] {strides = array<i32: 8, 1>} : memref<64x128xf32, #tpu.memory_space<vmem>>, vector<8x128xf32>
    %c7 = arith.constant 7 : index
    %c0_121 = arith.constant 0 : index
    %116 = tpu.strided_load %arg16[%c7, %c0_121] {strides = array<i32: 8, 1>} : memref<64x128xf32, #tpu.memory_space<vmem>>, vector<8x128xf32>
    %117 = arith.maximumf %115, %116 : vector<8x128xf32>
    %118 = vector.extract_strided_slice %117 {offsets = [0, 0], sizes = [8, 64], strides = [1, 1]} : vector<8x128xf32> to vector<8x64xf32>
    %119 = vector.extract_strided_slice %117 {offsets = [0, 64], sizes = [8, 64], strides = [1, 1]} : vector<8x128xf32> to vector<8x64xf32>
    %120 = arith.maximumf %118, %119 : vector<8x64xf32>
    %c0_122 = arith.constant 0 : index
    %c0_123 = arith.constant 0 : index
    %121 = vector.load %arg5[%c0_122, %c0_123] : memref<1x64xf32, #tpu.memory_space<vmem>>, vector<1x64xf32>
    %122 = vector.broadcast %121 : vector<1x64xf32> to vector<8x64xf32>
    %123 = arith.addf %120, %122 : vector<8x64xf32>
    %c0_124 = arith.constant 0 : index
    %c192 = arith.constant 192 : index
    %124 = vector.load %arg17[%c0_124, %c192] : memref<8x256xf32, #tpu.memory_space<vmem>>, vector<8x64xf32>
    tpu.vector_store %arg17[%c0_124, %c192], %123 {strides = array<i32>} : memref<8x256xf32, #tpu.memory_space<vmem>>, vector<8x64xf32>,
    %c0_125 = arith.constant 0 : index
    %c0_126 = arith.constant 0 : index
    %125 = vector.load %arg17[%c0_125, %c0_126] : memref<8x256xf32, #tpu.memory_space<vmem>>, vector<8x256xf32>
    %c0_127 = arith.constant 0 : index
    %c0_128 = arith.constant 0 : index
    %126 = vector.load %arg6[%c0_127, %c0_128] : memref<256x128xf32, #tpu.memory_space<vmem>>, vector<256x128xf32>
    %cst_129 = arith.constant dense<0.000000e+00> : vector<8x128xf32>
    %127 = tpu.matmul %125, %126, %cst_129 {dimension_numbers = #tpu.dot_dimension_numbers<[1], [0], [0], [1], [0, 0, 1, 1], [], []>} : vector<8x256xf32>, vector<256x128xf32>, vector<8x128xf32> -> vector<8x128xf32>
    %c0_130 = arith.constant 0 : index
    %c0_131 = arith.constant 0 : index
    %128 = vector.load %arg7[%c0_130, %c0_131] : memref<1x128xf32, #tpu.memory_space<vmem>>, vector<1x128xf32>
    %129 = vector.broadcast %128 : vector<1x128xf32> to vector<8x128xf32>
    %130 = arith.addf %127, %129 : vector<8x128xf32>
    %c0_132 = arith.constant 0 : index
    %c0_133 = arith.constant 0 : index
    %131 = vector.load %arg8[%c0_132, %c0_133] : memref<128x32xf32, #tpu.memory_space<vmem>>, vector<128x32xf32>
    %cst_134 = arith.constant dense<0.000000e+00> : vector<8x32xf32>
    %132 = tpu.matmul %130, %131, %cst_134 {dimension_numbers = #tpu.dot_dimension_numbers<[1], [0], [0], [1], [0, 0, 1, 1], [], []>} : vector<8x128xf32>, vector<128x32xf32>, vector<8x32xf32> -> vector<8x32xf32>
    %c0_135 = arith.constant 0 : index
    %c0_136 = arith.constant 0 : index
    %133 = vector.load %arg9[%c0_135, %c0_136] : memref<1x32xf32, #tpu.memory_space<vmem>>, vector<1x32xf32>
    %134 = vector.broadcast %133 : vector<1x32xf32> to vector<8x32xf32>
    %135 = arith.addf %132, %134 : vector<8x32xf32>
    %c0_137 = arith.constant 0 : index
    %c0_138 = arith.constant 0 : index
    %136 = vector.load %arg10[%c0_137, %c0_138] : memref<32x10xf32, #tpu.memory_space<vmem>>, vector<32x10xf32>
    %cst_139 = arith.constant dense<0.000000e+00> : vector<8x10xf32>
    %137 = tpu.matmul %135, %136, %cst_139 {dimension_numbers = #tpu.dot_dimension_numbers<[1], [0], [0], [1], [0, 0, 1, 1], [], []>} : vector<8x32xf32>, vector<32x10xf32>, vector<8x10xf32> -> vector<8x10xf32>
    %c0_140 = arith.constant 0 : index
    %c0_141 = arith.constant 0 : index
    %138 = vector.load %arg11[%c0_140, %c0_141] : memref<1x10xf32, #tpu.memory_space<vmem>>, vector<1x10xf32>
    %139 = vector.broadcast %138 : vector<1x10xf32> to vector<8x10xf32>
    %140 = arith.addf %137, %139 : vector<8x10xf32>
    %cst_142 = arith.constant dense<0xFF800000> : vector<8xf32>
    %141 = vector.multi_reduction <maximumf>, %140, %cst_142 [1] : vector<8x10xf32> to vector<8xf32>
    %142 = vector.shape_cast %141 : vector<8xf32> to vector<8x1xf32>
    %143 = vector.broadcast %142 : vector<8x1xf32> to vector<8x10xf32>
    %144 = arith.subf %140, %143 : vector<8x10xf32>
    %145 = math.exp %144 : vector<8x10xf32>
    %cst_143 = arith.constant dense<0.000000e+00> : vector<8xf32>
    %146 = vector.multi_reduction <add>, %145, %cst_143 [1] : vector<8x10xf32> to vector<8xf32>
    %147 = vector.shape_cast %146 : vector<8xf32> to vector<8x1xf32>
    %148 = vector.broadcast %147 : vector<8x1xf32> to vector<8x10xf32>
    %149 = arith.divf %145, %148 : vector<8x10xf32>
    %c0_144 = arith.constant 0 : index
    %c0_145 = arith.constant 0 : index
    %150 = vector.load %arg12[%c0_144, %c0_145] : memref<8x10xf32, #tpu.memory_space<vmem>>, vector<8x10xf32>
    tpu.vector_store %arg12[%c0_144, %c0_145], %149 {strides = array<i32>} : memref<8x10xf32, #tpu.memory_space<vmem>>, vector<8x10xf32>,
    return
  }
  func.func @transform_0(%arg0: i32) -> (i32, i32, i32) {
    %c0_i32 = arith.constant 0 : i32
    %c0_i32_0 = arith.constant 0 : i32
    %c0_i32_1 = arith.constant 0 : i32
    return %arg0, %c0_i32, %c0_i32_0 : i32, i32, i32
  }
  func.func @transform_1(%arg0: i32) -> (i32, i32, i32) {
    %c0_i32 = arith.constant 0 : i32
    %c0_i32_0 = arith.constant 0 : i32
    %c0_i32_1 = arith.constant 0 : i32
    %c0_i32_2 = arith.constant 0 : i32
    return %c0_i32, %c0_i32_0, %c0_i32_1 : i32, i32, i32
  }
  func.func @transform_2(%arg0: i32) -> (i32, i32) {
    %c0_i32 = arith.constant 0 : i32
    %c0_i32_0 = arith.constant 0 : i32
    %c0_i32_1 = arith.constant 0 : i32
    return %c0_i32, %c0_i32_0 : i32, i32
  }
  func.func @transform_3(%arg0: i32) -> (i32, i32, i32) {
    %c0_i32 = arith.constant 0 : i32
    %c0_i32_0 = arith.constant 0 : i32
    %c0_i32_1 = arith.constant 0 : i32
    %c0_i32_2 = arith.constant 0 : i32
    return %c0_i32, %c0_i32_0, %c0_i32_1 : i32, i32, i32
  }
  func.func @transform_4(%arg0: i32) -> (i32, i32) {
    %c0_i32 = arith.constant 0 : i32
    %c0_i32_0 = arith.constant 0 : i32
    %c0_i32_1 = arith.constant 0 : i32
    return %c0_i32, %c0_i32_0 : i32, i32
  }
  func.func @transform_5(%arg0: i32) -> (i32, i32) {
    %c0_i32 = arith.constant 0 : i32
    %c0_i32_0 = arith.constant 0 : i32
    %c0_i32_1 = arith.constant 0 : i32
    return %c0_i32, %c0_i32_0 : i32, i32
  }
  func.func @transform_6(%arg0: i32) -> (i32, i32) {
    %c0_i32 = arith.constant 0 : i32
    %c0_i32_0 = arith.constant 0 : i32
    %c0_i32_1 = arith.constant 0 : i32
    return %c0_i32, %c0_i32_0 : i32, i32
  }
  func.func @transform_7(%arg0: i32) -> (i32, i32) {
    %c0_i32 = arith.constant 0 : i32
    %c0_i32_0 = arith.constant 0 : i32
    %c0_i32_1 = arith.constant 0 : i32
    return %c0_i32, %c0_i32_0 : i32, i32
  }
  func.func @transform_8(%arg0: i32) -> (i32, i32) {
    %c0_i32 = arith.constant 0 : i32
    %c0_i32_0 = arith.constant 0 : i32
    %c0_i32_1 = arith.constant 0 : i32
    return %c0_i32, %c0_i32_0 : i32, i32
  }
  func.func @transform_9(%arg0: i32) -> (i32, i32) {
    %c0_i32 = arith.constant 0 : i32
    %c0_i32_0 = arith.constant 0 : i32
    %c0_i32_1 = arith.constant 0 : i32
    return %c0_i32, %c0_i32_0 : i32, i32
  }
  func.func @transform_10(%arg0: i32) -> (i32, i32) {
    %c0_i32 = arith.constant 0 : i32
    %c0_i32_0 = arith.constant 0 : i32
    %c0_i32_1 = arith.constant 0 : i32
    return %c0_i32, %c0_i32_0 : i32, i32
  }
  func.func @transform_11(%arg0: i32) -> (i32, i32) {
    %c0_i32 = arith.constant 0 : i32
    %c0_i32_0 = arith.constant 0 : i32
    return %arg0, %c0_i32 : i32, i32
  }
}

</mosaic_0001>

<llo_original>
// kernel: mgmt_forward.1
$region0: #{mgmt_forward.1}
  #allocation0 [shape = 'u32[]', space=smem, size = 0x4, offset = 0x4, fixed_abs, tag = 'smem constant byte address 0x4 - core index']
  #allocation1 [shape = 'u32[144,128]{1,0:T(1,128)}', space=vmem, size = 0x12000, scoped, tag = 'internal scratch']
  #allocation2 [shape = 'f32[8,20,16]{2,1,0:T(8,128)}', space=vmem, size = 0x18000, scoped, tag = 'scratch operand']
  #allocation3 [shape = 'f32[128,128]{1,0:T(8,128)}', space=vmem, size = 0x10000, scoped, tag = 'scratch operand']
  #allocation4 [shape = 'f32[8,12,64]{2,1,0:T(8,128)}', space=vmem, size = 0x10000, scoped, tag = 'scratch operand']
  #allocation5 [shape = 'f32[64,128]{1,0:T(8,128)}', space=vmem, size = 0x8000, scoped, tag = 'scratch operand']
  #allocation6 [shape = 'f32[8,256]{1,0:T(8,128)}', space=vmem, size = 0x2000, scoped, tag = 'scratch operand']
  %s0 = inlined_call_operand.hbm [shape: f32[16,16,16], index: 0, kind: input, shape index: {}]
  %s1 = inlined_call_operand.vmem [shape: f32[5,16,128], index: 1, kind: input, shape index: {}]
  %s2 = inlined_call_operand.vmem [shape: f32[1,64], index: 2, kind: input, shape index: {}]
  %s3 = inlined_call_operand.hbm [shape: f32[5,64,128], index: 3, kind: input, shape index: {}]
  %s4 = inlined_call_operand.vmem [shape: f32[1,64], index: 4, kind: input, shape index: {}]
  %s5 = inlined_call_operand.hbm [shape: f32[256,128], index: 5, kind: input, shape index: {}]
  %s6 = inlined_call_operand.vmem [shape: f32[1,128], index: 6, kind: input, shape index: {}]
  %s7 = inlined_call_operand.vmem [shape: f32[128,32], index: 7, kind: input, shape index: {}]
  %s8 = inlined_call_operand.vmem [shape: f32[1,32], index: 8, kind: input, shape index: {}]
  %s9 = inlined_call_operand.vmem [shape: f32[32,10], index: 9, kind: input, shape index: {}]
  %s10 = inlined_call_operand.vmem [shape: f32[1,10], index: 10, kind: input, shape index: {}]
  %s11 = inlined_call_operand.hbm [shape: f32[16,10], index: 11, kind: output, shape index: {}]
  %s12 = sld [smem:[#allocation0]]
  $region89: #{mgmt_forward.1} parent=0
    _
  %s14 = ssub.s32 1, %s12
  %s15 = scalar_select 0, %s14, %s12
  $region1: #{mgmt_forward.1} parent=0
    #allocation7 [shape = 'u8[131072]{0}', space=vmem, size = 0x20000, scoped, tag = 'input window, operand 0']
    #allocation8 [shape = 's32[2]{0}', space=sflag, size = 0x8, scoped, tag = 'scoped memory for mgmt_forward.1']
    #allocation9 [shape = 's32[2]{0}', space=sflag, size = 0x8, scoped, tag = 'scoped memory for mgmt_forward.1']
    #allocation10 [shape = 'u8[163840]{0}', space=vmem, size = 0x28000, scoped, tag = 'input window, operand 3, single buffered']
    #allocation11 [shape = 's32[1]{0}', space=sflag, size = 0x4, scoped, tag = 'scoped memory for mgmt_forward.1']
    #allocation12 [shape = 'u8[131072]{0}', space=vmem, size = 0x20000, scoped, tag = 'input window, operand 5, single buffered']
    #allocation13 [shape = 'u8[8192]{0}', space=vmem, size = 0x2000, scoped, tag = 'output window, operand 0']
    %16 = vsyncpa [#allocation8], 0
    %s17 = scalar_lea.sflag [#allocation8], 1
    %18 = vsyncpa %s17, 0
    %19 = vsyncpa [#allocation11], 0
    %20 = vsyncpa [#allocation9], 0
    %s21 = scalar_lea.sflag [#allocation9], 1
    %22 = vsyncpa %s21, 0
    loop: start=0, step=1, limit=4
    $region2: #{mgmt_forward.1} parent=1 // loop_pre_header
      _
    $region3: #{mgmt_forward.1} parent=1 // loop_header
      %s24 = sphi 0, %s28
      %p25 = scmp.ge.s32.totalorder %s24, 4
      %s34 = sphi 0, %s36
      %s37 = sphi 0, %s34
      %s38 = sphi 0, %s37
      %s54 = sphi 0, %s38
      %s58 = sphi 0, %s58
      %s60 = sphi 0, %s58
      %s61 = sphi 0, %s60
      %s75 = sphi 0, %s61
      %s79 = sphi 0, %s79
      %s81 = sphi 0, %s79
      %s82 = sphi 0, %s81
      %s96 = sphi 0, %s82
      %s100 = sphi 0, %s100
      %s102 = sphi 0, %s100
      %s103 = sphi 0, %s102
      %s117 = sphi 0, %s103
      %s121 = sphi 0, %s121
      %s123 = sphi 0, %s121
      %s124 = sphi 0, %s123
      %s138 = sphi 0, %s124
      %s142 = sphi 0, %s142
      %s144 = sphi 0, %s142
      %s145 = sphi 0, %s144
      %s159 = sphi 0, %s145
      %s163 = sphi 0, %s163
      %s165 = sphi 0, %s163
      %s166 = sphi 0, %s165
      %s180 = sphi 0, %s166
      %s184 = sphi 0, %s184
      %s186 = sphi 0, %s184
      %s187 = sphi 0, %s186
      %s201 = sphi 0, %s187
      %s205 = sphi 0, %s205
      %s207 = sphi 0, %s205
      %s208 = sphi 0, %s207
      %s222 = sphi 0, %s208
      %s226 = sphi 0, %s226
      %s228 = sphi 0, %s226
      %s229 = sphi 0, %s228
      %s243 = sphi 0, %s229
      %s247 = sphi 0, %s247
      %s249 = sphi 0, %s247
      %s250 = sphi 0, %s249
      %s264 = sphi 0, %s250
      %s270 = sphi 0, %s272
      %s273 = sphi 0, %s270
      %s274 = sphi 0, %s273
      %s290 = sphi 0, %s274
    $region4: #{mgmt_forward.1} parent=1 // loop_header_branch
      %27 = sbr.rel (%p25) target = $region8
    $region5: #{mgmt_forward.1} parent=1 // loop_body
      %s29 = ssub.s32 %s24, 1
      %s30 = ssub.s32 %s24, 2
      %s31 = sadd.s32 %s24, 1
      %s32 = ssub.s32 %s24, %s31
      %p33 = scmp.eq.s32.totalorder %s32, 0
      %s35 = sadd.s32 %s34, 1
      %s36 = scalar_select %p33, %s34, %s35
      %p39 = pneg %p33
      %p40 = scmp.eq.s32.totalorder %s24, 1
      %p41 = por %p39, %p40
      %p42 = scmp.ne.s32.totalorder %s34, %s37
      %p43 = scmp.eq.s32.totalorder %s24, 0
      %p44 = por %p42, %p43
      %p45 = scmp.ne.s32.totalorder %s34, %s37
      %p46 = scmp.eq.s32.totalorder %s29, 1
      %p47 = por %p45, %p46
      %p48 = scmp.ne.s32.totalorder %s37, %s38
      %p49 = scmp.eq.s32.totalorder %s29, 0
      %p50 = por %p48, %p49
      %p51 = scmp.ne.s32.totalorder %s37, %s38
      %p52 = scmp.eq.s32.totalorder %s30, 1
      %p53 = por %p51, %p52
      %p55 = scmp.ne.s32.totalorder %s38, %s54
      %p56 = scmp.eq.s32.totalorder %s30, 0
      %p57 = por %p55, %p56
      %s59 = sadd.s32 %s58, 1
      %p62 = scmp.eq.s32.totalorder %s24, 1
      %p63 = scmp.ne.s32.totalorder %s58, %s60
      %p64 = scmp.eq.s32.totalorder %s24, 0
      %p65 = por %p63, %p64
      %p66 = scmp.ne.s32.totalorder %s58, %s60
      %p67 = scmp.eq.s32.totalorder %s29, 1
      %p68 = por %p66, %p67
      %p69 = scmp.ne.s32.totalorder %s60, %s61
      %p70 = scmp.eq.s32.totalorder %s29, 0
      %p71 = por %p69, %p70
      %p72 = scmp.ne.s32.totalorder %s60, %s61
      %p73 = scmp.eq.s32.totalorder %s30, 1
      %p74 = por %p72, %p73
      %p76 = scmp.ne.s32.totalorder %s61, %s75
      %p77 = scmp.eq.s32.totalorder %s30, 0
      %p78 = por %p76, %p77
      %s80 = sadd.s32 %s79, 1
      %p83 = scmp.eq.s32.totalorder %s24, 1
      %p84 = scmp.ne.s32.totalorder %s79, %s81
      %p85 = scmp.eq.s32.totalorder %s24, 0
      %p86 = por %p84, %p85
      %p87 = scmp.ne.s32.totalorder %s79, %s81
      %p88 = scmp.eq.s32.totalorder %s29, 1
      %p89 = por %p87, %p88
      %p90 = scmp.ne.s32.totalorder %s81, %s82
      %p91 = scmp.eq.s32.totalorder %s29, 0
      %p92 = por %p90, %p91
      %p93 = scmp.ne.s32.totalorder %s81, %s82
      %p94 = scmp.eq.s32.totalorder %s30, 1
      %p95 = por %p93, %p94
      %p97 = scmp.ne.s32.totalorder %s82, %s96
      %p98 = scmp.eq.s32.totalorder %s30, 0
      %p99 = por %p97, %p98
      %s101 = sadd.s32 %s100, 1
      %p104 = scmp.eq.s32.totalorder %s24, 1
      %p105 = scmp.ne.s32.totalorder %s100, %s102
      %p106 = scmp.eq.s32.totalorder %s24, 0
      %p107 = por %p105, %p106
      %p108 = scmp.ne.s32.totalorder %s100, %s102
      %p109 = scmp.eq.s32.totalorder %s29, 1
      %p110 = por %p108, %p109
      %p111 = scmp.ne.s32.totalorder %s102, %s103
      %p112 = scmp.eq.s32.totalorder %s29, 0
      %p113 = por %p111, %p112
      %p114 = scmp.ne.s32.totalorder %s102, %s103
      %p115 = scmp.eq.s32.totalorder %s30, 1
      %p116 = por %p114, %p115
      %p118 = scmp.ne.s32.totalorder %s103, %s117
      %p119 = scmp.eq.s32.totalorder %s30, 0
      %p120 = por %p118, %p119
      %s122 = sadd.s32 %s121, 1
      %p125 = scmp.eq.s32.totalorder %s24, 1
      %p126 = scmp.ne.s32.totalorder %s121, %s123
      %p127 = scmp.eq.s32.totalorder %s24, 0
      %p128 = por %p126, %p127
      %p129 = scmp.ne.s32.totalorder %s121, %s123
      %p130 = scmp.eq.s32.totalorder %s29, 1
      %p131 = por %p129, %p130
      %p132 = scmp.ne.s32.totalorder %s123, %s124
      %p133 = scmp.eq.s32.totalorder %s29, 0
      %p134 = por %p132, %p133
      %p135 = scmp.ne.s32.totalorder %s123, %s124
      %p136 = scmp.eq.s32.totalorder %s30, 1
      %p137 = por %p135, %p136
      %p139 = scmp.ne.s32.totalorder %s124, %s138
      %p140 = scmp.eq.s32.totalorder %s30, 0
      %p141 = por %p139, %p140
      %s143 = sadd.s32 %s142, 1
      %p146 = scmp.eq.s32.totalorder %s24, 1
      %p147 = scmp.ne.s32.totalorder %s142, %s144
      %p148 = scmp.eq.s32.totalorder %s24, 0
      %p149 = por %p147, %p148
      %p150 = scmp.ne.s32.totalorder %s142, %s144
      %p151 = scmp.eq.s32.totalorder %s29, 1
      %p152 = por %p150, %p151
      %p153 = scmp.ne.s32.totalorder %s144, %s145
      %p154 = scmp.eq.s32.totalorder %s29, 0
      %p155 = por %p153, %p154
      %p156 = scmp.ne.s32.totalorder %s144, %s145
      %p157 = scmp.eq.s32.totalorder %s30, 1
      %p158 = por %p156, %p157
      %p160 = scmp.ne.s32.totalorder %s145, %s159
      %p161 = scmp.eq.s32.totalorder %s30, 0
      %p162 = por %p160, %p161
      %s164 = sadd.s32 %s163, 1
      %p167 = scmp.eq.s32.totalorder %s24, 1
      %p168 = scmp.ne.s32.totalorder %s163, %s165
      %p169 = scmp.eq.s32.totalorder %s24, 0
      %p170 = por %p168, %p169
      %p171 = scmp.ne.s32.totalorder %s163, %s165
      %p172 = scmp.eq.s32.totalorder %s29, 1
      %p173 = por %p171, %p172
      %p174 = scmp.ne.s32.totalorder %s165, %s166
      %p175 = scmp.eq.s32.totalorder %s29, 0
      %p176 = por %p174, %p175
      %p177 = scmp.ne.s32.totalorder %s165, %s166
      %p178 = scmp.eq.s32.totalorder %s30, 1
      %p179 = por %p177, %p178
      %p181 = scmp.ne.s32.totalorder %s166, %s180
      %p182 = scmp.eq.s32.totalorder %s30, 0
      %p183 = por %p181, %p182
      %s185 = sadd.s32 %s184, 1
      %p188 = scmp.eq.s32.totalorder %s24, 1
      %p189 = scmp.ne.s32.totalorder %s184, %s186
      %p190 = scmp.eq.s32.totalorder %s24, 0
      %p191 = por %p189, %p190
      %p192 = scmp.ne.s32.totalorder %s184, %s186
      %p193 = scmp.eq.s32.totalorder %s29, 1
      %p194 = por %p192, %p193
      %p195 = scmp.ne.s32.totalorder %s186, %s187
      %p196 = scmp.eq.s32.totalorder %s29, 0
      %p197 = por %p195, %p196
      %p198 = scmp.ne.s32.totalorder %s186, %s187
      %p199 = scmp.eq.s32.totalorder %s30, 1
      %p200 = por %p198, %p199
      %p202 = scmp.ne.s32.totalorder %s187, %s201
      %p203 = scmp.eq.s32.totalorder %s30, 0
      %p204 = por %p202, %p203
      %s206 = sadd.s32 %s205, 1
      %p209 = scmp.eq.s32.totalorder %s24, 1
      %p210 = scmp.ne.s32.totalorder %s205, %s207
      %p211 = scmp.eq.s32.totalorder %s24, 0
      %p212 = por %p210, %p211
      %p213 = scmp.ne.s32.totalorder %s205, %s207
      %p214 = scmp.eq.s32.totalorder %s29, 1
      %p215 = por %p213, %p214
      %p216 = scmp.ne.s32.totalorder %s207, %s208
      %p217 = scmp.eq.s32.totalorder %s29, 0
      %p218 = por %p216, %p217
      %p219 = scmp.ne.s32.totalorder %s207, %s208
      %p220 = scmp.eq.s32.totalorder %s30, 1
      %p221 = por %p219, %p220
      %p223 = scmp.ne.s32.totalorder %s208, %s222
      %p224 = scmp.eq.s32.totalorder %s30, 0
      %p225 = por %p223, %p224
      %s227 = sadd.s32 %s226, 1
      %p230 = scmp.eq.s32.totalorder %s24, 1
      %p231 = scmp.ne.s32.totalorder %s226, %s228
      %p232 = scmp.eq.s32.totalorder %s24, 0
      %p233 = por %p231, %p232
      %p234 = scmp.ne.s32.totalorder %s226, %s228
      %p235 = scmp.eq.s32.totalorder %s29, 1
      %p236 = por %p234, %p235
      %p237 = scmp.ne.s32.totalorder %s228, %s229
      %p238 = scmp.eq.s32.totalorder %s29, 0
      %p239 = por %p237, %p238
      %p240 = scmp.ne.s32.totalorder %s228, %s229
      %p241 = scmp.eq.s32.totalorder %s30, 1
      %p242 = por %p240, %p241
      %p244 = scmp.ne.s32.totalorder %s229, %s243
      %p245 = scmp.eq.s32.totalorder %s30, 0
      %p246 = por %p244, %p245
      %s248 = sadd.s32 %s247, 1
      %p251 = scmp.eq.s32.totalorder %s24, 1
      %p252 = scmp.ne.s32.totalorder %s247, %s249
      %p253 = scmp.eq.s32.totalorder %s24, 0
      %p254 = por %p252, %p253
      %p255 = scmp.ne.s32.totalorder %s247, %s249
      %p256 = scmp.eq.s32.totalorder %s29, 1
      %p257 = por %p255, %p256
      %p258 = scmp.ne.s32.totalorder %s249, %s250
      %p259 = scmp.eq.s32.totalorder %s29, 0
      %p260 = por %p258, %p259
      %p261 = scmp.ne.s32.totalorder %s249, %s250
      %p262 = scmp.eq.s32.totalorder %s30, 1
      %p263 = por %p261, %p262
      %p265 = scmp.ne.s32.totalorder %s250, %s264
      %p266 = scmp.eq.s32.totalorder %s30, 0
      %p267 = por %p265, %p266
      %s268 = ssub.s32 %s24, %s31
      %p269 = scmp.eq.s32.totalorder %s268, 0
      %s271 = sadd.s32 %s270, 1
      %s272 = scalar_select %p269, %s270, %s271
      %p275 = pneg %p269
      %p276 = scmp.eq.s32.totalorder %s24, 1
      %p277 = por %p275, %p276
      %p278 = scmp.ne.s32.totalorder %s270, %s273
      %p279 = scmp.eq.s32.totalorder %s24, 0
      %p280 = por %p278, %p279
      %p281 = scmp.ne.s32.totalorder %s270, %s273
      %p282 = scmp.eq.s32.totalorder %s29, 1
      %p283 = por %p281, %p282
      %p284 = scmp.ne.s32.totalorder %s273, %s274
      %p285 = scmp.eq.s32.totalorder %s29, 0
      %p286 = por %p284, %p285
      %p287 = scmp.ne.s32.totalorder %s273, %s274
      %p288 = scmp.eq.s32.totalorder %s30, 1
      %p289 = por %p287, %p288
      %p291 = scmp.ne.s32.totalorder %s274, %s290
      %p292 = scmp.eq.s32.totalorder %s30, 0
      %p293 = por %p291, %p292
      %p294 = scmp.le.s32.totalorder 1, %s24
      %p295 = scmp.lt.s32.totalorder %s24, 3
      %p296 = pnand %p294, %p295
      %p297 = pneg %p296
      // Predicated region
      $region9: #{mgmt_forward.1} parent=5 // pred_check
        _
      $region10: #{mgmt_forward.1} parent=5 // pred_check_branch
        %299 = sbr.rel (%p296) target = $region12
      $region11: #{mgmt_forward.1} parent=5 // pred_region
        %s300 = ssub.s32 %s24, 1
        // Predicated region
        $region13: #{mgmt_forward.1} parent=11 // pred_check
          %p301 = pneg %p71
        $region14: #{mgmt_forward.1} parent=11 // pred_check_branch
          %303 = sbr.rel (%p301) target = $region16
        $region15: #{mgmt_forward.1} parent=11 // pred_region
          _
        $region16: #{mgmt_forward.1} parent=11 // pred_fallthru
          _
        // Predicated region
        $region17: #{mgmt_forward.1} parent=11 // pred_check
          %p304 = pneg %p92
        $region18: #{mgmt_forward.1} parent=11 // pred_check_branch
          %306 = sbr.rel (%p304) target = $region20
        $region19: #{mgmt_forward.1} parent=11 // pred_region
          _
        $region20: #{mgmt_forward.1} parent=11 // pred_fallthru
          _
        // Predicated region
        $region21: #{mgmt_forward.1} parent=11 // pred_check
          %p307 = pneg %p113
        $region22: #{mgmt_forward.1} parent=11 // pred_check_branch
          %309 = sbr.rel (%p307) target = $region24
        $region23: #{mgmt_forward.1} parent=11 // pred_region
          %s311 = ssub.s32 5120, 5120
          %312 = vsyncadd [#allocation11], %s311
          %s313 = sshll.u32 [#allocation10], 4
          %s314 = int_to_ptr.vmem [resolvable:$true] %s313
          %319 = dma.hbm_to_vmem [thread:$0]  %s3, 5120, %s314, [#allocation11], 128, 128, 8
        $region24: #{mgmt_forward.1} parent=11 // pred_fallthru
          _
        // Predicated region
        $region25: #{mgmt_forward.1} parent=11 // pred_check
          %p320 = pneg %p134
        $region26: #{mgmt_forward.1} parent=11 // pred_check_branch
          %322 = sbr.rel (%p320) target = $region28
        $region27: #{mgmt_forward.1} parent=11 // pred_region
          _
        $region28: #{mgmt_forward.1} parent=11 // pred_fallthru
          _
        // Predicated region
        $region29: #{mgmt_forward.1} parent=11 // pred_check
          %p323 = pneg %p155
        $region30: #{mgmt_forward.1} parent=11 // pred_check_branch
          %325 = sbr.rel (%p323) target = $region32
        $region31: #{mgmt_forward.1} parent=11 // pred_region
          %s327 = ssub.s32 4096, 4096
          %328 = vsyncadd [#allocation11], %s327
          %s329 = sshll.u32 [#allocation12], 4
          %s330 = int_to_ptr.vmem [resolvable:$true] %s329
          %335 = dma.hbm_to_vmem [thread:$0]  %s5, 4096, %s330, [#allocation11], 128, 128, 8
        $region32: #{mgmt_forward.1} parent=11 // pred_fallthru
          _
        // Predicated region
        $region33: #{mgmt_forward.1} parent=11 // pred_check
          %p336 = pneg %p176
        $region34: #{mgmt_forward.1} parent=11 // pred_check_branch
          %338 = sbr.rel (%p336) target = $region36
        $region35: #{mgmt_forward.1} parent=11 // pred_region
          _
        $region36: #{mgmt_forward.1} parent=11 // pred_fallthru
          _
        // Predicated region
        $region37: #{mgmt_forward.1} parent=11 // pred_check
          %p339 = pneg %p197
        $region38: #{mgmt_forward.1} parent=11 // pred_check_branch
          %341 = sbr.rel (%p339) target = $region40
        $region39: #{mgmt_forward.1} parent=11 // pred_region
          _
        $region40: #{mgmt_forward.1} parent=11 // pred_fallthru
          _
        // Predicated region
        $region41: #{mgmt_forward.1} parent=11 // pred_check
          %p342 = pneg %p218
        $region42: #{mgmt_forward.1} parent=11 // pred_check_branch
          %344 = sbr.rel (%p342) target = $region44
        $region43: #{mgmt_forward.1} parent=11 // pred_region
          _
        $region44: #{mgmt_forward.1} parent=11 // pred_fallthru
          _
        // Predicated region
        $region45: #{mgmt_forward.1} parent=11 // pred_check
          %p345 = pneg %p239
        $region46: #{mgmt_forward.1} parent=11 // pred_check_branch
          %347 = sbr.rel (%p345) target = $region48
        $region47: #{mgmt_forward.1} parent=11 // pred_region
          _
        $region48: #{mgmt_forward.1} parent=11 // pred_fallthru
          _
        // Predicated region
        $region49: #{mgmt_forward.1} parent=11 // pred_check
          %p348 = pneg %p260
        $region50: #{mgmt_forward.1} parent=11 // pred_check_branch
          %350 = sbr.rel (%p348) target = $region52
        $region51: #{mgmt_forward.1} parent=11 // pred_region
          _
        $region52: #{mgmt_forward.1} parent=11 // pred_fallthru
          _
      $region12: #{mgmt_forward.1} parent=5 // pred_fallthru
        _
      %p351 = scmp.lt.s32.totalorder %s24, 2
      // Predicated region
      $region53: #{mgmt_forward.1} parent=5 // pred_check
        %p352 = pneg %p351
      $region54: #{mgmt_forward.1} parent=5 // pred_check_branch
        %354 = sbr.rel (%p352) target = $region56
      $region55: #{mgmt_forward.1} parent=5 // pred_region
        // Predicated region
        $region57: #{mgmt_forward.1} parent=55 // pred_check
          %p355 = pneg %p44
        $region58: #{mgmt_forward.1} parent=55 // pred_check_branch
          %357 = sbr.rel (%p355) target = $region60
        $region59: #{mgmt_forward.1} parent=55 // pred_region
          %s358 = sand.u32 %s34, 1
          %s359 = scalar_lea.sflag [#allocation8], %s358
          %s360 = sand.u32 %s34, 1
          %s361 = smul.addr %s360, 128
          %s362 = scalar_lea.vmem [#allocation7], %s361
          %s363 = smul.u32 8, %s24
          %s365 = ssub.s32 2048, 2048
          %366 = vsyncadd %s359, %s365
          %s367 = smul.addr %s363, 2
          %s368 = smul.addr %s367, 128
          %s369 = scalar_lea.hbm %s0, %s368
          %s370 = sshll.u32 %s362, 4
          %s371 = int_to_ptr.vmem [resolvable:$true] %s370
          %376 = dma.hbm_to_vmem [thread:$0]  %s369, 2048, %s371, %s359, 128, 128, 8
        $region60: #{mgmt_forward.1} parent=55 // pred_fallthru
          _
      $region56: #{mgmt_forward.1} parent=5 // pred_fallthru
        _
      %p377 = scmp.le.s32.totalorder 1, %s24
      %p378 = scmp.lt.s32.totalorder %s24, 3
      %p379 = pnand %p377, %p378
      %p380 = pneg %p379
      // Predicated region
      $region61: #{mgmt_forward.1} parent=5 // pred_check
        _
      $region62: #{mgmt_forward.1} parent=5 // pred_check_branch
        %382 = sbr.rel (%p379) target = $region64
      $region63: #{mgmt_forward.1} parent=5 // pred_region
        %s383 = ssub.s32 %s24, 1
        %s384 = sand.u32 %s37, 1
        %s385 = scalar_lea.sflag [#allocation8], %s384
        %s386 = sand.u32 %s37, 1
        %s387 = smul.addr %s386, 128
        %s388 = scalar_lea.vmem [#allocation7], %s387
        // Predicated region
        $region65: #{mgmt_forward.1} parent=63 // pred_check
          %p389 = pneg %p50
        $region66: #{mgmt_forward.1} parent=63 // pred_check_branch
          %391 = sbr.rel (%p389) target = $region68
        $region67: #{mgmt_forward.1} parent=63 // pred_region
          %392 = dma.done %s385, 2048
        $region68: #{mgmt_forward.1} parent=63 // pred_fallthru
          _
        // Predicated region
        $region69: #{mgmt_forward.1} parent=63 // pred_check
          %p393 = pneg %p113
        $region70: #{mgmt_forward.1} parent=63 // pred_check_branch
          %395 = sbr.rel (%p393) target = $region72
        $region71: #{mgmt_forward.1} parent=63 // pred_region
          %396 = dma.done [#allocation11], 5120
        $region72: #{mgmt_forward.1} parent=63 // pred_fallthru
          _
        // Predicated region
        $region73: #{mgmt_forward.1} parent=63 // pred_check
          %p397 = pneg %p155
        $region74: #{mgmt_forward.1} parent=63 // pred_check_branch
          %399 = sbr.rel (%p397) target = $region76
        $region75: #{mgmt_forward.1} parent=63 // pred_region
          %400 = dma.done [#allocation11], 4096
        $region76: #{mgmt_forward.1} parent=63 // pred_fallthru
          _
        %s401 = sand.u32 %s37, 1
        %s402 = scalar_lea.sflag [#allocation8], %s401
        %s403 = sand.u32 %s37, 1
        %s404 = smul.addr %s403, 128
        %s405 = scalar_lea.vmem [#allocation7], %s404
        %p406 = pneg %p50
        %p407 = pneg %p47
        %p408 = pneg %p71
        %p409 = pneg %p68
        %p410 = pneg %p92
        %p411 = pneg %p89
        %p412 = pneg %p113
        %p413 = pneg %p110
        %p414 = pneg %p134
        %p415 = pneg %p131
        %p416 = pneg %p155
        %p417 = pneg %p152
        %p418 = pneg %p176
        %p419 = pneg %p173
        %p420 = pneg %p197
        %p421 = pneg %p194
        %p422 = pneg %p218
        %p423 = pneg %p215
        %p424 = pneg %p239
        %p425 = pneg %p236
        %p426 = pneg %p260
        %p427 = pneg %p257
        %p428 = pneg %p286
        %p429 = pneg %p283
        %s430 = sand.u32 %s273, 1
        %s431 = scalar_lea.sflag [#allocation9], %s430
        %s432 = sand.u32 %s273, 1
        %s433 = smul.addr %s432, 8
        %s434 = scalar_lea.vmem [#allocation13], %s433
        %s435 = smul.u32 8, %s29
        %vm436 = vcmask 123904
        %437 = vst.msk [vmem:[#allocation2] sm:$0x3] %vm436, 0.0
        %438 = vst.msk [vmem:[#allocation2 + $0x18] sm:$0x3] %vm436, 0.0
        %439 = vst.msk [vmem:[#allocation2 + $0x30] sm:$0x3] %vm436, 0.0
        %440 = vst.msk [vmem:[#allocation2 + $0x48] sm:$0x3] %vm436, 0.0
        %441 = vst.msk [vmem:[#allocation2 + $0x60] sm:$0x3] %vm436, 0.0
        %442 = vst.msk [vmem:[#allocation2 + $0x78] sm:$0x3] %vm436, 0.0
        %443 = vst.msk [vmem:[#allocation2 + $0x90] sm:$0x3] %vm436, 0.0
        %444 = vst.msk [vmem:[#allocation2 + $0xa8] sm:$0x3] %vm436, 0.0
        %445 = vst.msk [vmem:[#allocation2 + $0x12] sm:$0x3] %vm436, 0.0
        %446 = vst.msk [vmem:[#allocation2 + $0x2a] sm:$0x3] %vm436, 0.0
        %447 = vst.msk [vmem:[#allocation2 + $0x42] sm:$0x3] %vm436, 0.0
        %448 = vst.msk [vmem:[#allocation2 + $0x5a] sm:$0x3] %vm436, 0.0
        %449 = vst.msk [vmem:[#allocation2 + $0x72] sm:$0x3] %vm436, 0.0
        %450 = vst.msk [vmem:[#allocation2 + $0x8a] sm:$0x3] %vm436, 0.0
        %451 = vst.msk [vmem:[#allocation2 + $0xa2] sm:$0x3] %vm436, 0.0
        %452 = vst.msk [vmem:[#allocation2 + $0xba] sm:$0x3] %vm436, 0.0
        %v453 = vld [vmem:[%s388] sm:$0xff]
        %v454 = vld [vmem:[%s388 + $0x8] sm:$0xff]
        %v455 = vld [vmem:[%s388 + $0x10] sm:$0xff]
        %v456 = vld [vmem:[%s388 + $0x18] sm:$0xff]
        %v457 = vld [vmem:[%s388 + $0x20] sm:$0xff]
        %v458 = vld [vmem:[%s388 + $0x28] sm:$0xff]
        %v459 = vld [vmem:[%s388 + $0x30] sm:$0xff]
        %v460 = vld [vmem:[%s388 + $0x38] sm:$0xff]
        %v461 = vld [vmem:[%s388 + $0x40] sm:$0xff]
        %v462 = vld [vmem:[%s388 + $0x48] sm:$0xff]
        %v463 = vld [vmem:[%s388 + $0x50] sm:$0xff]
        %v464 = vld [vmem:[%s388 + $0x58] sm:$0xff]
        %v465 = vld [vmem:[%s388 + $0x60] sm:$0xff]
        %v466 = vld [vmem:[%s388 + $0x68] sm:$0xff]
        %v467 = vld [vmem:[%s388 + $0x70] sm:$0xff]
        %v468 = vld [vmem:[%s388 + $0x78] sm:$0xff]
        %vm469 = vcmask 130048
        %470 = vst.msk [vmem:[#allocation2 + $0x2] sm:$0xff] %vm469, %v453
        %471 = vst.msk [vmem:[#allocation2 + $0xa] sm:$0xff] %vm469, %v454
        %472 = vst.msk [vmem:[#allocation2 + $0x1a] sm:$0xff] %vm469, %v455
        %473 = vst.msk [vmem:[#allocation2 + $0x22] sm:$0xff] %vm469, %v456
        %474 = vst.msk [vmem:[#allocation2 + $0x32] sm:$0xff] %vm469, %v457
        %475 = vst.msk [vmem:[#allocation2 + $0x3a] sm:$0xff] %vm469, %v458
        %476 = vst.msk [vmem:[#allocation2 + $0x4a] sm:$0xff] %vm469, %v459
        %477 = vst.msk [vmem:[#allocation2 + $0x52] sm:$0xff] %vm469, %v460
        %478 = vst.msk [vmem:[#allocation2 + $0x62] sm:$0xff] %vm469, %v461
        %479 = vst.msk [vmem:[#allocation2 + $0x6a] sm:$0xff] %vm469, %v462
        %480 = vst.msk [vmem:[#allocation2 + $0x7a] sm:$0xff] %vm469, %v463
        %481 = vst.msk [vmem:[#allocation2 + $0x82] sm:$0xff] %vm469, %v464
        %482 = vst.msk [vmem:[#allocation2 + $0x92] sm:$0xff] %vm469, %v465
        %483 = vst.msk [vmem:[#allocation2 + $0x9a] sm:$0xff] %vm469, %v466
        %484 = vst.msk [vmem:[#allocation2 + $0xaa] sm:$0xff] %vm469, %v467
        %485 = vst.msk [vmem:[#allocation2 + $0xb2] sm:$0xff] %vm469, %v468
        %vm486 = vcmask 517120
        %487 = vst.msk [vmem:[#allocation4] sm:$0x3] %vm486, 0.0
        %488 = vst.msk [vmem:[#allocation4 + $0x10] sm:$0x3] %vm486, 0.0
        %489 = vst.msk [vmem:[#allocation4 + $0x20] sm:$0x3] %vm486, 0.0
        %490 = vst.msk [vmem:[#allocation4 + $0x30] sm:$0x3] %vm486, 0.0
        %491 = vst.msk [vmem:[#allocation4 + $0x40] sm:$0x3] %vm486, 0.0
        %492 = vst.msk [vmem:[#allocation4 + $0x50] sm:$0x3] %vm486, 0.0
        %493 = vst.msk [vmem:[#allocation4 + $0x60] sm:$0x3] %vm486, 0.0
        %494 = vst.msk [vmem:[#allocation4 + $0x70] sm:$0x3] %vm486, 0.0
        %495 = vst.msk [vmem:[#allocation4 + $0xa] sm:$0x3] %vm486, 0.0
        %496 = vst.msk [vmem:[#allocation4 + $0x1a] sm:$0x3] %vm486, 0.0
        %497 = vst.msk [vmem:[#allocation4 + $0x2a] sm:$0x3] %vm486, 0.0
        %498 = vst.msk [vmem:[#allocation4 + $0x3a] sm:$0x3] %vm486, 0.0
        %499 = vst.msk [vmem:[#allocation4 + $0x4a] sm:$0x3] %vm486, 0.0
        %500 = vst.msk [vmem:[#allocation4 + $0x5a] sm:$0x3] %vm486, 0.0
        %501 = vst.msk [vmem:[#allocation4 + $0x6a] sm:$0x3] %vm486, 0.0
        %502 = vst.msk [vmem:[#allocation4 + $0x7a] sm:$0x3] %vm486, 0.0
        %v503 = vld [vmem:[#allocation2] sm:$0xff]
        %v504 = vld [vmem:[#allocation2 + $0x8] sm:$0xff]
        %v505 = vld [vmem:[#allocation2 + $0x18] sm:$0xff]
        %v506 = vld [vmem:[#allocation2 + $0x20] sm:$0xff]
        %v507 = vld [vmem:[#allocation2 + $0x30] sm:$0xff]
        %v508 = vld [vmem:[#allocation2 + $0x38] sm:$0xff]
        %v509 = vld [vmem:[#allocation2 + $0x48] sm:$0xff]
        %v510 = vld [vmem:[#allocation2 + $0x50] sm:$0xff]
        %v511 = vld [vmem:[#allocation2 + $0x60] sm:$0xff]
        %v512 = vld [vmem:[#allocation2 + $0x68] sm:$0xff]
        %v513 = vld [vmem:[#allocation2 + $0x78] sm:$0xff]
        %v514 = vld [vmem:[#allocation2 + $0x80] sm:$0xff]
        %v515 = vld [vmem:[#allocation2 + $0x90] sm:$0xff]
        %v516 = vld [vmem:[#allocation2 + $0x98] sm:$0xff]
        %v517 = vld [vmem:[#allocation2 + $0xa8] sm:$0xff]
        %v518 = vld [vmem:[#allocation2 + $0xb0] sm:$0xff]
        %v519 = vld [vmem:[%s1] sm:$0xff]
        %v520 = vld [vmem:[%s1 + $0x8] sm:$0xff]
        %v521 = vld [vmem:[#allocation2 + $0x1] sm:$0xff]
        %v522 = vld [vmem:[#allocation2 + $0x9] sm:$0xff]
        %v523 = vld [vmem:[#allocation2 + $0x19] sm:$0xff]
        %v524 = vld [vmem:[#allocation2 + $0x21] sm:$0xff]
        %v525 = vld [vmem:[#allocation2 + $0x31] sm:$0xff]
        %v526 = vld [vmem:[#allocation2 + $0x39] sm:$0xff]
        %v527 = vld [vmem:[#allocation2 + $0x49] sm:$0xff]
        %v528 = vld [vmem:[#allocation2 + $0x51] sm:$0xff]
        %v529 = vld [vmem:[#allocation2 + $0x61] sm:$0xff]
        %v530 = vld [vmem:[#allocation2 + $0x69] sm:$0xff]
        %v531 = vld [vmem:[#allocation2 + $0x79] sm:$0xff]
        %v532 = vld [vmem:[#allocation2 + $0x81] sm:$0xff]
        %v533 = vld [vmem:[#allocation2 + $0x91] sm:$0xff]
        %v534 = vld [vmem:[#allocation2 + $0x99] sm:$0xff]
        %v535 = vld [vmem:[#allocation2 + $0xa9] sm:$0xff]
        %v536 = vld [vmem:[#allocation2 + $0xb1] sm:$0xff]
        %s537 = scalar_lea.vmem %s1, 16
        %v538 = vld [vmem:[%s537] sm:$0xff]
        %v539 = vld [vmem:[%s537 + $0x8] sm:$0xff]
        %v541 = vsel %vm469, %v521, 0
        %v544 = vsel %vm469, %v522, 0
        %v547 = vsel %vm469, %v523, 0
        %v550 = vsel %vm469, %v524, 0
        %v553 = vsel %vm469, %v525, 0
        %v556 = vsel %vm469, %v526, 0
        %v559 = vsel %vm469, %v527, 0
        %v562 = vsel %vm469, %v528, 0
        %v565 = vsel %vm469, %v529, 0
        %v568 = vsel %vm469, %v530, 0
        %v571 = vsel %vm469, %v531, 0
        %v574 = vsel %vm469, %v532, 0
        %v577 = vsel %vm469, %v533, 0
        %v580 = vsel %vm469, %v534, 0
        %v583 = vsel %vm469, %v535, 0
        %v586 = vsel %vm469, %v536, 0
        %588 = vmatprep.subr.mxu0 0.0
        %589 = vmatpush1.msra.mxu0 %v538
        %590 = vmatprep.subr.mxu0 0.0
        %591 = vmatpush1.msra.mxu0 %v539
        %592 = vmatprep.subr.mxu0 0.0
        %593 = vmatpush1.msra.mxu0 0.0
        %594 = vmatprep.subr.mxu0 0.0
        %595 = vmatpush1.msra.mxu0 0.0
        %596 = vmatprep.subr.mxu0 0.0
        %597 = vmatpush1.msra.mxu0 0.0
        %598 = vmatprep.subr.mxu0 0.0
        %599 = vmatpush1.msra.mxu0 0.0
        %600 = vmatprep.subr.mxu0 0.0
        %601 = vmatpush1.msra.mxu0 0.0
        %602 = vmatprep.subr.mxu0 0.0
        %603 = vmatpush1.msra.mxu0 0.0
        %604 = vmatprep.subr.mxu0 0.0
        %605 = vmatpush1.msra.mxu0 0.0
        %606 = vmatprep.subr.mxu0 0.0
        %607 = vmatpush1.msra.mxu0 0.0
        %608 = vmatprep.subr.mxu0 0.0
        %609 = vmatpush1.msra.mxu0 0.0
        %610 = vmatprep.subr.mxu0 0.0
        %611 = vmatpush1.msra.mxu0 0.0
        %612 = vmatprep.subr.mxu0 0.0
        %613 = vmatpush1.msra.mxu0 0.0
        %614 = vmatprep.subr.mxu0 0.0
        %615 = vmatpush1.msra.mxu0 0.0
        %616 = vmatprep.subr.mxu0 0.0
        %617 = vmatpush1.msra.mxu0 0.0
        %618 = vmatprep.subr.mxu0 0.0
        %619 = vmatpush1.msra.mxu0 0.0
        %620 = vmatprep.subr.mxu0 0.0
        %621 = vmatpush1.msra.mxu0 0.0
        %622 = vmatprep.subr.mxu0 0.0
        %623 = vmatpush1.msra.mxu0 0.0
        %624 = vmatprep.subr.mxu0 0.0
        %625 = vmatpush1.msra.mxu0 0.0
        %626 = vmatprep.subr.mxu0 0.0
        %627 = vmatpush1.msra.mxu0 0.0
        %628 = vmatprep.subr.mxu0 0.0
        %629 = vmatpush1.msra.mxu0 0.0
        %630 = vmatprep.subr.mxu0 0.0
        %631 = vmatpush1.msra.mxu0 0.0
        %632 = vmatprep.subr.mxu0 0.0
        %633 = vmatpush1.msra.mxu0 0.0
        %634 = vmatprep.subr.mxu0 0.0
        %635 = vmatpush1.msra.mxu0 0.0
        %636 = vmatprep.subr.mxu0 0.0
        %637 = vmatpush1.msra.mxu0 0.0
        %638 = vmatprep.subr.mxu0 0.0
        %639 = vmatpush1.msra.mxu0 0.0
        %640 = vmatprep.subr.mxu0 0.0
        %641 = vmatpush1.msra.mxu0 0.0
        %642 = vmatprep.subr.mxu0 0.0
        %643 = vmatpush1.msra.mxu0 0.0
        %644 = vmatprep.subr.mxu0 0.0
        %645 = vmatpush1.msra.mxu0 0.0
        %646 = vmatprep.subr.mxu0 0.0
        %647 = vmatpush1.msra.mxu0 0.0
        %648 = vmatprep.subr.mxu0 0.0
        %649 = vmatpush1.msra.mxu0 0.0
        %650 = vmatprep.subr.mxu0 0.0
        %651 = vmatpush1.msra.mxu0 0.0
        %652 = vmatprep.mubr.f32.mxu0 0.0
        %653 = vmatmul.mubr.f32.gmra.mrb[0].mxu0 %v541
        %v654 = vpop.f32.mrb[0].mxu0
        %v655 = vadd.f32 0.0, %v654
        %v656 = vpop.f32.mrb[0].mxu0
        %657 = vmatprep.mubr.f32.mxu0 0.0
        %658 = vmatmul.mubr.f32.gmra.mrb[0].mxu0 %v544
        %v659 = vpop.f32.mrb[0].mxu0
        %v660 = vadd.f32 0.0, %v659
        %v661 = vpop.f32.mrb[0].mxu0
        %662 = vmatprep.mubr.f32.mxu0 0.0
        %663 = vmatmul.mubr.f32.gmra.mrb[0].mxu0 %v547
        %v664 = vpop.f32.mrb[0].mxu0
        %v665 = vadd.f32 0.0, %v664
        %v666 = vpop.f32.mrb[0].mxu0
        %667 = vmatprep.mubr.f32.mxu0 0.0
        %668 = vmatmul.mubr.f32.gmra.mrb[0].mxu0 %v550
        %v669 = vpop.f32.mrb[0].mxu0
        %v670 = vadd.f32 0.0, %v669
        %v671 = vpop.f32.mrb[0].mxu0
        %672 = vmatprep.mubr.f32.mxu0 0.0
        %673 = vmatmul.mubr.f32.gmra.mrb[0].mxu0 %v553
        %v674 = vpop.f32.mrb[0].mxu0
        %v675 = vadd.f32 0.0, %v674
        %v676 = vpop.f32.mrb[0].mxu0
        %677 = vmatprep.mubr.f32.mxu0 0.0
        %678 = vmatmul.mubr.f32.gmra.mrb[0].mxu0 %v556
        %v679 = vpop.f32.mrb[0].mxu0
        %v680 = vadd.f32 0.0, %v679
        %v681 = vpop.f32.mrb[0].mxu0
        %682 = vmatprep.mubr.f32.mxu0 0.0
        %683 = vmatmul.mubr.f32.gmra.mrb[0].mxu0 %v559
        %v684 = vpop.f32.mrb[0].mxu0
        %v685 = vadd.f32 0.0, %v684
        %v686 = vpop.f32.mrb[0].mxu0
        %687 = vmatprep.mubr.f32.mxu0 0.0
        %688 = vmatmul.mubr.f32.gmra.mrb[0].mxu0 %v562
        %v689 = vpop.f32.mrb[0].mxu0
        %v690 = vadd.f32 0.0, %v689
        %v691 = vpop.f32.mrb[0].mxu0
        %692 = vmatprep.mubr.f32.mxu0 0.0
        %693 = vmatmul.mubr.f32.gmra.mrb[0].mxu0 %v565
        %v694 = vpop.f32.mrb[0].mxu0
        %v695 = vadd.f32 0.0, %v694
        %v696 = vpop.f32.mrb[0].mxu0
        %697 = vmatprep.mubr.f32.mxu0 0.0
        %698 = vmatmul.mubr.f32.gmra.mrb[0].mxu0 %v568
        %v699 = vpop.f32.mrb[0].mxu0
        %v700 = vadd.f32 0.0, %v699
        %v701 = vpop.f32.mrb[0].mxu0
        %702 = vmatprep.mubr.f32.mxu0 0.0
        %703 = vmatmul.mubr.f32.gmra.mrb[0].mxu0 %v571
        %v704 = vpop.f32.mrb[0].mxu0
        %v705 = vadd.f32 0.0, %v704
        %v706 = vpop.f32.mrb[0].mxu0
        %707 = vmatprep.mubr.f32.mxu0 0.0
        %708 = vmatmul.mubr.f32.gmra.mrb[0].mxu0 %v574
        %v709 = vpop.f32.mrb[0].mxu0
        %v710 = vadd.f32 0.0, %v709
        %v711 = vpop.f32.mrb[0].mxu0
        %712 = vmatprep.mubr.f32.mxu0 0.0
        %713 = vmatmul.mubr.f32.gmra.mrb[0].mxu0 %v577
        %v714 = vpop.f32.mrb[0].mxu0
        %v715 = vadd.f32 0.0, %v714
        %v716 = vpop.f32.mrb[0].mxu0
        %717 = vmatprep.mubr.f32.mxu0 0.0
        %718 = vmatmul.mubr.f32.gmra.mrb[0].mxu0 %v580
        %v719 = vpop.f32.mrb[0].mxu0
        %v720 = vadd.f32 0.0, %v719
        %v721 = vpop.f32.mrb[0].mxu0
        %722 = vmatprep.mubr.f32.mxu0 0.0
        %723 = vmatmul.mubr.f32.gmra.mrb[0].mxu0 %v583
        %v724 = vpop.f32.mrb[0].mxu0
        %v725 = vadd.f32 0.0, %v724
        %v726 = vpop.f32.mrb[0].mxu0
        %727 = vmatprep.mubr.f32.mxu0 0.0
        %728 = vmatmul.mubr.f32.gmra.mrb[0].mxu0 %v586
        %v729 = vpop.f32.mrb[0].mxu0
        %v730 = vadd.f32 0.0, %v729
        %v731 = vpop.f32.mrb[0].mxu0
        %732 = vdwg.mxu0
        %v734 = vsel %vm469, %v503, 0
        %v737 = vsel %vm469, %v504, 0
        %v740 = vsel %vm469, %v505, 0
        %v743 = vsel %vm469, %v506, 0
        %v746 = vsel %vm469, %v507, 0
        %v749 = vsel %vm469, %v508, 0
        %v752 = vsel %vm469, %v509, 0
        %v755 = vsel %vm469, %v510, 0
        %v758 = vsel %vm469, %v511, 0
        %v761 = vsel %vm469, %v512, 0
        %v764 = vsel %vm469, %v513, 0
        %v767 = vsel %vm469, %v514, 0
        %v770 = vsel %vm469, %v515, 0
        %v773 = vsel %vm469, %v516, 0
        %v776 = vsel %vm469, %v517, 0
        %v779 = vsel %vm469, %v518, 0
        %781 = vmatprep.subr.mxu0 0.0
        %782 = vmatpush1.msra.mxu0 %v519
        %783 = vmatprep.subr.mxu0 0.0
        %784 = vmatpush1.msra.mxu0 %v520
        %785 = vmatprep.subr.mxu0 0.0
        %786 = vmatpush1.msra.mxu0 0.0
        %787 = vmatprep.subr.mxu0 0.0
        %788 = vmatpush1.msra.mxu0 0.0
        %789 = vmatprep.subr.mxu0 0.0
        %790 = vmatpush1.msra.mxu0 0.0
        %791 = vmatprep.subr.mxu0 0.0
        %792 = vmatpush1.msra.mxu0 0.0
        %793 = vmatprep.subr.mxu0 0.0
        %794 = vmatpush1.msra.mxu0 0.0
        %795 = vmatprep.subr.mxu0 0.0
        %796 = vmatpush1.msra.mxu0 0.0
        %797 = vmatprep.subr.mxu0 0.0
        %798 = vmatpush1.msra.mxu0 0.0
        %799 = vmatprep.subr.mxu0 0.0
        %800 = vmatpush1.msra.mxu0 0.0
        %801 = vmatprep.subr.mxu0 0.0
        %802 = vmatpush1.msra.mxu0 0.0
        %803 = vmatprep.subr.mxu0 0.0
        %804 = vmatpush1.msra.mxu0 0.0
        %805 = vmatprep.subr.mxu0 0.0
        %806 = vmatpush1.msra.mxu0 0.0
        %807 = vmatprep.subr.mxu0 0.0
        %808 = vmatpush1.msra.mxu0 0.0
        %809 = vmatprep.subr.mxu0 0.0
        %810 = vmatpush1.msra.mxu0 0.0
        %811 = vmatprep.subr.mxu0 0.0
        %812 = vmatpush1.msra.mxu0 0.0
        %813 = vmatprep.subr.mxu0 0.0
        %814 = vmatpush1.msra.mxu0 0.0
        %815 = vmatprep.subr.mxu0 0.0
        %816 = vmatpush1.msra.mxu0 0.0
        %817 = vmatprep.subr.mxu0 0.0
        %818 = vmatpush1.msra.mxu0 0.0
        %819 = vmatprep.subr.mxu0 0.0
        %820 = vmatpush1.msra.mxu0 0.0
        %821 = vmatprep.subr.mxu0 0.0
        %822 = vmatpush1.msra.mxu0 0.0
        %823 = vmatprep.subr.mxu0 0.0
        %824 = vmatpush1.msra.mxu0 0.0
        %825 = vmatprep.subr.mxu0 0.0
        %826 = vmatpush1.msra.mxu0 0.0
        %827 = vmatprep.subr.mxu0 0.0
        %828 = vmatpush1.msra.mxu0 0.0
        %829 = vmatprep.subr.mxu0 0.0
        %830 = vmatpush1.msra.mxu0 0.0
        %831 = vmatprep.subr.mxu0 0.0
        %832 = vmatpush1.msra.mxu0 0.0
        %833 = vmatprep.subr.mxu0 0.0
        %834 = vmatpush1.msra.mxu0 0.0
        %835 = vmatprep.subr.mxu0 0.0
        %836 = vmatpush1.msra.mxu0 0.0
        %837 = vmatprep.subr.mxu0 0.0
        %838 = vmatpush1.msra.mxu0 0.0
        %839 = vmatprep.subr.mxu0 0.0
        %840 = vmatpush1.msra.mxu0 0.0
        %841 = vmatprep.subr.mxu0 0.0
        %842 = vmatpush1.msra.mxu0 0.0
        %843 = vmatprep.subr.mxu0 0.0
        %844 = vmatpush1.msra.mxu0 0.0
        %845 = vmatprep.mubr.f32.mxu0 0.0
        %846 = vmatmul.mubr.f32.gmra.mrb[0].mxu0 %v734
        %v847 = vpop.f32.mrb[0].mxu0
        %v848 = vadd.f32 %v655, %v847
        %v849 = vpop.f32.mrb[0].mxu0
        %850 = vmatprep.mubr.f32.mxu0 0.0
        %851 = vmatmul.mubr.f32.gmra.mrb[0].mxu0 %v737
        %v852 = vpop.f32.mrb[0].mxu0
        %v853 = vadd.f32 %v660, %v852
        %v854 = vpop.f32.mrb[0].mxu0
        %855 = vmatprep.mubr.f32.mxu0 0.0
        %856 = vmatmul.mubr.f32.gmra.mrb[0].mxu0 %v740
        %v857 = vpop.f32.mrb[0].mxu0
        %v858 = vadd.f32 %v665, %v857
        %v859 = vpop.f32.mrb[0].mxu0
        %860 = vmatprep.mubr.f32.mxu0 0.0
        %861 = vmatmul.mubr.f32.gmra.mrb[0].mxu0 %v743
        %v862 = vpop.f32.mrb[0].mxu0
        %v863 = vadd.f32 %v670, %v862
        %v864 = vpop.f32.mrb[0].mxu0
        %865 = vmatprep.mubr.f32.mxu0 0.0
        %866 = vmatmul.mubr.f32.gmra.mrb[0].mxu0 %v746
        %v867 = vpop.f32.mrb[0].mxu0
        %v868 = vadd.f32 %v675, %v867
        %v869 = vpop.f32.mrb[0].mxu0
        %870 = vmatprep.mubr.f32.mxu0 0.0
        %871 = vmatmul.mubr.f32.gmra.mrb[0].mxu0 %v749
        %v872 = vpop.f32.mrb[0].mxu0
        %v873 = vadd.f32 %v680, %v872
        %v874 = vpop.f32.mrb[0].mxu0
        %875 = vmatprep.mubr.f32.mxu0 0.0
        %876 = vmatmul.mubr.f32.gmra.mrb[0].mxu0 %v752
        %v877 = vpop.f32.mrb[0].mxu0
        %v878 = vadd.f32 %v685, %v877
        %v879 = vpop.f32.mrb[0].mxu0
        %880 = vmatprep.mubr.f32.mxu0 0.0
        %881 = vmatmul.mubr.f32.gmra.mrb[0].mxu0 %v755
        %v882 = vpop.f32.mrb[0].mxu0
        %v883 = vadd.f32 %v690, %v882
        %v884 = vpop.f32.mrb[0].mxu0
        %885 = vmatprep.mubr.f32.mxu0 0.0
        %886 = vmatmul.mubr.f32.gmra.mrb[0].mxu0 %v758
        %v887 = vpop.f32.mrb[0].mxu0
        %v888 = vadd.f32 %v695, %v887
        %v889 = vpop.f32.mrb[0].mxu0
        %890 = vmatprep.mubr.f32.mxu0 0.0
        %891 = vmatmul.mubr.f32.gmra.mrb[0].mxu0 %v761
        %v892 = vpop.f32.mrb[0].mxu0
        %v893 = vadd.f32 %v700, %v892
        %v894 = vpop.f32.mrb[0].mxu0
        %895 = vmatprep.mubr.f32.mxu0 0.0
        %896 = vmatmul.mubr.f32.gmra.mrb[0].mxu0 %v764
        %v897 = vpop.f32.mrb[0].mxu0
        %v898 = vadd.f32 %v705, %v897
        %v899 = vpop.f32.mrb[0].mxu0
        %900 = vmatprep.mubr.f32.mxu0 0.0
        %901 = vmatmul.mubr.f32.gmra.mrb[0].mxu0 %v767
        %v902 = vpop.f32.mrb[0].mxu0
        %v903 = vadd.f32 %v710, %v902
        %v904 = vpop.f32.mrb[0].mxu0
        %905 = vmatprep.mubr.f32.mxu0 0.0
        %906 = vmatmul.mubr.f32.gmra.mrb[0].mxu0 %v770
        %v907 = vpop.f32.mrb[0].mxu0
        %v908 = vadd.f32 %v715, %v907
        %v909 = vpop.f32.mrb[0].mxu0
        %910 = vmatprep.mubr.f32.mxu0 0.0
        %911 = vmatmul.mubr.f32.gmra.mrb[0].mxu0 %v773
        %v912 = vpop.f32.mrb[0].mxu0
        %v913 = vadd.f32 %v720, %v912
        %v914 = vpop.f32.mrb[0].mxu0
        %915 = vmatprep.mubr.f32.mxu0 0.0
        %916 = vmatmul.mubr.f32.gmra.mrb[0].mxu0 %v776
        %v917 = vpop.f32.mrb[0].mxu0
        %v918 = vadd.f32 %v725, %v917
        %v919 = vpop.f32.mrb[0].mxu0
        %920 = vmatprep.mubr.f32.mxu0 0.0
        %921 = vmatmul.mubr.f32.gmra.mrb[0].mxu0 %v779
        %v922 = vpop.f32.mrb[0].mxu0
        %v923 = vadd.f32 %v730, %v922
        %v924 = vpop.f32.mrb[0].mxu0
        %925 = vdwg.mxu0
        %v926 = vld [vmem:[#allocation2 + $0x2] sm:$0xff]
        %v927 = vld [vmem:[#allocation2 + $0xa] sm:$0xff]
        %v928 = vld [vmem:[#allocation2 + $0x1a] sm:$0xff]
        %v929 = vld [vmem:[#allocation2 + $0x22] sm:$0xff]
        %v930 = vld [vmem:[#allocation2 + $0x32] sm:$0xff]
        %v931 = vld [vmem:[#allocation2 + $0x3a] sm:$0xff]
        %v932 = vld [vmem:[#allocation2 + $0x4a] sm:$0xff]
        %v933 = vld [vmem:[#allocation2 + $0x52] sm:$0xff]
        %v934 = vld [vmem:[#allocation2 + $0x62] sm:$0xff]
        %v935 = vld [vmem:[#allocation2 + $0x6a] sm:$0xff]
        %v936 = vld [vmem:[#allocation2 + $0x7a] sm:$0xff]
        %v937 = vld [vmem:[#allocation2 + $0x82] sm:$0xff]
        %v938 = vld [vmem:[#allocation2 + $0x92] sm:$0xff]
        %v939 = vld [vmem:[#allocation2 + $0x9a] sm:$0xff]
        %v940 = vld [vmem:[#allocation2 + $0xaa] sm:$0xff]
        %v941 = vld [vmem:[#allocation2 + $0xb2] sm:$0xff]
        %s942 = scalar_lea.vmem %s1, 32
        %v943 = vld [vmem:[%s942] sm:$0xff]
        %v944 = vld [vmem:[%s942 + $0x8] sm:$0xff]
        %v946 = vsel %vm469, %v926, 0
        %v949 = vsel %vm469, %v927, 0
        %v952 = vsel %vm469, %v928, 0
        %v955 = vsel %vm469, %v929, 0
        %v958 = vsel %vm469, %v930, 0
        %v961 = vsel %vm469, %v931, 0
        %v964 = vsel %vm469, %v932, 0
        %v967 = vsel %vm469, %v933, 0
        %v970 = vsel %vm469, %v934, 0
        %v973 = vsel %vm469, %v935, 0
        %v976 = vsel %vm469, %v936, 0
        %v979 = vsel %vm469, %v937, 0
        %v982 = vsel %vm469, %v938, 0
        %v985 = vsel %vm469, %v939, 0
        %v988 = vsel %vm469, %v940, 0
        %v991 = vsel %vm469, %v941, 0
        %993 = vmatprep.subr.mxu0 0.0
        %994 = vmatpush1.msra.mxu0 %v943
        %995 = vmatprep.subr.mxu0 0.0
        %996 = vmatpush1.msra.mxu0 %v944
        %997 = vmatprep.subr.mxu0 0.0
        %998 = vmatpush1.msra.mxu0 0.0
        %999 = vmatprep.subr.mxu0 0.0
        %1000 = vmatpush1.msra.mxu0 0.0
        %1001 = vmatprep.subr.mxu0 0.0
        %1002 = vmatpush1.msra.mxu0 0.0
        %1003 = vmatprep.subr.mxu0 0.0
        %1004 = vmatpush1.msra.mxu0 0.0
        %1005 = vmatprep.subr.mxu0 0.0
        %1006 = vmatpush1.msra.mxu0 0.0
        %1007 = vmatprep.subr.mxu0 0.0
        %1008 = vmatpush1.msra.mxu0 0.0
        %1009 = vmatprep.subr.mxu0 0.0
        %1010 = vmatpush1.msra.mxu0 0.0
        %1011 = vmatprep.subr.mxu0 0.0
        %1012 = vmatpush1.msra.mxu0 0.0
        %1013 = vmatprep.subr.mxu0 0.0
        %1014 = vmatpush1.msra.mxu0 0.0
        %1015 = vmatprep.subr.mxu0 0.0
        %1016 = vmatpush1.msra.mxu0 0.0
        %1017 = vmatprep.subr.mxu0 0.0
        %1018 = vmatpush1.msra.mxu0 0.0
        %1019 = vmatprep.subr.mxu0 0.0
        %1020 = vmatpush1.msra.mxu0 0.0
        %1021 = vmatprep.subr.mxu0 0.0
        %1022 = vmatpush1.msra.mxu0 0.0
        %1023 = vmatprep.subr.mxu0 0.0
        %1024 = vmatpush1.msra.mxu0 0.0
        %1025 = vmatprep.subr.mxu0 0.0
        %1026 = vmatpush1.msra.mxu0 0.0
        %1027 = vmatprep.subr.mxu0 0.0
        %1028 = vmatpush1.msra.mxu0 0.0
        %1029 = vmatprep.subr.mxu0 0.0
        %1030 = vmatpush1.msra.mxu0 0.0
        %1031 = vmatprep.subr.mxu0 0.0
        %1032 = vmatpush1.msra.mxu0 0.0
        %1033 = vmatprep.subr.mxu0 0.0
        %1034 = vmatpush1.msra.mxu0 0.0
        %1035 = vmatprep.subr.mxu0 0.0
        %1036 = vmatpush1.msra.mxu0 0.0
        %1037 = vmatprep.subr.mxu0 0.0
        %1038 = vmatpush1.msra.mxu0 0.0
        %1039 = vmatprep.subr.mxu0 0.0
        %1040 = vmatpush1.msra.mxu0 0.0
        %1041 = vmatprep.subr.mxu0 0.0
        %1042 = vmatpush1.msra.mxu0 0.0
        %1043 = vmatprep.subr.mxu0 0.0
        %1044 = vmatpush1.msra.mxu0 0.0
        %1045 = vmatprep.subr.mxu0 0.0
        %1046 = vmatpush1.msra.mxu0 0.0
        %1047 = vmatprep.subr.mxu0 0.0
        %1048 = vmatpush1.msra.mxu0 0.0
        %1049 = vmatprep.subr.mxu0 0.0
        %1050 = vmatpush1.msra.mxu0 0.0
        %1051 = vmatprep.subr.mxu0 0.0
        %1052 = vmatpush1.msra.mxu0 0.0
        %1053 = vmatprep.subr.mxu0 0.0
        %1054 = vmatpush1.msra.mxu0 0.0
        %1055 = vmatprep.subr.mxu0 0.0
        %1056 = vmatpush1.msra.mxu0 0.0
        %1057 = vmatprep.mubr.f32.mxu0 0.0
        %1058 = vmatmul.mubr.f32.gmra.mrb[0].mxu0 %v946
        %v1059 = vpop.f32.mrb[0].mxu0
        %v1060 = vadd.f32 0.0, %v1059
        %v1061 = vpop.f32.mrb[0].mxu0
        %1062 = vmatprep.mubr.f32.mxu0 0.0
        %1063 = vmatmul.mubr.f32.gmra.mrb[0].mxu0 %v949
        %v1064 = vpop.f32.mrb[0].mxu0
        %v1065 = vadd.f32 0.0, %v1064
        %v1066 = vpop.f32.mrb[0].mxu0
        %1067 = vmatprep.mubr.f32.mxu0 0.0
        %1068 = vmatmul.mubr.f32.gmra.mrb[0].mxu0 %v952
        %v1069 = vpop.f32.mrb[0].mxu0
        %v1070 = vadd.f32 0.0, %v1069
        %v1071 = vpop.f32.mrb[0].mxu0
        %1072 = vmatprep.mubr.f32.mxu0 0.0
        %1073 = vmatmul.mubr.f32.gmra.mrb[0].mxu0 %v955
        %v1074 = vpop.f32.mrb[0].mxu0
        %v1075 = vadd.f32 0.0, %v1074
        %v1076 = vpop.f32.mrb[0].mxu0
        %1077 = vmatprep.mubr.f32.mxu0 0.0
        %1078 = vmatmul.mubr.f32.gmra.mrb[0].mxu0 %v958
        %v1079 = vpop.f32.mrb[0].mxu0
        %v1080 = vadd.f32 0.0, %v1079
        %v1081 = vpop.f32.mrb[0].mxu0
        %1082 = vmatprep.mubr.f32.mxu0 0.0
        %1083 = vmatmul.mubr.f32.gmra.mrb[0].mxu0 %v961
        %v1084 = vpop.f32.mrb[0].mxu0
        %v1085 = vadd.f32 0.0, %v1084
        %v1086 = vpop.f32.mrb[0].mxu0
        %1087 = vmatprep.mubr.f32.mxu0 0.0
        %1088 = vmatmul.mubr.f32.gmra.mrb[0].mxu0 %v964
        %v1089 = vpop.f32.mrb[0].mxu0
        %v1090 = vadd.f32 0.0, %v1089
        %v1091 = vpop.f32.mrb[0].mxu0
        %1092 = vmatprep.mubr.f32.mxu0 0.0
        %1093 = vmatmul.mubr.f32.gmra.mrb[0].mxu0 %v967
        %v1094 = vpop.f32.mrb[0].mxu0
        %v1095 = vadd.f32 0.0, %v1094
        %v1096 = vpop.f32.mrb[0].mxu0
        %1097 = vmatprep.mubr.f32.mxu0 0.0
        %1098 = vmatmul.mubr.f32.gmra.mrb[0].mxu0 %v970
        %v1099 = vpop.f32.mrb[0].mxu0
        %v1100 = vadd.f32 0.0, %v1099
        %v1101 = vpop.f32.mrb[0].mxu0
        %1102 = vmatprep.mubr.f32.mxu0 0.0
        %1103 = vmatmul.mubr.f32.gmra.mrb[0].mxu0 %v973
        %v1104 = vpop.f32.mrb[0].mxu0
        %v1105 = vadd.f32 0.0, %v1104
        %v1106 = vpop.f32.mrb[0].mxu0
        %1107 = vmatprep.mubr.f32.mxu0 0.0
        %1108 = vmatmul.mubr.f32.gmra.mrb[0].mxu0 %v976
        %v1109 = vpop.f32.mrb[0].mxu0
        %v1110 = vadd.f32 0.0, %v1109
        %v1111 = vpop.f32.mrb[0].mxu0
        %1112 = vmatprep.mubr.f32.mxu0 0.0
        %1113 = vmatmul.mubr.f32.gmra.mrb[0].mxu0 %v979
        %v1114 = vpop.f32.mrb[0].mxu0
        %v1115 = vadd.f32 0.0, %v1114
        %v1116 = vpop.f32.mrb[0].mxu0
        %1117 = vmatprep.mubr.f32.mxu0 0.0
        %1118 = vmatmul.mubr.f32.gmra.mrb[0].mxu0 %v982
        %v1119 = vpop.f32.mrb[0].mxu0
        %v1120 = vadd.f32 0.0, %v1119
        %v1121 = vpop.f32.mrb[0].mxu0
        %1122 = vmatprep.mubr.f32.mxu0 0.0
        %1123 = vmatmul.mubr.f32.gmra.mrb[0].mxu0 %v985
        %v1124 = vpop.f32.mrb[0].mxu0
        %v1125 = vadd.f32 0.0, %v1124
        %v1126 = vpop.f32.mrb[0].mxu0
        %1127 = vmatprep.mubr.f32.mxu0 0.0
        %1128 = vmatmul.mubr.f32.gmra.mrb[0].mxu0 %v988
        %v1129 = vpop.f32.mrb[0].mxu0
        %v1130 = vadd.f32 0.0, %v1129
        %v1131 = vpop.f32.mrb[0].mxu0
        %1132 = vmatprep.mubr.f32.mxu0 0.0
        %1133 = vmatmul.mubr.f32.gmra.mrb[0].mxu0 %v991
        %v1134 = vpop.f32.mrb[0].mxu0
        %v1135 = vadd.f32 0.0, %v1134
        %v1136 = vpop.f32.mrb[0].mxu0
        %1137 = vdwg.mxu0
        %v1138 = vadd.f32 %v848, %v1060
        %v1139 = vadd.f32 %v853, %v1065
        %v1140 = vadd.f32 %v858, %v1070
        %v1141 = vadd.f32 %v863, %v1075
        %v1142 = vadd.f32 %v868, %v1080
        %v1143 = vadd.f32 %v873, %v1085
        %v1144 = vadd.f32 %v878, %v1090
        %v1145 = vadd.f32 %v883, %v1095
        %v1146 = vadd.f32 %v888, %v1100
        %v1147 = vadd.f32 %v893, %v1105
        %v1148 = vadd.f32 %v898, %v1110
        %v1149 = vadd.f32 %v903, %v1115
        %v1150 = vadd.f32 %v908, %v1120
        %v1151 = vadd.f32 %v913, %v1125
        %v1152 = vadd.f32 %v918, %v1130
        %v1153 = vadd.f32 %v923, %v1135
        %v1154 = vld [vmem:[#allocation2 + $0x3] sm:$0xff]
        %v1155 = vld [vmem:[#allocation2 + $0xb] sm:$0xff]
        %v1156 = vld [vmem:[#allocation2 + $0x1b] sm:$0xff]
        %v1157 = vld [vmem:[#allocation2 + $0x23] sm:$0xff]
        %v1158 = vld [vmem:[#allocation2 + $0x33] sm:$0xff]
        %v1159 = vld [vmem:[#allocation2 + $0x3b] sm:$0xff]
        %v1160 = vld [vmem:[#allocation2 + $0x4b] sm:$0xff]
        %v1161 = vld [vmem:[#allocation2 + $0x53] sm:$0xff]
        %v1162 = vld [vmem:[#allocation2 + $0x63] sm:$0xff]
        %v1163 = vld [vmem:[#allocation2 + $0x6b] sm:$0xff]
        %v1164 = vld [vmem:[#allocation2 + $0x7b] sm:$0xff]
        %v1165 = vld [vmem:[#allocation2 + $0x83] sm:$0xff]
        %v1166 = vld [vmem:[#allocation2 + $0x93] sm:$0xff]
        %v1167 = vld [vmem:[#allocation2 + $0x9b] sm:$0xff]
        %v1168 = vld [vmem:[#allocation2 + $0xab] sm:$0xff]
        %v1169 = vld [vmem:[#allocation2 + $0xb3] sm:$0xff]
        %s1170 = scalar_lea.vmem %s1, 48
        %v1171 = vld [vmem:[%s1170] sm:$0xff]
        %v1172 = vld [vmem:[%s1170 + $0x8] sm:$0xff]
        %v1174 = vsel %vm469, %v1154, 0
        %v1177 = vsel %vm469, %v1155, 0
        %v1180 = vsel %vm469, %v1156, 0
        %v1183 = vsel %vm469, %v1157, 0
        %v1186 = vsel %vm469, %v1158, 0
        %v1189 = vsel %vm469, %v1159, 0
        %v1192 = vsel %vm469, %v1160, 0
        %v1195 = vsel %vm469, %v1161, 0
        %v1198 = vsel %vm469, %v1162, 0
        %v1201 = vsel %vm469, %v1163, 0
        %v1204 = vsel %vm469, %v1164, 0
        %v1207 = vsel %vm469, %v1165, 0
        %v1210 = vsel %vm469, %v1166, 0
        %v1213 = vsel %vm469, %v1167, 0
        %v1216 = vsel %vm469, %v1168, 0
        %v1219 = vsel %vm469, %v1169, 0
        %1221 = vmatprep.subr.mxu0 0.0
        %1222 = vmatpush1.msra.mxu0 %v1171
        %1223 = vmatprep.subr.mxu0 0.0
        %1224 = vmatpush1.msra.mxu0 %v1172
        %1225 = vmatprep.subr.mxu0 0.0
        %1226 = vmatpush1.msra.mxu0 0.0
        %1227 = vmatprep.subr.mxu0 0.0
        %1228 = vmatpush1.msra.mxu0 0.0
        %1229 = vmatprep.subr.mxu0 0.0
        %1230 = vmatpush1.msra.mxu0 0.0
        %1231 = vmatprep.subr.mxu0 0.0
        %1232 = vmatpush1.msra.mxu0 0.0
        %1233 = vmatprep.subr.mxu0 0.0
        %1234 = vmatpush1.msra.mxu0 0.0
        %1235 = vmatprep.subr.mxu0 0.0
        %1236 = vmatpush1.msra.mxu0 0.0
        %1237 = vmatprep.subr.mxu0 0.0
        %1238 = vmatpush1.msra.mxu0 0.0
        %1239 = vmatprep.subr.mxu0 0.0
        %1240 = vmatpush1.msra.mxu0 0.0
        %1241 = vmatprep.subr.mxu0 0.0
        %1242 = vmatpush1.msra.mxu0 0.0
        %1243 = vmatprep.subr.mxu0 0.0
        %1244 = vmatpush1.msra.mxu0 0.0
        %1245 = vmatprep.subr.mxu0 0.0
        %1246 = vmatpush1.msra.mxu0 0.0
        %1247 = vmatprep.subr.mxu0 0.0
        %1248 = vmatpush1.msra.mxu0 0.0
        %1249 = vmatprep.subr.mxu0 0.0
        %1250 = vmatpush1.msra.mxu0 0.0
        %1251 = vmatprep.subr.mxu0 0.0
        %1252 = vmatpush1.msra.mxu0 0.0
        %1253 = vmatprep.subr.mxu0 0.0
        %1254 = vmatpush1.msra.mxu0 0.0
        %1255 = vmatprep.subr.mxu0 0.0
        %1256 = vmatpush1.msra.mxu0 0.0
        %1257 = vmatprep.subr.mxu0 0.0
        %1258 = vmatpush1.msra.mxu0 0.0
        %1259 = vmatprep.subr.mxu0 0.0
        %1260 = vmatpush1.msra.mxu0 0.0
        %1261 = vmatprep.subr.mxu0 0.0
        %1262 = vmatpush1.msra.mxu0 0.0
        %1263 = vmatprep.subr.mxu0 0.0
        %1264 = vmatpush1.msra.mxu0 0.0
        %1265 = vmatprep.subr.mxu0 0.0
        %1266 = vmatpush1.msra.mxu0 0.0
        %1267 = vmatprep.subr.mxu0 0.0
        %1268 = vmatpush1.msra.mxu0 0.0
        %1269 = vmatprep.subr.mxu0 0.0
        %1270 = vmatpush1.msra.mxu0 0.0
        %1271 = vmatprep.subr.mxu0 0.0
        %1272 = vmatpush1.msra.mxu0 0.0
        %1273 = vmatprep.subr.mxu0 0.0
        %1274 = vmatpush1.msra.mxu0 0.0
        %1275 = vmatprep.subr.mxu0 0.0
        %1276 = vmatpush1.msra.mxu0 0.0
        %1277 = vmatprep.subr.mxu0 0.0
        %1278 = vmatpush1.msra.mxu0 0.0
        %1279 = vmatprep.subr.mxu0 0.0
        %1280 = vmatpush1.msra.mxu0 0.0
        %1281 = vmatprep.subr.mxu0 0.0
        %1282 = vmatpush1.msra.mxu0 0.0
        %1283 = vmatprep.subr.mxu0 0.0
        %1284 = vmatpush1.msra.mxu0 0.0
        %1285 = vmatprep.mubr.f32.mxu0 0.0
        %1286 = vmatmul.mubr.f32.gmra.mrb[0].mxu0 %v1174
        %v1287 = vpop.f32.mrb[0].mxu0
        %v1288 = vadd.f32 0.0, %v1287
        %v1289 = vpop.f32.mrb[0].mxu0
        %1290 = vmatprep.mubr.f32.mxu0 0.0
        %1291 = vmatmul.mubr.f32.gmra.mrb[0].mxu0 %v1177
        %v1292 = vpop.f32.mrb[0].mxu0
        %v1293 = vadd.f32 0.0, %v1292
        %v1294 = vpop.f32.mrb[0].mxu0
        %1295 = vmatprep.mubr.f32.mxu0 0.0
        %1296 = vmatmul.mubr.f32.gmra.mrb[0].mxu0 %v1180
        %v1297 = vpop.f32.mrb[0].mxu0
        %v1298 = vadd.f32 0.0, %v1297
        %v1299 = vpop.f32.mrb[0].mxu0
        %1300 = vmatprep.mubr.f32.mxu0 0.0
        %1301 = vmatmul.mubr.f32.gmra.mrb[0].mxu0 %v1183
        %v1302 = vpop.f32.mrb[0].mxu0
        %v1303 = vadd.f32 0.0, %v1302
        %v1304 = vpop.f32.mrb[0].mxu0
        %1305 = vmatprep.mubr.f32.mxu0 0.0
        %1306 = vmatmul.mubr.f32.gmra.mrb[0].mxu0 %v1186
        %v1307 = vpop.f32.mrb[0].mxu0
        %v1308 = vadd.f32 0.0, %v1307
        %v1309 = vpop.f32.mrb[0].mxu0
        %1310 = vmatprep.mubr.f32.mxu0 0.0
        %1311 = vmatmul.mubr.f32.gmra.mrb[0].mxu0 %v1189
        %v1312 = vpop.f32.mrb[0].mxu0
        %v1313 = vadd.f32 0.0, %v1312
        %v1314 = vpop.f32.mrb[0].mxu0
        %1315 = vmatprep.mubr.f32.mxu0 0.0
        %1316 = vmatmul.mubr.f32.gmra.mrb[0].mxu0 %v1192
        %v1317 = vpop.f32.mrb[0].mxu0
        %v1318 = vadd.f32 0.0, %v1317
        %v1319 = vpop.f32.mrb[0].mxu0
        %1320 = vmatprep.mubr.f32.mxu0 0.0
        %1321 = vmatmul.mubr.f32.gmra.mrb[0].mxu0 %v1195
        %v1322 = vpop.f32.mrb[0].mxu0
        %v1323 = vadd.f32 0.0, %v1322
        %v1324 = vpop.f32.mrb[0].mxu0
        %1325 = vmatprep.mubr.f32.mxu0 0.0
        %1326 = vmatmul.mubr.f32.gmra.mrb[0].mxu0 %v1198
        %v1327 = vpop.f32.mrb[0].mxu0
        %v1328 = vadd.f32 0.0, %v1327
        %v1329 = vpop.f32.mrb[0].mxu0
        %1330 = vmatprep.mubr.f32.mxu0 0.0
        %1331 = vmatmul.mubr.f32.gmra.mrb[0].mxu0 %v1201
        %v1332 = vpop.f32.mrb[0].mxu0
        %v1333 = vadd.f32 0.0, %v1332
        %v1334 = vpop.f32.mrb[0].mxu0
        %1335 = vmatprep.mubr.f32.mxu0 0.0
        %1336 = vmatmul.mubr.f32.gmra.mrb[0].mxu0 %v1204
        %v1337 = vpop.f32.mrb[0].mxu0
        %v1338 = vadd.f32 0.0, %v1337
        %v1339 = vpop.f32.mrb[0].mxu0
        %1340 = vmatprep.mubr.f32.mxu0 0.0
        %1341 = vmatmul.mubr.f32.gmra.mrb[0].mxu0 %v1207
        %v1342 = vpop.f32.mrb[0].mxu0
        %v1343 = vadd.f32 0.0, %v1342
        %v1344 = vpop.f32.mrb[0].mxu0
        %1345 = vmatprep.mubr.f32.mxu0 0.0
        %1346 = vmatmul.mubr.f32.gmra.mrb[0].mxu0 %v1210
        %v1347 = vpop.f32.mrb[0].mxu0
        %v1348 = vadd.f32 0.0, %v1347
        %v1349 = vpop.f32.mrb[0].mxu0
        %1350 = vmatprep.mubr.f32.mxu0 0.0
        %1351 = vmatmul.mubr.f32.gmra.mrb[0].mxu0 %v1213
        %v1352 = vpop.f32.mrb[0].mxu0
        %v1353 = vadd.f32 0.0, %v1352
        %v1354 = vpop.f32.mrb[0].mxu0
        %1355 = vmatprep.mubr.f32.mxu0 0.0
        %1356 = vmatmul.mubr.f32.gmra.mrb[0].mxu0 %v1216
        %v1357 = vpop.f32.mrb[0].mxu0
        %v1358 = vadd.f32 0.0, %v1357
        %v1359 = vpop.f32.mrb[0].mxu0
        %1360 = vmatprep.mubr.f32.mxu0 0.0
        %1361 = vmatmul.mubr.f32.gmra.mrb[0].mxu0 %v1219
        %v1362 = vpop.f32.mrb[0].mxu0
        %v1363 = vadd.f32 0.0, %v1362
        %v1364 = vpop.f32.mrb[0].mxu0
        %1365 = vdwg.mxu0
        %v1366 = vadd.f32 %v1138, %v1288
        %v1367 = vadd.f32 %v1139, %v1293
        %v1368 = vadd.f32 %v1140, %v1298
        %v1369 = vadd.f32 %v1141, %v1303
        %v1370 = vadd.f32 %v1142, %v1308
        %v1371 = vadd.f32 %v1143, %v1313
        %v1372 = vadd.f32 %v1144, %v1318
        %v1373 = vadd.f32 %v1145, %v1323
        %v1374 = vadd.f32 %v1146, %v1328
        %v1375 = vadd.f32 %v1147, %v1333
        %v1376 = vadd.f32 %v1148, %v1338
        %v1377 = vadd.f32 %v1149, %v1343
        %v1378 = vadd.f32 %v1150, %v1348
        %v1379 = vadd.f32 %v1151, %v1353
        %v1380 = vadd.f32 %v1152, %v1358
        %v1381 = vadd.f32 %v1153, %v1363
        %v1382 = vld [vmem:[#allocation2 + $0x4] sm:$0xff]
        %v1383 = vld [vmem:[#allocation2 + $0xc] sm:$0xff]
        %v1384 = vld [vmem:[#allocation2 + $0x1c] sm:$0xff]
        %v1385 = vld [vmem:[#allocation2 + $0x24] sm:$0xff]
        %v1386 = vld [vmem:[#allocation2 + $0x34] sm:$0xff]
        %v1387 = vld [vmem:[#allocation2 + $0x3c] sm:$0xff]
        %v1388 = vld [vmem:[#allocation2 + $0x4c] sm:$0xff]
        %v1389 = vld [vmem:[#allocation2 + $0x54] sm:$0xff]
        %v1390 = vld [vmem:[#allocation2 + $0x64] sm:$0xff]
        %v1391 = vld [vmem:[#allocation2 + $0x6c] sm:$0xff]
        %v1392 = vld [vmem:[#allocation2 + $0x7c] sm:$0xff]
        %v1393 = vld [vmem:[#allocation2 + $0x84] sm:$0xff]
        %v1394 = vld [vmem:[#allocation2 + $0x94] sm:$0xff]
        %v1395 = vld [vmem:[#allocation2 + $0x9c] sm:$0xff]
        %v1396 = vld [vmem:[#allocation2 + $0xac] sm:$0xff]
        %v1397 = vld [vmem:[#allocation2 + $0xb4] sm:$0xff]
        %s1398 = scalar_lea.vmem %s1, 64
        %v1399 = vld [vmem:[%s1398] sm:$0xff]
        %v1400 = vld [vmem:[%s1398 + $0x8] sm:$0xff]
        %v1402 = vsel %vm469, %v1382, 0
        %v1405 = vsel %vm469, %v1383, 0
        %v1408 = vsel %vm469, %v1384, 0
        %v1411 = vsel %vm469, %v1385, 0
        %v1414 = vsel %vm469, %v1386, 0
        %v1417 = vsel %vm469, %v1387, 0
        %v1420 = vsel %vm469, %v1388, 0
        %v1423 = vsel %vm469, %v1389, 0
        %v1426 = vsel %vm469, %v1390, 0
        %v1429 = vsel %vm469, %v1391, 0
        %v1432 = vsel %vm469, %v1392, 0
        %v1435 = vsel %vm469, %v1393, 0
        %v1438 = vsel %vm469, %v1394, 0
        %v1441 = vsel %vm469, %v1395, 0
        %v1444 = vsel %vm469, %v1396, 0
        %v1447 = vsel %vm469, %v1397, 0
        %1449 = vmatprep.subr.mxu0 0.0
        %1450 = vmatpush1.msra.mxu0 %v1399
        %1451 = vmatprep.subr.mxu0 0.0
        %1452 = vmatpush1.msra.mxu0 %v1400
        %1453 = vmatprep.subr.mxu0 0.0
        %1454 = vmatpush1.msra.mxu0 0.0
        %1455 = vmatprep.subr.mxu0 0.0
        %1456 = vmatpush1.msra.mxu0 0.0
        %1457 = vmatprep.subr.mxu0 0.0
        %1458 = vmatpush1.msra.mxu0 0.0
        %1459 = vmatprep.subr.mxu0 0.0
        %1460 = vmatpush1.msra.mxu0 0.0
        %1461 = vmatprep.subr.mxu0 0.0
        %1462 = vmatpush1.msra.mxu0 0.0
        %1463 = vmatprep.subr.mxu0 0.0
        %1464 = vmatpush1.msra.mxu0 0.0
        %1465 = vmatprep.subr.mxu0 0.0
        %1466 = vmatpush1.msra.mxu0 0.0
        %1467 = vmatprep.subr.mxu0 0.0
        %1468 = vmatpush1.msra.mxu0 0.0
        %1469 = vmatprep.subr.mxu0 0.0
        %1470 = vmatpush1.msra.mxu0 0.0
        %1471 = vmatprep.subr.mxu0 0.0
        %1472 = vmatpush1.msra.mxu0 0.0
        %1473 = vmatprep.subr.mxu0 0.0
        %1474 = vmatpush1.msra.mxu0 0.0
        %1475 = vmatprep.subr.mxu0 0.0
        %1476 = vmatpush1.msra.mxu0 0.0
        %1477 = vmatprep.subr.mxu0 0.0
        %1478 = vmatpush1.msra.mxu0 0.0
        %1479 = vmatprep.subr.mxu0 0.0
        %1480 = vmatpush1.msra.mxu0 0.0
        %1481 = vmatprep.subr.mxu0 0.0
        %1482 = vmatpush1.msra.mxu0 0.0
        %1483 = vmatprep.subr.mxu0 0.0
        %1484 = vmatpush1.msra.mxu0 0.0
        %1485 = vmatprep.subr.mxu0 0.0
        %1486 = vmatpush1.msra.mxu0 0.0
        %1487 = vmatprep.subr.mxu0 0.0
        %1488 = vmatpush1.msra.mxu0 0.0
        %1489 = vmatprep.subr.mxu0 0.0
        %1490 = vmatpush1.msra.mxu0 0.0
        %1491 = vmatprep.subr.mxu0 0.0
        %1492 = vmatpush1.msra.mxu0 0.0
        %1493 = vmatprep.subr.mxu0 0.0
        %1494 = vmatpush1.msra.mxu0 0.0
        %1495 = vmatprep.subr.mxu0 0.0
        %1496 = vmatpush1.msra.mxu0 0.0
        %1497 = vmatprep.subr.mxu0 0.0
        %1498 = vmatpush1.msra.mxu0 0.0
        %1499 = vmatprep.subr.mxu0 0.0
        %1500 = vmatpush1.msra.mxu0 0.0
        %1501 = vmatprep.subr.mxu0 0.0
        %1502 = vmatpush1.msra.mxu0 0.0
        %1503 = vmatprep.subr.mxu0 0.0
        %1504 = vmatpush1.msra.mxu0 0.0
        %1505 = vmatprep.subr.mxu0 0.0
        %1506 = vmatpush1.msra.mxu0 0.0
        %1507 = vmatprep.subr.mxu0 0.0
        %1508 = vmatpush1.msra.mxu0 0.0
        %1509 = vmatprep.subr.mxu0 0.0
        %1510 = vmatpush1.msra.mxu0 0.0
        %1511 = vmatprep.subr.mxu0 0.0
        %1512 = vmatpush1.msra.mxu0 0.0
        %1513 = vmatprep.mubr.f32.mxu0 0.0
        %1514 = vmatmul.mubr.f32.gmra.mrb[0].mxu0 %v1402
        %v1515 = vpop.f32.mrb[0].mxu0
        %v1516 = vadd.f32 0.0, %v1515
        %v1517 = vpop.f32.mrb[0].mxu0
        %1518 = vmatprep.mubr.f32.mxu0 0.0
        %1519 = vmatmul.mubr.f32.gmra.mrb[0].mxu0 %v1405
        %v1520 = vpop.f32.mrb[0].mxu0
        %v1521 = vadd.f32 0.0, %v1520
        %v1522 = vpop.f32.mrb[0].mxu0
        %1523 = vmatprep.mubr.f32.mxu0 0.0
        %1524 = vmatmul.mubr.f32.gmra.mrb[0].mxu0 %v1408
        %v1525 = vpop.f32.mrb[0].mxu0
        %v1526 = vadd.f32 0.0, %v1525
        %v1527 = vpop.f32.mrb[0].mxu0
        %1528 = vmatprep.mubr.f32.mxu0 0.0
        %1529 = vmatmul.mubr.f32.gmra.mrb[0].mxu0 %v1411
        %v1530 = vpop.f32.mrb[0].mxu0
        %v1531 = vadd.f32 0.0, %v1530
        %v1532 = vpop.f32.mrb[0].mxu0
        %1533 = vmatprep.mubr.f32.mxu0 0.0
        %1534 = vmatmul.mubr.f32.gmra.mrb[0].mxu0 %v1414
        %v1535 = vpop.f32.mrb[0].mxu0
        %v1536 = vadd.f32 0.0, %v1535
        %v1537 = vpop.f32.mrb[0].mxu0
        %1538 = vmatprep.mubr.f32.mxu0 0.0
        %1539 = vmatmul.mubr.f32.gmra.mrb[0].mxu0 %v1417
        %v1540 = vpop.f32.mrb[0].mxu0
        %v1541 = vadd.f32 0.0, %v1540
        %v1542 = vpop.f32.mrb[0].mxu0
        %1543 = vmatprep.mubr.f32.mxu0 0.0
        %1544 = vmatmul.mubr.f32.gmra.mrb[0].mxu0 %v1420
        %v1545 = vpop.f32.mrb[0].mxu0
        %v1546 = vadd.f32 0.0, %v1545
        %v1547 = vpop.f32.mrb[0].mxu0
        %1548 = vmatprep.mubr.f32.mxu0 0.0
        %1549 = vmatmul.mubr.f32.gmra.mrb[0].mxu0 %v1423
        %v1550 = vpop.f32.mrb[0].mxu0
        %v1551 = vadd.f32 0.0, %v1550
        %v1552 = vpop.f32.mrb[0].mxu0
        %1553 = vmatprep.mubr.f32.mxu0 0.0
        %1554 = vmatmul.mubr.f32.gmra.mrb[0].mxu0 %v1426
        %v1555 = vpop.f32.mrb[0].mxu0
        %v1556 = vadd.f32 0.0, %v1555
        %v1557 = vpop.f32.mrb[0].mxu0
        %1558 = vmatprep.mubr.f32.mxu0 0.0
        %1559 = vmatmul.mubr.f32.gmra.mrb[0].mxu0 %v1429
        %v1560 = vpop.f32.mrb[0].mxu0
        %v1561 = vadd.f32 0.0, %v1560
        %v1562 = vpop.f32.mrb[0].mxu0
        %1563 = vmatprep.mubr.f32.mxu0 0.0
        %1564 = vmatmul.mubr.f32.gmra.mrb[0].mxu0 %v1432
        %v1565 = vpop.f32.mrb[0].mxu0
        %v1566 = vadd.f32 0.0, %v1565
        %v1567 = vpop.f32.mrb[0].mxu0
        %1568 = vmatprep.mubr.f32.mxu0 0.0
        %1569 = vmatmul.mubr.f32.gmra.mrb[0].mxu0 %v1435
        %v1570 = vpop.f32.mrb[0].mxu0
        %v1571 = vadd.f32 0.0, %v1570
        %v1572 = vpop.f32.mrb[0].mxu0
        %1573 = vmatprep.mubr.f32.mxu0 0.0
        %1574 = vmatmul.mubr.f32.gmra.mrb[0].mxu0 %v1438
        %v1575 = vpop.f32.mrb[0].mxu0
        %v1576 = vadd.f32 0.0, %v1575
        %v1577 = vpop.f32.mrb[0].mxu0
        %1578 = vmatprep.mubr.f32.mxu0 0.0
        %1579 = vmatmul.mubr.f32.gmra.mrb[0].mxu0 %v1441
        %v1580 = vpop.f32.mrb[0].mxu0
        %v1581 = vadd.f32 0.0, %v1580
        %v1582 = vpop.f32.mrb[0].mxu0
        %1583 = vmatprep.mubr.f32.mxu0 0.0
        %1584 = vmatmul.mubr.f32.gmra.mrb[0].mxu0 %v1444
        %v1585 = vpop.f32.mrb[0].mxu0
        %v1586 = vadd.f32 0.0, %v1585
        %v1587 = vpop.f32.mrb[0].mxu0
        %1588 = vmatprep.mubr.f32.mxu0 0.0
        %1589 = vmatmul.mubr.f32.gmra.mrb[0].mxu0 %v1447
        %v1590 = vpop.f32.mrb[0].mxu0
        %v1591 = vadd.f32 0.0, %v1590
        %v1592 = vpop.f32.mrb[0].mxu0
        %1593 = vdwg.mxu0
        %v1594 = vadd.f32 %v1366, %v1516
        %v1595 = vadd.f32 %v1367, %v1521
        %v1596 = vadd.f32 %v1368, %v1526
        %v1597 = vadd.f32 %v1369, %v1531
        %v1598 = vadd.f32 %v1370, %v1536
        %v1599 = vadd.f32 %v1371, %v1541
        %v1600 = vadd.f32 %v1372, %v1546
        %v1601 = vadd.f32 %v1373, %v1551
        %v1602 = vadd.f32 %v1374, %v1556
        %v1603 = vadd.f32 %v1375, %v1561
        %v1604 = vadd.f32 %v1376, %v1566
        %v1605 = vadd.f32 %v1377, %v1571
        %v1606 = vadd.f32 %v1378, %v1576
        %v1607 = vadd.f32 %v1379, %v1581
        %v1608 = vadd.f32 %v1380, %v1586
        %v1609 = vadd.f32 %v1381, %v1591
        %1610 = vst [vmem:[#allocation3] sm:$0xff] %v1594
        %1611 = vst [vmem:[#allocation3 + $0x8] sm:$0xff] %v1595
        %1612 = vst [vmem:[#allocation3 + $0x10] sm:$0xff] %v1596
        %1613 = vst [vmem:[#allocation3 + $0x18] sm:$0xff] %v1597
        %1614 = vst [vmem:[#allocation3 + $0x20] sm:$0xff] %v1598
        %1615 = vst [vmem:[#allocation3 + $0x28] sm:$0xff] %v1599
        %1616 = vst [vmem:[#allocation3 + $0x30] sm:$0xff] %v1600
        %1617 = vst [vmem:[#allocation3 + $0x38] sm:$0xff] %v1601
        %1618 = vst [vmem:[#allocation3 + $0x40] sm:$0xff] %v1602
        %1619 = vst [vmem:[#allocation3 + $0x48] sm:$0xff] %v1603
        %1620 = vst [vmem:[#allocation3 + $0x50] sm:$0xff] %v1604
        %1621 = vst [vmem:[#allocation3 + $0x58] sm:$0xff] %v1605
        %1622 = vst [vmem:[#allocation3 + $0x60] sm:$0xff] %v1606
        %1623 = vst [vmem:[#allocation3 + $0x68] sm:$0xff] %v1607
        %1624 = vst [vmem:[#allocation3 + $0x70] sm:$0xff] %v1608
        %1625 = vst [vmem:[#allocation3 + $0x78] sm:$0xff] %v1609
        %v1626 = vld [vmem:[#allocation3] ss:$2 sm:$0xff]
        %s1627 = scalar_lea.vmem [#allocation3], 16
        %v1628 = vld [vmem:[%s1627] ss:$2 sm:$0xff]
        %s1629 = scalar_lea.vmem [#allocation3], 32
        %v1630 = vld [vmem:[%s1629] ss:$2 sm:$0xff]
        %s1631 = scalar_lea.vmem [#allocation3], 48
        %v1632 = vld [vmem:[%s1631] ss:$2 sm:$0xff]
        %s1633 = scalar_lea.vmem [#allocation3], 64
        %v1634 = vld [vmem:[%s1633] ss:$2 sm:$0xff]
        %s1635 = scalar_lea.vmem [#allocation3], 80
        %v1636 = vld [vmem:[%s1635] ss:$2 sm:$0xff]
        %s1637 = scalar_lea.vmem [#allocation3], 96
        %v1638 = vld [vmem:[%s1637] ss:$2 sm:$0xff]
        %s1639 = scalar_lea.vmem [#allocation3], 112
        %v1640 = vld [vmem:[%s1639] ss:$2 sm:$0xff]
        %s1641 = scalar_lea.vmem [#allocation3], 1
        %v1642 = vld [vmem:[%s1641] ss:$2 sm:$0xff]
        %s1643 = scalar_lea.vmem [#allocation3], 17
        %v1644 = vld [vmem:[%s1643] ss:$2 sm:$0xff]
        %s1645 = scalar_lea.vmem [#allocation3], 33
        %v1646 = vld [vmem:[%s1645] ss:$2 sm:$0xff]
        %s1647 = scalar_lea.vmem [#allocation3], 49
        %v1648 = vld [vmem:[%s1647] ss:$2 sm:$0xff]
        %s1649 = scalar_lea.vmem [#allocation3], 65
        %v1650 = vld [vmem:[%s1649] ss:$2 sm:$0xff]
        %s1651 = scalar_lea.vmem [#allocation3], 81
        %v1652 = vld [vmem:[%s1651] ss:$2 sm:$0xff]
        %s1653 = scalar_lea.vmem [#allocation3], 97
        %v1654 = vld [vmem:[%s1653] ss:$2 sm:$0xff]
        %s1655 = scalar_lea.vmem [#allocation3], 113
        %v1656 = vld [vmem:[%s1655] ss:$2 sm:$0xff]
        %v1657 = vmax.f32 %v1626, %v1642
        %v1658 = vmax.f32 %v1628, %v1644
        %v1659 = vmax.f32 %v1630, %v1646
        %v1660 = vmax.f32 %v1632, %v1648
        %v1661 = vmax.f32 %v1634, %v1650
        %v1662 = vmax.f32 %v1636, %v1652
        %v1663 = vmax.f32 %v1638, %v1654
        %v1664 = vmax.f32 %v1640, %v1656
        %1673 = vrot.lane.b32.xlu0 %v1657, 64
        %v1674 = vpop.permute.xlu0 %1673
        %1675 = vrot.lane.b32.xlu0 %v1658, 64
        %v1676 = vpop.permute.xlu0 %1675
        %1677 = vrot.lane.b32.xlu0 %v1659, 64
        %v1678 = vpop.permute.xlu0 %1677
        %1679 = vrot.lane.b32.xlu0 %v1660, 64
        %v1680 = vpop.permute.xlu0 %1679
        %1681 = vrot.lane.b32.xlu0 %v1661, 64
        %v1682 = vpop.permute.xlu0 %1681
        %1683 = vrot.lane.b32.xlu0 %v1662, 64
        %v1684 = vpop.permute.xlu0 %1683
        %1685 = vrot.lane.b32.xlu0 %v1663, 64
        %v1686 = vpop.permute.xlu0 %1685
        %1687 = vrot.lane.b32.xlu0 %v1664, 64
        %v1688 = vpop.permute.xlu0 %1687
        %v1697 = vmax.f32 %v1657, %v1674
        %v1698 = vmax.f32 %v1658, %v1676
        %v1699 = vmax.f32 %v1659, %v1678
        %v1700 = vmax.f32 %v1660, %v1680
        %v1701 = vmax.f32 %v1661, %v1682
        %v1702 = vmax.f32 %v1662, %v1684
        %v1703 = vmax.f32 %v1663, %v1686
        %v1704 = vmax.f32 %v1664, %v1688
        %v1705 = vld [vmem:[%s2] sm:$0x1]
        %v1707 = vlaneseq
        %v1708 = vshrl.u32 %v1707, 7
        %v1709 = vsub.s32 0, %v1708
        %v1710 = vrot.slane %v1705, %v1709
        %v1712 = vadd.f32 %v1697, %v1710
        %v1713 = vadd.f32 %v1698, %v1710
        %v1714 = vadd.f32 %v1699, %v1710
        %v1715 = vadd.f32 %v1700, %v1710
        %v1716 = vadd.f32 %v1701, %v1710
        %v1717 = vadd.f32 %v1702, %v1710
        %v1718 = vadd.f32 %v1703, %v1710
        %v1719 = vadd.f32 %v1704, %v1710
        %vm1720 = vcmask 523264
        %1721 = vst.msk [vmem:[#allocation4 + $0x2] sm:$0xff] %vm1720, %v1712
        %1722 = vst.msk [vmem:[#allocation4 + $0x12] sm:$0xff] %vm1720, %v1713
        %1723 = vst.msk [vmem:[#allocation4 + $0x22] sm:$0xff] %vm1720, %v1714
        %1724 = vst.msk [vmem:[#allocation4 + $0x32] sm:$0xff] %vm1720, %v1715
        %1725 = vst.msk [vmem:[#allocation4 + $0x42] sm:$0xff] %vm1720, %v1716
        %1726 = vst.msk [vmem:[#allocation4 + $0x52] sm:$0xff] %vm1720, %v1717
        %1727 = vst.msk [vmem:[#allocation4 + $0x62] sm:$0xff] %vm1720, %v1718
        %1728 = vst.msk [vmem:[#allocation4 + $0x72] sm:$0xff] %vm1720, %v1719
        %v1729 = vld [vmem:[#allocation4] sm:$0xff]
        %v1730 = vld [vmem:[#allocation4 + $0x10] sm:$0xff]
        %v1731 = vld [vmem:[#allocation4 + $0x20] sm:$0xff]
        %v1732 = vld [vmem:[#allocation4 + $0x30] sm:$0xff]
        %v1733 = vld [vmem:[#allocation4 + $0x40] sm:$0xff]
        %v1734 = vld [vmem:[#allocation4 + $0x50] sm:$0xff]
        %v1735 = vld [vmem:[#allocation4 + $0x60] sm:$0xff]
        %v1736 = vld [vmem:[#allocation4 + $0x70] sm:$0xff]
        %v1737 = vld [vmem:[#allocation10] sm:$0xff]
        %v1738 = vld [vmem:[#allocation10 + $0x8] sm:$0xff]
        %v1739 = vld [vmem:[#allocation10 + $0x10] sm:$0xff]
        %v1740 = vld [vmem:[#allocation10 + $0x18] sm:$0xff]
        %v1741 = vld [vmem:[#allocation10 + $0x20] sm:$0xff]
        %v1742 = vld [vmem:[#allocation10 + $0x28] sm:$0xff]
        %v1743 = vld [vmem:[#allocation10 + $0x30] sm:$0xff]
        %v1744 = vld [vmem:[#allocation10 + $0x38] sm:$0xff]
        %v1745 = vld [vmem:[#allocation4 + $0x1] sm:$0xff]
        %v1746 = vld [vmem:[#allocation4 + $0x11] sm:$0xff]
        %v1747 = vld [vmem:[#allocation4 + $0x21] sm:$0xff]
        %v1748 = vld [vmem:[#allocation4 + $0x31] sm:$0xff]
        %v1749 = vld [vmem:[#allocation4 + $0x41] sm:$0xff]
        %v1750 = vld [vmem:[#allocation4 + $0x51] sm:$0xff]
        %v1751 = vld [vmem:[#allocation4 + $0x61] sm:$0xff]
        %v1752 = vld [vmem:[#allocation4 + $0x71] sm:$0xff]
        %s1753 = scalar_lea.vmem [#allocation10], 64
        %v1754 = vld [vmem:[%s1753] sm:$0xff]
        %v1755 = vld [vmem:[%s1753 + $0x8] sm:$0xff]
        %v1756 = vld [vmem:[%s1753 + $0x10] sm:$0xff]
        %v1757 = vld [vmem:[%s1753 + $0x18] sm:$0xff]
        %v1758 = vld [vmem:[%s1753 + $0x20] sm:$0xff]
        %v1759 = vld [vmem:[%s1753 + $0x28] sm:$0xff]
        %v1760 = vld [vmem:[%s1753 + $0x30] sm:$0xff]
        %v1761 = vld [vmem:[%s1753 + $0x38] sm:$0xff]
        %v1763 = vsel %vm1720, %v1745, 0
        %v1766 = vsel %vm1720, %v1746, 0
        %v1769 = vsel %vm1720, %v1747, 0
        %v1772 = vsel %vm1720, %v1748, 0
        %v1775 = vsel %vm1720, %v1749, 0
        %v1778 = vsel %vm1720, %v1750, 0
        %v1781 = vsel %vm1720, %v1751, 0
        %v1784 = vsel %vm1720, %v1752, 0
        %1786 = vmatprep.subr.mxu0 0.0
        %1787 = vmatpush1.msra.mxu0 %v1754
        %1788 = vmatprep.subr.mxu0 0.0
        %1789 = vmatpush1.msra.mxu0 %v1755
        %1790 = vmatprep.subr.mxu0 0.0
        %1791 = vmatpush1.msra.mxu0 %v1756
        %1792 = vmatprep.subr.mxu0 0.0
        %1793 = vmatpush1.msra.mxu0 %v1757
        %1794 = vmatprep.subr.mxu0 0.0
        %1795 = vmatpush1.msra.mxu0 %v1758
        %1796 = vmatprep.subr.mxu0 0.0
        %1797 = vmatpush1.msra.mxu0 %v1759
        %1798 = vmatprep.subr.mxu0 0.0
        %1799 = vmatpush1.msra.mxu0 %v1760
        %1800 = vmatprep.subr.mxu0 0.0
        %1801 = vmatpush1.msra.mxu0 %v1761
        %1802 = vmatprep.subr.mxu0 0.0
        %1803 = vmatpush1.msra.mxu0 0.0
        %1804 = vmatprep.subr.mxu0 0.0
        %1805 = vmatpush1.msra.mxu0 0.0
        %1806 = vmatprep.subr.mxu0 0.0
        %1807 = vmatpush1.msra.mxu0 0.0
        %1808 = vmatprep.subr.mxu0 0.0
        %1809 = vmatpush1.msra.mxu0 0.0
        %1810 = vmatprep.subr.mxu0 0.0
        %1811 = vmatpush1.msra.mxu0 0.0
        %1812 = vmatprep.subr.mxu0 0.0
        %1813 = vmatpush1.msra.mxu0 0.0
        %1814 = vmatprep.subr.mxu0 0.0
        %1815 = vmatpush1.msra.mxu0 0.0
        %1816 = vmatprep.subr.mxu0 0.0
        %1817 = vmatpush1.msra.mxu0 0.0
        %1818 = vmatprep.subr.mxu0 0.0
        %1819 = vmatpush1.msra.mxu0 0.0
        %1820 = vmatprep.subr.mxu0 0.0
        %1821 = vmatpush1.msra.mxu0 0.0
        %1822 = vmatprep.subr.mxu0 0.0
        %1823 = vmatpush1.msra.mxu0 0.0
        %1824 = vmatprep.subr.mxu0 0.0
        %1825 = vmatpush1.msra.mxu0 0.0
        %1826 = vmatprep.subr.mxu0 0.0
        %1827 = vmatpush1.msra.mxu0 0.0
        %1828 = vmatprep.subr.mxu0 0.0
        %1829 = vmatpush1.msra.mxu0 0.0
        %1830 = vmatprep.subr.mxu0 0.0
        %1831 = vmatpush1.msra.mxu0 0.0
        %1832 = vmatprep.subr.mxu0 0.0
        %1833 = vmatpush1.msra.mxu0 0.0
        %1834 = vmatprep.subr.mxu0 0.0
        %1835 = vmatpush1.msra.mxu0 0.0
        %1836 = vmatprep.subr.mxu0 0.0
        %1837 = vmatpush1.msra.mxu0 0.0
        %1838 = vmatprep.subr.mxu0 0.0
        %1839 = vmatpush1.msra.mxu0 0.0
        %1840 = vmatprep.subr.mxu0 0.0
        %1841 = vmatpush1.msra.mxu0 0.0
        %1842 = vmatprep.subr.mxu0 0.0
        %1843 = vmatpush1.msra.mxu0 0.0
        %1844 = vmatprep.subr.mxu0 0.0
        %1845 = vmatpush1.msra.mxu0 0.0
        %1846 = vmatprep.subr.mxu0 0.0
        %1847 = vmatpush1.msra.mxu0 0.0
        %1848 = vmatprep.subr.mxu0 0.0
        %1849 = vmatpush1.msra.mxu0 0.0
        %1850 = vmatprep.mubr.f32.mxu0 0.0
        %1851 = vmatmul.mubr.f32.gmra.mrb[0].mxu0 %v1763
        %v1852 = vpop.f32.mrb[0].mxu0
        %v1853 = vadd.f32 0.0, %v1852
        %v1854 = vpop.f32.mrb[0].mxu0
        %1855 = vmatprep.mubr.f32.mxu0 0.0
        %1856 = vmatmul.mubr.f32.gmra.mrb[0].mxu0 %v1766
        %v1857 = vpop.f32.mrb[0].mxu0
        %v1858 = vadd.f32 0.0, %v1857
        %v1859 = vpop.f32.mrb[0].mxu0
        %1860 = vmatprep.mubr.f32.mxu0 0.0
        %1861 = vmatmul.mubr.f32.gmra.mrb[0].mxu0 %v1769
        %v1862 = vpop.f32.mrb[0].mxu0
        %v1863 = vadd.f32 0.0, %v1862
        %v1864 = vpop.f32.mrb[0].mxu0
        %1865 = vmatprep.mubr.f32.mxu0 0.0
        %1866 = vmatmul.mubr.f32.gmra.mrb[0].mxu0 %v1772
        %v1867 = vpop.f32.mrb[0].mxu0
        %v1868 = vadd.f32 0.0, %v1867
        %v1869 = vpop.f32.mrb[0].mxu0
        %1870 = vmatprep.mubr.f32.mxu0 0.0
        %1871 = vmatmul.mubr.f32.gmra.mrb[0].mxu0 %v1775
        %v1872 = vpop.f32.mrb[0].mxu0
        %v1873 = vadd.f32 0.0, %v1872
        %v1874 = vpop.f32.mrb[0].mxu0
        %1875 = vmatprep.mubr.f32.mxu0 0.0
        %1876 = vmatmul.mubr.f32.gmra.mrb[0].mxu0 %v1778
        %v1877 = vpop.f32.mrb[0].mxu0
        %v1878 = vadd.f32 0.0, %v1877
        %v1879 = vpop.f32.mrb[0].mxu0
        %1880 = vmatprep.mubr.f32.mxu0 0.0
        %1881 = vmatmul.mubr.f32.gmra.mrb[0].mxu0 %v1781
        %v1882 = vpop.f32.mrb[0].mxu0
        %v1883 = vadd.f32 0.0, %v1882
        %v1884 = vpop.f32.mrb[0].mxu0
        %1885 = vmatprep.mubr.f32.mxu0 0.0
        %1886 = vmatmul.mubr.f32.gmra.mrb[0].mxu0 %v1784
        %v1887 = vpop.f32.mrb[0].mxu0
        %v1888 = vadd.f32 0.0, %v1887
        %v1889 = vpop.f32.mrb[0].mxu0
        %1890 = vdwg.mxu0
        %v1892 = vsel %vm1720, %v1729, 0
        %v1895 = vsel %vm1720, %v1730, 0
        %v1898 = vsel %vm1720, %v1731, 0
        %v1901 = vsel %vm1720, %v1732, 0
        %v1904 = vsel %vm1720, %v1733, 0
        %v1907 = vsel %vm1720, %v1734, 0
        %v1910 = vsel %vm1720, %v1735, 0
        %v1913 = vsel %vm1720, %v1736, 0
        %1915 = vmatprep.subr.mxu0 0.0
        %1916 = vmatpush1.msra.mxu0 %v1737
        %1917 = vmatprep.subr.mxu0 0.0
        %1918 = vmatpush1.msra.mxu0 %v1738
        %1919 = vmatprep.subr.mxu0 0.0
        %1920 = vmatpush1.msra.mxu0 %v1739
        %1921 = vmatprep.subr.mxu0 0.0
        %1922 = vmatpush1.msra.mxu0 %v1740
        %1923 = vmatprep.subr.mxu0 0.0
        %1924 = vmatpush1.msra.mxu0 %v1741
        %1925 = vmatprep.subr.mxu0 0.0
        %1926 = vmatpush1.msra.mxu0 %v1742
        %1927 = vmatprep.subr.mxu0 0.0
        %1928 = vmatpush1.msra.mxu0 %v1743
        %1929 = vmatprep.subr.mxu0 0.0
        %1930 = vmatpush1.msra.mxu0 %v1744
        %1931 = vmatprep.subr.mxu0 0.0
        %1932 = vmatpush1.msra.mxu0 0.0
        %1933 = vmatprep.subr.mxu0 0.0
        %1934 = vmatpush1.msra.mxu0 0.0
        %1935 = vmatprep.subr.mxu0 0.0
        %1936 = vmatpush1.msra.mxu0 0.0
        %1937 = vmatprep.subr.mxu0 0.0
        %1938 = vmatpush1.msra.mxu0 0.0
        %1939 = vmatprep.subr.mxu0 0.0
        %1940 = vmatpush1.msra.mxu0 0.0
        %1941 = vmatprep.subr.mxu0 0.0
        %1942 = vmatpush1.msra.mxu0 0.0
        %1943 = vmatprep.subr.mxu0 0.0
        %1944 = vmatpush1.msra.mxu0 0.0
        %1945 = vmatprep.subr.mxu0 0.0
        %1946 = vmatpush1.msra.mxu0 0.0
        %1947 = vmatprep.subr.mxu0 0.0
        %1948 = vmatpush1.msra.mxu0 0.0
        %1949 = vmatprep.subr.mxu0 0.0
        %1950 = vmatpush1.msra.mxu0 0.0
        %1951 = vmatprep.subr.mxu0 0.0
        %1952 = vmatpush1.msra.mxu0 0.0
        %1953 = vmatprep.subr.mxu0 0.0
        %1954 = vmatpush1.msra.mxu0 0.0
        %1955 = vmatprep.subr.mxu0 0.0
        %1956 = vmatpush1.msra.mxu0 0.0
        %1957 = vmatprep.subr.mxu0 0.0
        %1958 = vmatpush1.msra.mxu0 0.0
        %1959 = vmatprep.subr.mxu0 0.0
        %1960 = vmatpush1.msra.mxu0 0.0
        %1961 = vmatprep.subr.mxu0 0.0
        %1962 = vmatpush1.msra.mxu0 0.0
        %1963 = vmatprep.subr.mxu0 0.0
        %1964 = vmatpush1.msra.mxu0 0.0
        %1965 = vmatprep.subr.mxu0 0.0
        %1966 = vmatpush1.msra.mxu0 0.0
        %1967 = vmatprep.subr.mxu0 0.0
        %1968 = vmatpush1.msra.mxu0 0.0
        %1969 = vmatprep.subr.mxu0 0.0
        %1970 = vmatpush1.msra.mxu0 0.0
        %1971 = vmatprep.subr.mxu0 0.0
        %1972 = vmatpush1.msra.mxu0 0.0
        %1973 = vmatprep.subr.mxu0 0.0
        %1974 = vmatpush1.msra.mxu0 0.0
        %1975 = vmatprep.subr.mxu0 0.0
        %1976 = vmatpush1.msra.mxu0 0.0
        %1977 = vmatprep.subr.mxu0 0.0
        %1978 = vmatpush1.msra.mxu0 0.0
        %1979 = vmatprep.mubr.f32.mxu0 0.0
        %1980 = vmatmul.mubr.f32.gmra.mrb[0].mxu0 %v1892
        %v1981 = vpop.f32.mrb[0].mxu0
        %v1982 = vadd.f32 %v1853, %v1981
        %v1983 = vpop.f32.mrb[0].mxu0
        %1984 = vmatprep.mubr.f32.mxu0 0.0
        %1985 = vmatmul.mubr.f32.gmra.mrb[0].mxu0 %v1895
        %v1986 = vpop.f32.mrb[0].mxu0
        %v1987 = vadd.f32 %v1858, %v1986
        %v1988 = vpop.f32.mrb[0].mxu0
        %1989 = vmatprep.mubr.f32.mxu0 0.0
        %1990 = vmatmul.mubr.f32.gmra.mrb[0].mxu0 %v1898
        %v1991 = vpop.f32.mrb[0].mxu0
        %v1992 = vadd.f32 %v1863, %v1991
        %v1993 = vpop.f32.mrb[0].mxu0
        %1994 = vmatprep.mubr.f32.mxu0 0.0
        %1995 = vmatmul.mubr.f32.gmra.mrb[0].mxu0 %v1901
        %v1996 = vpop.f32.mrb[0].mxu0
        %v1997 = vadd.f32 %v1868, %v1996
        %v1998 = vpop.f32.mrb[0].mxu0
        %1999 = vmatprep.mubr.f32.mxu0 0.0
        %2000 = vmatmul.mubr.f32.gmra.mrb[0].mxu0 %v1904
        %v2001 = vpop.f32.mrb[0].mxu0
        %v2002 = vadd.f32 %v1873, %v2001
        %v2003 = vpop.f32.mrb[0].mxu0
        %2004 = vmatprep.mubr.f32.mxu0 0.0
        %2005 = vmatmul.mubr.f32.gmra.mrb[0].mxu0 %v1907
        %v2006 = vpop.f32.mrb[0].mxu0
        %v2007 = vadd.f32 %v1878, %v2006
        %v2008 = vpop.f32.mrb[0].mxu0
        %2009 = vmatprep.mubr.f32.mxu0 0.0
        %2010 = vmatmul.mubr.f32.gmra.mrb[0].mxu0 %v1910
        %v2011 = vpop.f32.mrb[0].mxu0
        %v2012 = vadd.f32 %v1883, %v2011
        %v2013 = vpop.f32.mrb[0].mxu0
        %2014 = vmatprep.mubr.f32.mxu0 0.0
        %2015 = vmatmul.mubr.f32.gmra.mrb[0].mxu0 %v1913
        %v2016 = vpop.f32.mrb[0].mxu0
        %v2017 = vadd.f32 %v1888, %v2016
        %v2018 = vpop.f32.mrb[0].mxu0
        %2019 = vdwg.mxu0
        %v2020 = vld [vmem:[#allocation4 + $0x2] sm:$0xff]
        %v2021 = vld [vmem:[#allocation4 + $0x12] sm:$0xff]
        %v2022 = vld [vmem:[#allocation4 + $0x22] sm:$0xff]
        %v2023 = vld [vmem:[#allocation4 + $0x32] sm:$0xff]
        %v2024 = vld [vmem:[#allocation4 + $0x42] sm:$0xff]
        %v2025 = vld [vmem:[#allocation4 + $0x52] sm:$0xff]
        %v2026 = vld [vmem:[#allocation4 + $0x62] sm:$0xff]
        %v2027 = vld [vmem:[#allocation4 + $0x72] sm:$0xff]
        %s2028 = scalar_lea.vmem [#allocation10], 128
        %v2029 = vld [vmem:[%s2028] sm:$0xff]
        %v2030 = vld [vmem:[%s2028 + $0x8] sm:$0xff]
        %v2031 = vld [vmem:[%s2028 + $0x10] sm:$0xff]
        %v2032 = vld [vmem:[%s2028 + $0x18] sm:$0xff]
        %v2033 = vld [vmem:[%s2028 + $0x20] sm:$0xff]
        %v2034 = vld [vmem:[%s2028 + $0x28] sm:$0xff]
        %v2035 = vld [vmem:[%s2028 + $0x30] sm:$0xff]
        %v2036 = vld [vmem:[%s2028 + $0x38] sm:$0xff]
        %v2038 = vsel %vm1720, %v2020, 0
        %v2041 = vsel %vm1720, %v2021, 0
        %v2044 = vsel %vm1720, %v2022, 0
        %v2047 = vsel %vm1720, %v2023, 0
        %v2050 = vsel %vm1720, %v2024, 0
        %v2053 = vsel %vm1720, %v2025, 0
        %v2056 = vsel %vm1720, %v2026, 0
        %v2059 = vsel %vm1720, %v2027, 0
        %2061 = vmatprep.subr.mxu0 0.0
        %2062 = vmatpush1.msra.mxu0 %v2029
        %2063 = vmatprep.subr.mxu0 0.0
        %2064 = vmatpush1.msra.mxu0 %v2030
        %2065 = vmatprep.subr.mxu0 0.0
        %2066 = vmatpush1.msra.mxu0 %v2031
        %2067 = vmatprep.subr.mxu0 0.0
        %2068 = vmatpush1.msra.mxu0 %v2032
        %2069 = vmatprep.subr.mxu0 0.0
        %2070 = vmatpush1.msra.mxu0 %v2033
        %2071 = vmatprep.subr.mxu0 0.0
        %2072 = vmatpush1.msra.mxu0 %v2034
        %2073 = vmatprep.subr.mxu0 0.0
        %2074 = vmatpush1.msra.mxu0 %v2035
        %2075 = vmatprep.subr.mxu0 0.0
        %2076 = vmatpush1.msra.mxu0 %v2036
        %2077 = vmatprep.subr.mxu0 0.0
        %2078 = vmatpush1.msra.mxu0 0.0
        %2079 = vmatprep.subr.mxu0 0.0
        %2080 = vmatpush1.msra.mxu0 0.0
        %2081 = vmatprep.subr.mxu0 0.0
        %2082 = vmatpush1.msra.mxu0 0.0
        %2083 = vmatprep.subr.mxu0 0.0
        %2084 = vmatpush1.msra.mxu0 0.0
        %2085 = vmatprep.subr.mxu0 0.0
        %2086 = vmatpush1.msra.mxu0 0.0
        %2087 = vmatprep.subr.mxu0 0.0
        %2088 = vmatpush1.msra.mxu0 0.0
        %2089 = vmatprep.subr.mxu0 0.0
        %2090 = vmatpush1.msra.mxu0 0.0
        %2091 = vmatprep.subr.mxu0 0.0
        %2092 = vmatpush1.msra.mxu0 0.0
        %2093 = vmatprep.subr.mxu0 0.0
        %2094 = vmatpush1.msra.mxu0 0.0
        %2095 = vmatprep.subr.mxu0 0.0
        %2096 = vmatpush1.msra.mxu0 0.0
        %2097 = vmatprep.subr.mxu0 0.0
        %2098 = vmatpush1.msra.mxu0 0.0
        %2099 = vmatprep.subr.mxu0 0.0
        %2100 = vmatpush1.msra.mxu0 0.0
        %2101 = vmatprep.subr.mxu0 0.0
        %2102 = vmatpush1.msra.mxu0 0.0
        %2103 = vmatprep.subr.mxu0 0.0
        %2104 = vmatpush1.msra.mxu0 0.0
        %2105 = vmatprep.subr.mxu0 0.0
        %2106 = vmatpush1.msra.mxu0 0.0
        %2107 = vmatprep.subr.mxu0 0.0
        %2108 = vmatpush1.msra.mxu0 0.0
        %2109 = vmatprep.subr.mxu0 0.0
        %2110 = vmatpush1.msra.mxu0 0.0
        %2111 = vmatprep.subr.mxu0 0.0
        %2112 = vmatpush1.msra.mxu0 0.0
        %2113 = vmatprep.subr.mxu0 0.0
        %2114 = vmatpush1.msra.mxu0 0.0
        %2115 = vmatprep.subr.mxu0 0.0
        %2116 = vmatpush1.msra.mxu0 0.0
        %2117 = vmatprep.subr.mxu0 0.0
        %2118 = vmatpush1.msra.mxu0 0.0
        %2119 = vmatprep.subr.mxu0 0.0
        %2120 = vmatpush1.msra.mxu0 0.0
        %2121 = vmatprep.subr.mxu0 0.0
        %2122 = vmatpush1.msra.mxu0 0.0
        %2123 = vmatprep.subr.mxu0 0.0
        %2124 = vmatpush1.msra.mxu0 0.0
        %2125 = vmatprep.mubr.f32.mxu0 0.0
        %2126 = vmatmul.mubr.f32.gmra.mrb[0].mxu0 %v2038
        %v2127 = vpop.f32.mrb[0].mxu0
        %v2128 = vadd.f32 0.0, %v2127
        %v2129 = vpop.f32.mrb[0].mxu0
        %2130 = vmatprep.mubr.f32.mxu0 0.0
        %2131 = vmatmul.mubr.f32.gmra.mrb[0].mxu0 %v2041
        %v2132 = vpop.f32.mrb[0].mxu0
        %v2133 = vadd.f32 0.0, %v2132
        %v2134 = vpop.f32.mrb[0].mxu0
        %2135 = vmatprep.mubr.f32.mxu0 0.0
        %2136 = vmatmul.mubr.f32.gmra.mrb[0].mxu0 %v2044
        %v2137 = vpop.f32.mrb[0].mxu0
        %v2138 = vadd.f32 0.0, %v2137
        %v2139 = vpop.f32.mrb[0].mxu0
        %2140 = vmatprep.mubr.f32.mxu0 0.0
        %2141 = vmatmul.mubr.f32.gmra.mrb[0].mxu0 %v2047
        %v2142 = vpop.f32.mrb[0].mxu0
        %v2143 = vadd.f32 0.0, %v2142
        %v2144 = vpop.f32.mrb[0].mxu0
        %2145 = vmatprep.mubr.f32.mxu0 0.0
        %2146 = vmatmul.mubr.f32.gmra.mrb[0].mxu0 %v2050
        %v2147 = vpop.f32.mrb[0].mxu0
        %v2148 = vadd.f32 0.0, %v2147
        %v2149 = vpop.f32.mrb[0].mxu0
        %2150 = vmatprep.mubr.f32.mxu0 0.0
        %2151 = vmatmul.mubr.f32.gmra.mrb[0].mxu0 %v2053
        %v2152 = vpop.f32.mrb[0].mxu0
        %v2153 = vadd.f32 0.0, %v2152
        %v2154 = vpop.f32.mrb[0].mxu0
        %2155 = vmatprep.mubr.f32.mxu0 0.0
        %2156 = vmatmul.mubr.f32.gmra.mrb[0].mxu0 %v2056
        %v2157 = vpop.f32.mrb[0].mxu0
        %v2158 = vadd.f32 0.0, %v2157
        %v2159 = vpop.f32.mrb[0].mxu0
        %2160 = vmatprep.mubr.f32.mxu0 0.0
        %2161 = vmatmul.mubr.f32.gmra.mrb[0].mxu0 %v2059
        %v2162 = vpop.f32.mrb[0].mxu0
        %v2163 = vadd.f32 0.0, %v2162
        %v2164 = vpop.f32.mrb[0].mxu0
        %2165 = vdwg.mxu0
        %v2166 = vadd.f32 %v1982, %v2128
        %v2167 = vadd.f32 %v1987, %v2133
        %v2168 = vadd.f32 %v1992, %v2138
        %v2169 = vadd.f32 %v1997, %v2143
        %v2170 = vadd.f32 %v2002, %v2148
        %v2171 = vadd.f32 %v2007, %v2153
        %v2172 = vadd.f32 %v2012, %v2158
        %v2173 = vadd.f32 %v2017, %v2163
        %v2174 = vld [vmem:[#allocation4 + $0x3] sm:$0xff]
        %v2175 = vld [vmem:[#allocation4 + $0x13] sm:$0xff]
        %v2176 = vld [vmem:[#allocation4 + $0x23] sm:$0xff]
        %v2177 = vld [vmem:[#allocation4 + $0x33] sm:$0xff]
        %v2178 = vld [vmem:[#allocation4 + $0x43] sm:$0xff]
        %v2179 = vld [vmem:[#allocation4 + $0x53] sm:$0xff]
        %v2180 = vld [vmem:[#allocation4 + $0x63] sm:$0xff]
        %v2181 = vld [vmem:[#allocation4 + $0x73] sm:$0xff]
        %s2182 = scalar_lea.vmem [#allocation10], 192
        %v2183 = vld [vmem:[%s2182] sm:$0xff]
        %v2184 = vld [vmem:[%s2182 + $0x8] sm:$0xff]
        %v2185 = vld [vmem:[%s2182 + $0x10] sm:$0xff]
        %v2186 = vld [vmem:[%s2182 + $0x18] sm:$0xff]
        %v2187 = vld [vmem:[%s2182 + $0x20] sm:$0xff]
        %v2188 = vld [vmem:[%s2182 + $0x28] sm:$0xff]
        %v2189 = vld [vmem:[%s2182 + $0x30] sm:$0xff]
        %v2190 = vld [vmem:[%s2182 + $0x38] sm:$0xff]
        %v2192 = vsel %vm1720, %v2174, 0
        %v2195 = vsel %vm1720, %v2175, 0
        %v2198 = vsel %vm1720, %v2176, 0
        %v2201 = vsel %vm1720, %v2177, 0
        %v2204 = vsel %vm1720, %v2178, 0
        %v2207 = vsel %vm1720, %v2179, 0
        %v2210 = vsel %vm1720, %v2180, 0
        %v2213 = vsel %vm1720, %v2181, 0
        %2215 = vmatprep.subr.mxu0 0.0
        %2216 = vmatpush1.msra.mxu0 %v2183
        %2217 = vmatprep.subr.mxu0 0.0
        %2218 = vmatpush1.msra.mxu0 %v2184
        %2219 = vmatprep.subr.mxu0 0.0
        %2220 = vmatpush1.msra.mxu0 %v2185
        %2221 = vmatprep.subr.mxu0 0.0
        %2222 = vmatpush1.msra.mxu0 %v2186
        %2223 = vmatprep.subr.mxu0 0.0
        %2224 = vmatpush1.msra.mxu0 %v2187
        %2225 = vmatprep.subr.mxu0 0.0
        %2226 = vmatpush1.msra.mxu0 %v2188
        %2227 = vmatprep.subr.mxu0 0.0
        %2228 = vmatpush1.msra.mxu0 %v2189
        %2229 = vmatprep.subr.mxu0 0.0
        %2230 = vmatpush1.msra.mxu0 %v2190
        %2231 = vmatprep.subr.mxu0 0.0
        %2232 = vmatpush1.msra.mxu0 0.0
        %2233 = vmatprep.subr.mxu0 0.0
        %2234 = vmatpush1.msra.mxu0 0.0
        %2235 = vmatprep.subr.mxu0 0.0
        %2236 = vmatpush1.msra.mxu0 0.0
        %2237 = vmatprep.subr.mxu0 0.0
        %2238 = vmatpush1.msra.mxu0 0.0
        %2239 = vmatprep.subr.mxu0 0.0
        %2240 = vmatpush1.msra.mxu0 0.0
        %2241 = vmatprep.subr.mxu0 0.0
        %2242 = vmatpush1.msra.mxu0 0.0
        %2243 = vmatprep.subr.mxu0 0.0
        %2244 = vmatpush1.msra.mxu0 0.0
        %2245 = vmatprep.subr.mxu0 0.0
        %2246 = vmatpush1.msra.mxu0 0.0
        %2247 = vmatprep.subr.mxu0 0.0
        %2248 = vmatpush1.msra.mxu0 0.0
        %2249 = vmatprep.subr.mxu0 0.0
        %2250 = vmatpush1.msra.mxu0 0.0
        %2251 = vmatprep.subr.mxu0 0.0
        %2252 = vmatpush1.msra.mxu0 0.0
        %2253 = vmatprep.subr.mxu0 0.0
        %2254 = vmatpush1.msra.mxu0 0.0
        %2255 = vmatprep.subr.mxu0 0.0
        %2256 = vmatpush1.msra.mxu0 0.0
        %2257 = vmatprep.subr.mxu0 0.0
        %2258 = vmatpush1.msra.mxu0 0.0
        %2259 = vmatprep.subr.mxu0 0.0
        %2260 = vmatpush1.msra.mxu0 0.0
        %2261 = vmatprep.subr.mxu0 0.0
        %2262 = vmatpush1.msra.mxu0 0.0
        %2263 = vmatprep.subr.mxu0 0.0
        %2264 = vmatpush1.msra.mxu0 0.0
        %2265 = vmatprep.subr.mxu0 0.0
        %2266 = vmatpush1.msra.mxu0 0.0
        %2267 = vmatprep.subr.mxu0 0.0
        %2268 = vmatpush1.msra.mxu0 0.0
        %2269 = vmatprep.subr.mxu0 0.0
        %2270 = vmatpush1.msra.mxu0 0.0
        %2271 = vmatprep.subr.mxu0 0.0
        %2272 = vmatpush1.msra.mxu0 0.0
        %2273 = vmatprep.subr.mxu0 0.0
        %2274 = vmatpush1.msra.mxu0 0.0
        %2275 = vmatprep.subr.mxu0 0.0
        %2276 = vmatpush1.msra.mxu0 0.0
        %2277 = vmatprep.subr.mxu0 0.0
        %2278 = vmatpush1.msra.mxu0 0.0
        %2279 = vmatprep.mubr.f32.mxu0 0.0
        %2280 = vmatmul.mubr.f32.gmra.mrb[0].mxu0 %v2192
        %v2281 = vpop.f32.mrb[0].mxu0
        %v2282 = vadd.f32 0.0, %v2281
        %v2283 = vpop.f32.mrb[0].mxu0
        %2284 = vmatprep.mubr.f32.mxu0 0.0
        %2285 = vmatmul.mubr.f32.gmra.mrb[0].mxu0 %v2195
        %v2286 = vpop.f32.mrb[0].mxu0
        %v2287 = vadd.f32 0.0, %v2286
        %v2288 = vpop.f32.mrb[0].mxu0
        %2289 = vmatprep.mubr.f32.mxu0 0.0
        %2290 = vmatmul.mubr.f32.gmra.mrb[0].mxu0 %v2198
        %v2291 = vpop.f32.mrb[0].mxu0
        %v2292 = vadd.f32 0.0, %v2291
        %v2293 = vpop.f32.mrb[0].mxu0
        %2294 = vmatprep.mubr.f32.mxu0 0.0
        %2295 = vmatmul.mubr.f32.gmra.mrb[0].mxu0 %v2201
        %v2296 = vpop.f32.mrb[0].mxu0
        %v2297 = vadd.f32 0.0, %v2296
        %v2298 = vpop.f32.mrb[0].mxu0
        %2299 = vmatprep.mubr.f32.mxu0 0.0
        %2300 = vmatmul.mubr.f32.gmra.mrb[0].mxu0 %v2204
        %v2301 = vpop.f32.mrb[0].mxu0
        %v2302 = vadd.f32 0.0, %v2301
        %v2303 = vpop.f32.mrb[0].mxu0
        %2304 = vmatprep.mubr.f32.mxu0 0.0
        %2305 = vmatmul.mubr.f32.gmra.mrb[0].mxu0 %v2207
        %v2306 = vpop.f32.mrb[0].mxu0
        %v2307 = vadd.f32 0.0, %v2306
        %v2308 = vpop.f32.mrb[0].mxu0
        %2309 = vmatprep.mubr.f32.mxu0 0.0
        %2310 = vmatmul.mubr.f32.gmra.mrb[0].mxu0 %v2210
        %v2311 = vpop.f32.mrb[0].mxu0
        %v2312 = vadd.f32 0.0, %v2311
        %v2313 = vpop.f32.mrb[0].mxu0
        %2314 = vmatprep.mubr.f32.mxu0 0.0
        %2315 = vmatmul.mubr.f32.gmra.mrb[0].mxu0 %v2213
        %v2316 = vpop.f32.mrb[0].mxu0
        %v2317 = vadd.f32 0.0, %v2316
        %v2318 = vpop.f32.mrb[0].mxu0
        %2319 = vdwg.mxu0
        %v2320 = vadd.f32 %v2166, %v2282
        %v2321 = vadd.f32 %v2167, %v2287
        %v2322 = vadd.f32 %v2168, %v2292
        %v2323 = vadd.f32 %v2169, %v2297
        %v2324 = vadd.f32 %v2170, %v2302
        %v2325 = vadd.f32 %v2171, %v2307
        %v2326 = vadd.f32 %v2172, %v2312
        %v2327 = vadd.f32 %v2173, %v2317
        %v2328 = vld [vmem:[#allocation4 + $0x4] sm:$0xff]
        %v2329 = vld [vmem:[#allocation4 + $0x14] sm:$0xff]
        %v2330 = vld [vmem:[#allocation4 + $0x24] sm:$0xff]
        %v2331 = vld [vmem:[#allocation4 + $0x34] sm:$0xff]
        %v2332 = vld [vmem:[#allocation4 + $0x44] sm:$0xff]
        %v2333 = vld [vmem:[#allocation4 + $0x54] sm:$0xff]
        %v2334 = vld [vmem:[#allocation4 + $0x64] sm:$0xff]
        %v2335 = vld [vmem:[#allocation4 + $0x74] sm:$0xff]
        %s2336 = scalar_lea.vmem [#allocation10], 256
        %v2337 = vld [vmem:[%s2336] sm:$0xff]
        %v2338 = vld [vmem:[%s2336 + $0x8] sm:$0xff]
        %v2339 = vld [vmem:[%s2336 + $0x10] sm:$0xff]
        %v2340 = vld [vmem:[%s2336 + $0x18] sm:$0xff]
        %v2341 = vld [vmem:[%s2336 + $0x20] sm:$0xff]
        %v2342 = vld [vmem:[%s2336 + $0x28] sm:$0xff]
        %v2343 = vld [vmem:[%s2336 + $0x30] sm:$0xff]
        %v2344 = vld [vmem:[%s2336 + $0x38] sm:$0xff]
        %v2346 = vsel %vm1720, %v2328, 0
        %v2349 = vsel %vm1720, %v2329, 0
        %v2352 = vsel %vm1720, %v2330, 0
        %v2355 = vsel %vm1720, %v2331, 0
        %v2358 = vsel %vm1720, %v2332, 0
        %v2361 = vsel %vm1720, %v2333, 0
        %v2364 = vsel %vm1720, %v2334, 0
        %v2367 = vsel %vm1720, %v2335, 0
        %2369 = vmatprep.subr.mxu0 0.0
        %2370 = vmatpush1.msra.mxu0 %v2337
        %2371 = vmatprep.subr.mxu0 0.0
        %2372 = vmatpush1.msra.mxu0 %v2338
        %2373 = vmatprep.subr.mxu0 0.0
        %2374 = vmatpush1.msra.mxu0 %v2339
        %2375 = vmatprep.subr.mxu0 0.0
        %2376 = vmatpush1.msra.mxu0 %v2340
        %2377 = vmatprep.subr.mxu0 0.0
        %2378 = vmatpush1.msra.mxu0 %v2341
        %2379 = vmatprep.subr.mxu0 0.0
        %2380 = vmatpush1.msra.mxu0 %v2342
        %2381 = vmatprep.subr.mxu0 0.0
        %2382 = vmatpush1.msra.mxu0 %v2343
        %2383 = vmatprep.subr.mxu0 0.0
        %2384 = vmatpush1.msra.mxu0 %v2344
        %2385 = vmatprep.subr.mxu0 0.0
        %2386 = vmatpush1.msra.mxu0 0.0
        %2387 = vmatprep.subr.mxu0 0.0
        %2388 = vmatpush1.msra.mxu0 0.0
        %2389 = vmatprep.subr.mxu0 0.0
        %2390 = vmatpush1.msra.mxu0 0.0
        %2391 = vmatprep.subr.mxu0 0.0
        %2392 = vmatpush1.msra.mxu0 0.0
        %2393 = vmatprep.subr.mxu0 0.0
        %2394 = vmatpush1.msra.mxu0 0.0
        %2395 = vmatprep.subr.mxu0 0.0
        %2396 = vmatpush1.msra.mxu0 0.0
        %2397 = vmatprep.subr.mxu0 0.0
        %2398 = vmatpush1.msra.mxu0 0.0
        %2399 = vmatprep.subr.mxu0 0.0
        %2400 = vmatpush1.msra.mxu0 0.0
        %2401 = vmatprep.subr.mxu0 0.0
        %2402 = vmatpush1.msra.mxu0 0.0
        %2403 = vmatprep.subr.mxu0 0.0
        %2404 = vmatpush1.msra.mxu0 0.0
        %2405 = vmatprep.subr.mxu0 0.0
        %2406 = vmatpush1.msra.mxu0 0.0
        %2407 = vmatprep.subr.mxu0 0.0
        %2408 = vmatpush1.msra.mxu0 0.0
        %2409 = vmatprep.subr.mxu0 0.0
        %2410 = vmatpush1.msra.mxu0 0.0
        %2411 = vmatprep.subr.mxu0 0.0
        %2412 = vmatpush1.msra.mxu0 0.0
        %2413 = vmatprep.subr.mxu0 0.0
        %2414 = vmatpush1.msra.mxu0 0.0
        %2415 = vmatprep.subr.mxu0 0.0
        %2416 = vmatpush1.msra.mxu0 0.0
        %2417 = vmatprep.subr.mxu0 0.0
        %2418 = vmatpush1.msra.mxu0 0.0
        %2419 = vmatprep.subr.mxu0 0.0
        %2420 = vmatpush1.msra.mxu0 0.0
        %2421 = vmatprep.subr.mxu0 0.0
        %2422 = vmatpush1.msra.mxu0 0.0
        %2423 = vmatprep.subr.mxu0 0.0
        %2424 = vmatpush1.msra.mxu0 0.0
        %2425 = vmatprep.subr.mxu0 0.0
        %2426 = vmatpush1.msra.mxu0 0.0
        %2427 = vmatprep.subr.mxu0 0.0
        %2428 = vmatpush1.msra.mxu0 0.0
        %2429 = vmatprep.subr.mxu0 0.0
        %2430 = vmatpush1.msra.mxu0 0.0
        %2431 = vmatprep.subr.mxu0 0.0
        %2432 = vmatpush1.msra.mxu0 0.0
        %2433 = vmatprep.mubr.f32.mxu0 0.0
        %2434 = vmatmul.mubr.f32.gmra.mrb[0].mxu0 %v2346
        %v2435 = vpop.f32.mrb[0].mxu0
        %v2436 = vadd.f32 0.0, %v2435
        %v2437 = vpop.f32.mrb[0].mxu0
        %2438 = vmatprep.mubr.f32.mxu0 0.0
        %2439 = vmatmul.mubr.f32.gmra.mrb[0].mxu0 %v2349
        %v2440 = vpop.f32.mrb[0].mxu0
        %v2441 = vadd.f32 0.0, %v2440
        %v2442 = vpop.f32.mrb[0].mxu0
        %2443 = vmatprep.mubr.f32.mxu0 0.0
        %2444 = vmatmul.mubr.f32.gmra.mrb[0].mxu0 %v2352
        %v2445 = vpop.f32.mrb[0].mxu0
        %v2446 = vadd.f32 0.0, %v2445
        %v2447 = vpop.f32.mrb[0].mxu0
        %2448 = vmatprep.mubr.f32.mxu0 0.0
        %2449 = vmatmul.mubr.f32.gmra.mrb[0].mxu0 %v2355
        %v2450 = vpop.f32.mrb[0].mxu0
        %v2451 = vadd.f32 0.0, %v2450
        %v2452 = vpop.f32.mrb[0].mxu0
        %2453 = vmatprep.mubr.f32.mxu0 0.0
        %2454 = vmatmul.mubr.f32.gmra.mrb[0].mxu0 %v2358
        %v2455 = vpop.f32.mrb[0].mxu0
        %v2456 = vadd.f32 0.0, %v2455
        %v2457 = vpop.f32.mrb[0].mxu0
        %2458 = vmatprep.mubr.f32.mxu0 0.0
        %2459 = vmatmul.mubr.f32.gmra.mrb[0].mxu0 %v2361
        %v2460 = vpop.f32.mrb[0].mxu0
        %v2461 = vadd.f32 0.0, %v2460
        %v2462 = vpop.f32.mrb[0].mxu0
        %2463 = vmatprep.mubr.f32.mxu0 0.0
        %2464 = vmatmul.mubr.f32.gmra.mrb[0].mxu0 %v2364
        %v2465 = vpop.f32.mrb[0].mxu0
        %v2466 = vadd.f32 0.0, %v2465
        %v2467 = vpop.f32.mrb[0].mxu0
        %2468 = vmatprep.mubr.f32.mxu0 0.0
        %2469 = vmatmul.mubr.f32.gmra.mrb[0].mxu0 %v2367
        %v2470 = vpop.f32.mrb[0].mxu0
        %v2471 = vadd.f32 0.0, %v2470
        %v2472 = vpop.f32.mrb[0].mxu0
        %2473 = vdwg.mxu0
        %v2474 = vadd.f32 %v2320, %v2436
        %v2475 = vadd.f32 %v2321, %v2441
        %v2476 = vadd.f32 %v2322, %v2446
        %v2477 = vadd.f32 %v2323, %v2451
        %v2478 = vadd.f32 %v2324, %v2456
        %v2479 = vadd.f32 %v2325, %v2461
        %v2480 = vadd.f32 %v2326, %v2466
        %v2481 = vadd.f32 %v2327, %v2471
        %2482 = vst [vmem:[#allocation5] sm:$0xff] %v2474
        %2483 = vst [vmem:[#allocation5 + $0x8] sm:$0xff] %v2475
        %2484 = vst [vmem:[#allocation5 + $0x10] sm:$0xff] %v2476
        %2485 = vst [vmem:[#allocation5 + $0x18] sm:$0xff] %v2477
        %2486 = vst [vmem:[#allocation5 + $0x20] sm:$0xff] %v2478
        %2487 = vst [vmem:[#allocation5 + $0x28] sm:$0xff] %v2479
        %2488 = vst [vmem:[#allocation5 + $0x30] sm:$0xff] %v2480
        %2489 = vst [vmem:[#allocation5 + $0x38] sm:$0xff] %v2481
        %v2490 = vld [vmem:[#allocation5] ss:$8 sm:$0xf]
        %v2491 = vld [vmem:[#allocation5] ss:$8 sm:$0xf0]
        %v2492 = vor.u32 %v2490, %v2491
        %s2493 = scalar_lea.vmem [#allocation5], 1
        %v2494 = vld [vmem:[%s2493] ss:$8 sm:$0xf]
        %v2495 = vld [vmem:[%s2493] ss:$8 sm:$0xf0]
        %v2496 = vor.u32 %v2494, %v2495
        %v2497 = vmax.f32 %v2492, %v2496
        %2499 = vrot.lane.b32.xlu0 %v2497, 64
        %v2500 = vpop.permute.xlu0 %2499
        %v2502 = vmax.f32 %v2497, %v2500
        %v2503 = vld [vmem:[%s4] sm:$0x1]
        %v2505 = vlaneseq
        %v2506 = vshrl.u32 %v2505, 7
        %v2507 = vsub.s32 0, %v2506
        %v2508 = vrot.slane %v2503, %v2507
        %v2510 = vadd.f32 %v2502, %v2508
        %2511 = vst.msk [vmem:[#allocation6] sm:$0xff] %vm1720, %v2510
        %s2512 = scalar_lea.vmem [#allocation5], 2
        %v2513 = vld [vmem:[%s2512] ss:$8 sm:$0xf]
        %v2514 = vld [vmem:[%s2512] ss:$8 sm:$0xf0]
        %v2515 = vor.u32 %v2513, %v2514
        %s2516 = scalar_lea.vmem [#allocation5], 3
        %v2517 = vld [vmem:[%s2516] ss:$8 sm:$0xf]
        %v2518 = vld [vmem:[%s2516] ss:$8 sm:$0xf0]
        %v2519 = vor.u32 %v2517, %v2518
        %v2520 = vmax.f32 %v2515, %v2519
        %2522 = vrot.lane.b32.xlu0 %v2520, 64
        %v2523 = vpop.permute.xlu0 %2522
        %v2525 = vmax.f32 %v2520, %v2523
        %v2526 = vld [vmem:[%s4] sm:$0x1]
        %v2528 = vlaneseq
        %v2529 = vshrl.u32 %v2528, 7
        %v2530 = vsub.s32 0, %v2529
        %v2531 = vrot.slane %v2526, %v2530
        %v2533 = vadd.f32 %v2525, %v2531
        %2535 = vrot.lane.b32.xlu0 %v2533, 64
        %v2536 = vpop.permute.xlu0 %2535
        %vm2538 = vcmask 1048064
        %2539 = vst.msk [vmem:[#allocation6] sm:$0xff] %vm2538, %v2536
        %s2540 = scalar_lea.vmem [#allocation5], 4
        %v2541 = vld [vmem:[%s2540] ss:$8 sm:$0xf]
        %v2542 = vld [vmem:[%s2540] ss:$8 sm:$0xf0]
        %v2543 = vor.u32 %v2541, %v2542
        %s2544 = scalar_lea.vmem [#allocation5], 5
        %v2545 = vld [vmem:[%s2544] ss:$8 sm:$0xf]
        %v2546 = vld [vmem:[%s2544] ss:$8 sm:$0xf0]
        %v2547 = vor.u32 %v2545, %v2546
        %v2548 = vmax.f32 %v2543, %v2547
        %2550 = vrot.lane.b32.xlu0 %v2548, 64
        %v2551 = vpop.permute.xlu0 %2550
        %v2553 = vmax.f32 %v2548, %v2551
        %v2554 = vld [vmem:[%s4] sm:$0x1]
        %v2556 = vlaneseq
        %v2557 = vshrl.u32 %v2556, 7
        %v2558 = vsub.s32 0, %v2557
        %v2559 = vrot.slane %v2554, %v2558
        %v2561 = vadd.f32 %v2553, %v2559
        %2562 = vst.msk [vmem:[#allocation6 + $0x8] sm:$0xff] %vm1720, %v2561
        %s2563 = scalar_lea.vmem [#allocation5], 6
        %v2564 = vld [vmem:[%s2563] ss:$8 sm:$0xf]
        %v2565 = vld [vmem:[%s2563] ss:$8 sm:$0xf0]
        %v2566 = vor.u32 %v2564, %v2565
        %s2567 = scalar_lea.vmem [#allocation5], 7
        %v2568 = vld [vmem:[%s2567] ss:$8 sm:$0xf]
        %v2569 = vld [vmem:[%s2567] ss:$8 sm:$0xf0]
        %v2570 = vor.u32 %v2568, %v2569
        %v2571 = vmax.f32 %v2566, %v2570
        %2573 = vrot.lane.b32.xlu0 %v2571, 64
        %v2574 = vpop.permute.xlu0 %2573
        %v2576 = vmax.f32 %v2571, %v2574
        %v2577 = vld [vmem:[%s4] sm:$0x1]
        %v2579 = vlaneseq
        %v2580 = vshrl.u32 %v2579, 7
        %v2581 = vsub.s32 0, %v2580
        %v2582 = vrot.slane %v2577, %v2581
        %v2584 = vadd.f32 %v2576, %v2582
        %2586 = vrot.lane.b32.xlu0 %v2584, 64
        %v2587 = vpop.permute.xlu0 %2586
        %2589 = vst.msk [vmem:[#allocation6 + $0x8] sm:$0xff] %vm2538, %v2587
        %v2590 = vld [vmem:[#allocation6] sm:$0xff]
        %v2591 = vld [vmem:[#allocation6 + $0x8] sm:$0xff]
        %v2592 = vld [vmem:[#allocation12] sm:$0xff]
        %v2593 = vld [vmem:[#allocation12 + $0x8] sm:$0xff]
        %v2594 = vld [vmem:[#allocation12 + $0x10] sm:$0xff]
        %v2595 = vld [vmem:[#allocation12 + $0x18] sm:$0xff]
        %v2596 = vld [vmem:[#allocation12 + $0x20] sm:$0xff]
        %v2597 = vld [vmem:[#allocation12 + $0x28] sm:$0xff]
        %v2598 = vld [vmem:[#allocation12 + $0x30] sm:$0xff]
        %v2599 = vld [vmem:[#allocation12 + $0x38] sm:$0xff]
        %v2600 = vld [vmem:[#allocation12 + $0x40] sm:$0xff]
        %v2601 = vld [vmem:[#allocation12 + $0x48] sm:$0xff]
        %v2602 = vld [vmem:[#allocation12 + $0x50] sm:$0xff]
        %v2603 = vld [vmem:[#allocation12 + $0x58] sm:$0xff]
        %v2604 = vld [vmem:[#allocation12 + $0x60] sm:$0xff]
        %v2605 = vld [vmem:[#allocation12 + $0x68] sm:$0xff]
        %v2606 = vld [vmem:[#allocation12 + $0x70] sm:$0xff]
        %v2607 = vld [vmem:[#allocation12 + $0x78] sm:$0xff]
        %v2608 = vld [vmem:[#allocation12 + $0x80] sm:$0xff]
        %v2609 = vld [vmem:[#allocation12 + $0x88] sm:$0xff]
        %v2610 = vld [vmem:[#allocation12 + $0x90] sm:$0xff]
        %v2611 = vld [vmem:[#allocation12 + $0x98] sm:$0xff]
        %v2612 = vld [vmem:[#allocation12 + $0xa0] sm:$0xff]
        %v2613 = vld [vmem:[#allocation12 + $0xa8] sm:$0xff]
        %v2614 = vld [vmem:[#allocation12 + $0xb0] sm:$0xff]
        %v2615 = vld [vmem:[#allocation12 + $0xb8] sm:$0xff]
        %v2616 = vld [vmem:[#allocation12 + $0xc0] sm:$0xff]
        %v2617 = vld [vmem:[#allocation12 + $0xc8] sm:$0xff]
        %v2618 = vld [vmem:[#allocation12 + $0xd0] sm:$0xff]
        %v2619 = vld [vmem:[#allocation12 + $0xd8] sm:$0xff]
        %v2620 = vld [vmem:[#allocation12 + $0xe0] sm:$0xff]
        %v2621 = vld [vmem:[#allocation12 + $0xe8] sm:$0xff]
        %v2622 = vld [vmem:[#allocation12 + $0xf0] sm:$0xff]
        %v2623 = vld [vmem:[#allocation12 + $0xf8] sm:$0xff]
        %v2624 = vld [vmem:[%s6] sm:$0x1]
        %v2626 = vlaneseq
        %v2627 = vshrl.u32 %v2626, 7
        %v2628 = vsub.s32 0, %v2627
        %v2629 = vrot.slane %v2624, %v2628
        %2631 = vmatprep.subr.mxu0 0.0
        %2632 = vmatpush1.msra.mxu0 %v2592
        %2633 = vmatprep.subr.mxu0 0.0
        %2634 = vmatpush1.msra.mxu0 %v2593
        %2635 = vmatprep.subr.mxu0 0.0
        %2636 = vmatpush1.msra.mxu0 %v2594
        %2637 = vmatprep.subr.mxu0 0.0
        %2638 = vmatpush1.msra.mxu0 %v2595
        %2639 = vmatprep.subr.mxu0 0.0
        %2640 = vmatpush1.msra.mxu0 %v2596
        %2641 = vmatprep.subr.mxu0 0.0
        %2642 = vmatpush1.msra.mxu0 %v2597
        %2643 = vmatprep.subr.mxu0 0.0
        %2644 = vmatpush1.msra.mxu0 %v2598
        %2645 = vmatprep.subr.mxu0 0.0
        %2646 = vmatpush1.msra.mxu0 %v2599
        %2647 = vmatprep.subr.mxu0 0.0
        %2648 = vmatpush1.msra.mxu0 %v2600
        %2649 = vmatprep.subr.mxu0 0.0
        %2650 = vmatpush1.msra.mxu0 %v2601
        %2651 = vmatprep.subr.mxu0 0.0
        %2652 = vmatpush1.msra.mxu0 %v2602
        %2653 = vmatprep.subr.mxu0 0.0
        %2654 = vmatpush1.msra.mxu0 %v2603
        %2655 = vmatprep.subr.mxu0 0.0
        %2656 = vmatpush1.msra.mxu0 %v2604
        %2657 = vmatprep.subr.mxu0 0.0
        %2658 = vmatpush1.msra.mxu0 %v2605
        %2659 = vmatprep.subr.mxu0 0.0
        %2660 = vmatpush1.msra.mxu0 %v2606
        %2661 = vmatprep.subr.mxu0 0.0
        %2662 = vmatpush1.msra.mxu0 %v2607
        %2663 = vmatprep.subr.mxu0 0.0
        %2664 = vmatpush1.msra.mxu0 %v2608
        %2665 = vmatprep.subr.mxu0 0.0
        %2666 = vmatpush1.msra.mxu0 %v2609
        %2667 = vmatprep.subr.mxu0 0.0
        %2668 = vmatpush1.msra.mxu0 %v2610
        %2669 = vmatprep.subr.mxu0 0.0
        %2670 = vmatpush1.msra.mxu0 %v2611
        %2671 = vmatprep.subr.mxu0 0.0
        %2672 = vmatpush1.msra.mxu0 %v2612
        %2673 = vmatprep.subr.mxu0 0.0
        %2674 = vmatpush1.msra.mxu0 %v2613
        %2675 = vmatprep.subr.mxu0 0.0
        %2676 = vmatpush1.msra.mxu0 %v2614
        %2677 = vmatprep.subr.mxu0 0.0
        %2678 = vmatpush1.msra.mxu0 %v2615
        %2679 = vmatprep.subr.mxu0 0.0
        %2680 = vmatpush1.msra.mxu0 %v2616
        %2681 = vmatprep.subr.mxu0 0.0
        %2682 = vmatpush1.msra.mxu0 %v2617
        %2683 = vmatprep.subr.mxu0 0.0
        %2684 = vmatpush1.msra.mxu0 %v2618
        %2685 = vmatprep.subr.mxu0 0.0
        %2686 = vmatpush1.msra.mxu0 %v2619
        %2687 = vmatprep.subr.mxu0 0.0
        %2688 = vmatpush1.msra.mxu0 %v2620
        %2689 = vmatprep.subr.mxu0 0.0
        %2690 = vmatpush1.msra.mxu0 %v2621
        %2691 = vmatprep.subr.mxu0 0.0
        %2692 = vmatpush1.msra.mxu0 %v2622
        %2693 = vmatprep.subr.mxu0 0.0
        %2694 = vmatpush1.msra.mxu0 %v2623
        %2695 = vmatprep.mubr.f32.mxu0 %v2591
        %2696 = vmatmul.mubr.f32.gmra.mrb[0].mxu0 %v2590
        %v2697 = vpop.f32.mrb[0].mxu0
        %v2698 = vadd.f32 %v2629, %v2697
        %v2699 = vpop.f32.mrb[0].mxu0
        %2700 = vdwg.mxu0
        %v2701 = vld [vmem:[%s7] sm:$0xff]
        %v2702 = vld [vmem:[%s7 + $0x8] sm:$0xff]
        %v2703 = vld [vmem:[%s7 + $0x10] sm:$0xff]
        %v2704 = vld [vmem:[%s7 + $0x18] sm:$0xff]
        %v2705 = vld [vmem:[%s7 + $0x20] sm:$0xff]
        %v2706 = vld [vmem:[%s7 + $0x28] sm:$0xff]
        %v2707 = vld [vmem:[%s7 + $0x30] sm:$0xff]
        %v2708 = vld [vmem:[%s7 + $0x38] sm:$0xff]
        %v2709 = vld [vmem:[%s7 + $0x40] sm:$0xff]
        %v2710 = vld [vmem:[%s7 + $0x48] sm:$0xff]
        %v2711 = vld [vmem:[%s7 + $0x50] sm:$0xff]
        %v2712 = vld [vmem:[%s7 + $0x58] sm:$0xff]
        %v2713 = vld [vmem:[%s7 + $0x60] sm:$0xff]
        %v2714 = vld [vmem:[%s7 + $0x68] sm:$0xff]
        %v2715 = vld [vmem:[%s7 + $0x70] sm:$0xff]
        %v2716 = vld [vmem:[%s7 + $0x78] sm:$0xff]
        %v2717 = vld [vmem:[%s8] sm:$0x1]
        %v2719 = vlaneseq
        %v2720 = vshrl.u32 %v2719, 7
        %v2721 = vsub.s32 0, %v2720
        %v2722 = vrot.slane %v2717, %v2721
        %2724 = vmatprep.subr.mxu0 0.0
        %2725 = vmatpush1.msra.mxu0 %v2701
        %2726 = vmatprep.subr.mxu0 0.0
        %2727 = vmatpush1.msra.mxu0 %v2702
        %2728 = vmatprep.subr.mxu0 0.0
        %2729 = vmatpush1.msra.mxu0 %v2703
        %2730 = vmatprep.subr.mxu0 0.0
        %2731 = vmatpush1.msra.mxu0 %v2704
        %2732 = vmatprep.subr.mxu0 0.0
        %2733 = vmatpush1.msra.mxu0 %v2705
        %2734 = vmatprep.subr.mxu0 0.0
        %2735 = vmatpush1.msra.mxu0 %v2706
        %2736 = vmatprep.subr.mxu0 0.0
        %2737 = vmatpush1.msra.mxu0 %v2707
        %2738 = vmatprep.subr.mxu0 0.0
        %2739 = vmatpush1.msra.mxu0 %v2708
        %2740 = vmatprep.subr.mxu0 0.0
        %2741 = vmatpush1.msra.mxu0 %v2709
        %2742 = vmatprep.subr.mxu0 0.0
        %2743 = vmatpush1.msra.mxu0 %v2710
        %2744 = vmatprep.subr.mxu0 0.0
        %2745 = vmatpush1.msra.mxu0 %v2711
        %2746 = vmatprep.subr.mxu0 0.0
        %2747 = vmatpush1.msra.mxu0 %v2712
        %2748 = vmatprep.subr.mxu0 0.0
        %2749 = vmatpush1.msra.mxu0 %v2713
        %2750 = vmatprep.subr.mxu0 0.0
        %2751 = vmatpush1.msra.mxu0 %v2714
        %2752 = vmatprep.subr.mxu0 0.0
        %2753 = vmatpush1.msra.mxu0 %v2715
        %2754 = vmatprep.subr.mxu0 0.0
        %2755 = vmatpush1.msra.mxu0 %v2716
        %2756 = vmatprep.subr.mxu0 0.0
        %2757 = vmatpush1.msra.mxu0 0.0
        %2758 = vmatprep.subr.mxu0 0.0
        %2759 = vmatpush1.msra.mxu0 0.0
        %2760 = vmatprep.subr.mxu0 0.0
        %2761 = vmatpush1.msra.mxu0 0.0
        %2762 = vmatprep.subr.mxu0 0.0
        %2763 = vmatpush1.msra.mxu0 0.0
        %2764 = vmatprep.subr.mxu0 0.0
        %2765 = vmatpush1.msra.mxu0 0.0
        %2766 = vmatprep.subr.mxu0 0.0
        %2767 = vmatpush1.msra.mxu0 0.0
        %2768 = vmatprep.subr.mxu0 0.0
        %2769 = vmatpush1.msra.mxu0 0.0
        %2770 = vmatprep.subr.mxu0 0.0
        %2771 = vmatpush1.msra.mxu0 0.0
        %2772 = vmatprep.subr.mxu0 0.0
        %2773 = vmatpush1.msra.mxu0 0.0
        %2774 = vmatprep.subr.mxu0 0.0
        %2775 = vmatpush1.msra.mxu0 0.0
        %2776 = vmatprep.subr.mxu0 0.0
        %2777 = vmatpush1.msra.mxu0 0.0
        %2778 = vmatprep.subr.mxu0 0.0
        %2779 = vmatpush1.msra.mxu0 0.0
        %2780 = vmatprep.subr.mxu0 0.0
        %2781 = vmatpush1.msra.mxu0 0.0
        %2782 = vmatprep.subr.mxu0 0.0
        %2783 = vmatpush1.msra.mxu0 0.0
        %2784 = vmatprep.subr.mxu0 0.0
        %2785 = vmatpush1.msra.mxu0 0.0
        %2786 = vmatprep.subr.mxu0 0.0
        %2787 = vmatpush1.msra.mxu0 0.0
        %2788 = vmatprep.mubr.f32.mxu0 0.0
        %2789 = vmatmul.mubr.f32.gmra.mrb[0].mxu0 %v2698
        %v2790 = vpop.f32.mrb[0].mxu0
        %v2791 = vadd.f32 %v2722, %v2790
        %v2792 = vpop.f32.mrb[0].mxu0
        %2793 = vdwg.mxu0
        %v2794 = vld [vmem:[%s9] sm:$0xff]
        %v2795 = vld [vmem:[%s9 + $0x8] sm:$0xff]
        %v2796 = vld [vmem:[%s9 + $0x10] sm:$0xff]
        %v2797 = vld [vmem:[%s9 + $0x18] sm:$0xff]
        %v2798 = vld [vmem:[%s10] sm:$0x1]
        %v2800 = vlaneseq
        %v2801 = vshrl.u32 %v2800, 7
        %v2802 = vsub.s32 0, %v2801
        %v2803 = vrot.slane %v2798, %v2802
        %vm2805 = vcmask 261120
        %v2807 = vsel %vm2805, %v2791, 0
        %2809 = vmatprep.subr.mxu0 0.0
        %2810 = vmatpush1.msra.mxu0 %v2794
        %2811 = vmatprep.subr.mxu0 0.0
        %2812 = vmatpush1.msra.mxu0 %v2795
        %2813 = vmatprep.subr.mxu0 0.0
        %2814 = vmatpush1.msra.mxu0 %v2796
        %2815 = vmatprep.subr.mxu0 0.0
        %2816 = vmatpush1.msra.mxu0 %v2797
        %2817 = vmatprep.subr.mxu0 0.0
        %2818 = vmatpush1.msra.mxu0 0.0
        %2819 = vmatprep.subr.mxu0 0.0
        %2820 = vmatpush1.msra.mxu0 0.0
        %2821 = vmatprep.subr.mxu0 0.0
        %2822 = vmatpush1.msra.mxu0 0.0
        %2823 = vmatprep.subr.mxu0 0.0
        %2824 = vmatpush1.msra.mxu0 0.0
        %2825 = vmatprep.subr.mxu0 0.0
        %2826 = vmatpush1.msra.mxu0 0.0
        %2827 = vmatprep.subr.mxu0 0.0
        %2828 = vmatpush1.msra.mxu0 0.0
        %2829 = vmatprep.subr.mxu0 0.0
        %2830 = vmatpush1.msra.mxu0 0.0
        %2831 = vmatprep.subr.mxu0 0.0
        %2832 = vmatpush1.msra.mxu0 0.0
        %2833 = vmatprep.subr.mxu0 0.0
        %2834 = vmatpush1.msra.mxu0 0.0
        %2835 = vmatprep.subr.mxu0 0.0
        %2836 = vmatpush1.msra.mxu0 0.0
        %2837 = vmatprep.subr.mxu0 0.0
        %2838 = vmatpush1.msra.mxu0 0.0
        %2839 = vmatprep.subr.mxu0 0.0
        %2840 = vmatpush1.msra.mxu0 0.0
        %2841 = vmatprep.subr.mxu0 0.0
        %2842 = vmatpush1.msra.mxu0 0.0
        %2843 = vmatprep.subr.mxu0 0.0
        %2844 = vmatpush1.msra.mxu0 0.0
        %2845 = vmatprep.subr.mxu0 0.0
        %2846 = vmatpush1.msra.mxu0 0.0
        %2847 = vmatprep.subr.mxu0 0.0
        %2848 = vmatpush1.msra.mxu0 0.0
        %2849 = vmatprep.subr.mxu0 0.0
        %2850 = vmatpush1.msra.mxu0 0.0
        %2851 = vmatprep.subr.mxu0 0.0
        %2852 = vmatpush1.msra.mxu0 0.0
        %2853 = vmatprep.subr.mxu0 0.0
        %2854 = vmatpush1.msra.mxu0 0.0
        %2855 = vmatprep.subr.mxu0 0.0
        %2856 = vmatpush1.msra.mxu0 0.0
        %2857 = vmatprep.subr.mxu0 0.0
        %2858 = vmatpush1.msra.mxu0 0.0
        %2859 = vmatprep.subr.mxu0 0.0
        %2860 = vmatpush1.msra.mxu0 0.0
        %2861 = vmatprep.subr.mxu0 0.0
        %2862 = vmatpush1.msra.mxu0 0.0
        %2863 = vmatprep.subr.mxu0 0.0
        %2864 = vmatpush1.msra.mxu0 0.0
        %2865 = vmatprep.subr.mxu0 0.0
        %2866 = vmatpush1.msra.mxu0 0.0
        %2867 = vmatprep.subr.mxu0 0.0
        %2868 = vmatpush1.msra.mxu0 0.0
        %2869 = vmatprep.subr.mxu0 0.0
        %2870 = vmatpush1.msra.mxu0 0.0
        %2871 = vmatprep.subr.mxu0 0.0
        %2872 = vmatpush1.msra.mxu0 0.0
        %2873 = vmatprep.mubr.f32.mxu0 0.0
        %2874 = vmatmul.mubr.f32.gmra.mrb[0].mxu0 %v2807
        %v2875 = vpop.f32.mrb[0].mxu0
        %v2876 = vadd.f32 %v2803, %v2875
        %v2877 = vpop.f32.mrb[0].mxu0
        %2878 = vdwg.mxu0
        %vm2879 = vcmask 80896
        %v2880 = vsel %vm2879, %v2876, -inf
        %2881 = vmax.xlane.f32.xlu0 %v2880
        %v2882 = vpop.xlane.xlu0 %2881
        %v2883 = vsub.f32 %v2876, %v2882
        %v2884 = vmul.f32 %v2883, 1.442695
        %v2885 = vpow.pop %v2884
        %v2886 = vsel %vm2879, %v2885, 0.0
        %2887 = vadd.xlane.f32.xlu0 %v2886
        %v2888 = vpop.xlane.xlu0 %2887
        %v2889 = vrcp.pop %v2888
        %v2890 = vmul.f32 %v2885, %v2889
        %2891 = vst.msk [vmem:[%s434] sm:$0xff] %vm2879, %v2890
        %s2892 = sand.u32 %s273, 1
        %s2893 = scalar_lea.sflag [#allocation9], %s2892
        %s2894 = sand.u32 %s273, 1
        %s2895 = smul.addr %s2894, 8
        %s2896 = scalar_lea.vmem [#allocation13], %s2895
        // Predicated region
        $region77: #{mgmt_forward.1} parent=63 // pred_check
          %p2897 = pneg %p283
        $region78: #{mgmt_forward.1} parent=63 // pred_check_branch
          %2899 = sbr.rel (%p2897) target = $region80
        $region79: #{mgmt_forward.1} parent=63 // pred_region
          %s2901 = ssub.s32 128, 128
          %2902 = vsyncadd %s2893, %s2901
          %s2903 = smul.addr %s29, 128
          %s2904 = scalar_lea.hbm %s11, %s2903
          %s2906 = sshll.u32 %s2896, 4
          %s2907 = int_to_ptr.vmem [resolvable:$true] %s2906
          %2909 = dma.vmem_to_hbm [thread:$0]  %s2907, 128, %s2904, %s2893
        $region80: #{mgmt_forward.1} parent=63 // pred_fallthru
          _
      $region64: #{mgmt_forward.1} parent=5 // pred_fallthru
        _
      %p2910 = scmp.le.s32.totalorder 2, %s24
      // Predicated region
      $region81: #{mgmt_forward.1} parent=5 // pred_check
        %p2911 = pneg %p2910
      $region82: #{mgmt_forward.1} parent=5 // pred_check_branch
        %2913 = sbr.rel (%p2911) target = $region84
      $region83: #{mgmt_forward.1} parent=5 // pred_region
        %s2914 = ssub.s32 %s24, 2
        // Predicated region
        $region85: #{mgmt_forward.1} parent=83 // pred_check
          %p2915 = pneg %p289
        $region86: #{mgmt_forward.1} parent=83 // pred_check_branch
          %2917 = sbr.rel (%p2915) target = $region88
        $region87: #{mgmt_forward.1} parent=83 // pred_region
          %s2918 = sand.u32 %s274, 1
          %s2919 = scalar_lea.sflag [#allocation9], %s2918
          %s2920 = sand.u32 %s274, 1
          %s2921 = smul.addr %s2920, 8
          %s2922 = scalar_lea.vmem [#allocation13], %s2921
          %2923 = dma.done %s2919, 128
        $region88: #{mgmt_forward.1} parent=83 // pred_fallthru
          _
      $region84: #{mgmt_forward.1} parent=5 // pred_fallthru
        _
    $region6: #{mgmt_forward.1} parent=1 // loop_footer
      %s28 = sadd.s32 1, %s24
    $region7: #{mgmt_forward.1} parent=1 // loop_footer_branch
      %23 = sbr.rel target = $region3
    $region8: #{mgmt_forward.1} parent=1 // loop_exit
      _
    %2924 = vsyncpa [#allocation8], 1
    %s2925 = scalar_lea.sflag [#allocation8], 1
    %2926 = vsyncpa %s2925, 1
    %2927 = vsyncpa [#allocation11], 1
    %2928 = vsyncpa [#allocation9], 1
    %s2929 = scalar_lea.sflag [#allocation9], 1
    %2930 = vsyncpa %s2929, 1

</llo_original>
